<compile_context>
chip_gen: v7x
topology: tpu7x:2x2x1
jax: 0.10.0
libtpu: 0.0.40
codegen_flags: <defaults>
</compile_context>

<pallas_src>
import functools
import math

import jax
import jax.numpy as jnp
from jax.experimental import pallas as pl
from jax.experimental.pallas import tpu as pltpu

FRAC_BITS = 16
SCALE = float(2 ** FRAC_BITS)
INV_SCALE = 1.0 / SCALE


def _quant(x):
    # fixed-point quantization: round to nearest multiple of 2^-FRAC_BITS
    return jnp.round(x * SCALE) * INV_SCALE


def _round_up(x, m):
    return ((x + m - 1) // m) * m


# ------------------------------ Pallas kernel ------------------------------
def _conv_rows_kernel(x_ref, w_ref, b_ref, o_ref, acc_ref, *,
                      kh_n, kw_n, dh, dw, wp_pad, tm):
    # x_ref  : (1, R_in, Cin)   flattened padded input rows of one image
    #                           (block index constant along the row-tile axis,
    #                            so it is fetched from HBM only once per image)
    # w_ref  : (KH*KW, Cin, OCpad)   weight tap matrices (resident)
    # b_ref  : (1, OCpad)
    # o_ref  : (1, TM, OCpad)        lane-dense output tile
    # acc_ref: (TM, OCpad) f32 VMEM scratch accumulator
    base = pl.multiple_of(pl.program_id(1) * tm, 8)   # tm is a multiple of 8
    acc_ref[...] = jnp.zeros_like(acc_ref)
    width = tm + (kw_n - 1) * dw
    for kh in range(kh_n):
        # 8-aligned dynamic start (tm % 8 == 0 and wp_pad % 8 == 0)
        win = x_ref[0, pl.ds(base + kh * dh * wp_pad, width), :]
        for kw in range(kw_n):
            lhs = win[kw * dw: kw * dw + tm, :]                 # (TM, Cin)
            acc_ref[...] += jnp.dot(lhs, w_ref[kh * kw_n + kw],
                                    preferred_element_type=jnp.float32)
    # bias added exactly once per output tile, then fixed-point quantization
    out = acc_ref[...] + b_ref[...]
    o_ref[0] = jnp.round(out * SCALE) * INV_SCALE


# --------------------------------- wrapper ---------------------------------
def fixed_point_conv2d(x_nchw, weight, bias, *, stride=(1, 1), padding=(1, 1),
                       dilation=(1, 1), block_rows=256):
    """Conv2d (groups=1, padding_mode='zeros') + fixed-point quant, NCHW in/out."""
    N, C, H, W = x_nchw.shape
    OC, IC, KH, KW = weight.shape
    assert IC == C  # TODO(synk): grouped conv (groups > 1) not implemented
    sh, sw = stride
    ph, pw = padding
    dh, dw = dilation

    # NCHW -> NHWC (f32), explicit zero padding (padding_mode='zeros').
    # TODO(synk): 'reflect'/'replicate'/'circular' padding modes not implemented.
    x = jnp.transpose(x_nchw, (0, 2, 3, 1)).astype(jnp.float32)
    Hp, Wp = H + 2 * ph, W + 2 * pw
    # Round the padded width up to a multiple of 8 so every in-kernel window
    # load is sublane aligned; the extra zero columns only feed discarded rows.
    Wpp = _round_up(Wp, 8)
    x = jnp.pad(x, ((0, 0), (ph, ph), (pw, pw + (Wpp - Wp)), (0, 0)))

    # Dense (stride-1) output extents; stride is applied by exact subsampling.
    OH1 = Hp - dh * (KH - 1)
    OW1 = Wp - dw * (KW - 1)
    assert OH1 >= 1 and OW1 >= 1

    # Flatten spatial dims: the conv becomes a GEMM over rows m = oh*Wpp + ow,
    # with the (kh, kw) tap located at flat row  m + kh*dh*Wpp + kw*dw.
    M_img = OH1 * Wpp
    TM = max(8, _round_up(min(block_rows, M_img), 8))
    T = -(-M_img // TM)
    M_rows = T * TM
    R_in = M_rows + (KH - 1) * dh * Wpp + (KW - 1) * dw     # includes the halo

    x_flat = x.reshape(N, Hp * Wpp, C)
    x_flat = jnp.pad(x_flat, ((0, 0), (0, R_in - Hp * Wpp), (0, 0)))

    # weights (OC, IC, KH, KW) -> (KH*KW, IC, OCpad); bias -> (1, OCpad).
    # OC padded to a lane multiple so the GEMM N dim / output stores are dense.
    OCp = _round_up(OC, 128)
    w_mat = jnp.transpose(weight, (2, 3, 1, 0)).reshape(KH * KW, C, OC)
    w_mat = jnp.pad(w_mat.astype(jnp.float32), ((0, 0), (0, 0), (0, OCp - OC)))
    if bias is None:
        bias = jnp.zeros((OC,), jnp.float32)
    b_row = jnp.pad(bias.astype(jnp.float32).reshape(1, OC),
                    ((0, 0), (0, OCp - OC)))

    kernel = functools.partial(_conv_rows_kernel, kh_n=KH, kw_n=KW,
                               dh=dh, dw=dw, wp_pad=Wpp, tm=TM)

    out_flat = pl.pallas_call(
        kernel,
        out_shape=jax.ShapeDtypeStruct((N, M_rows, OCp), jnp.float32),
        grid=(N, T),
        in_specs=[
            pl.BlockSpec((1, R_in, C), lambda n, t: (n, 0, 0)),
            pl.BlockSpec((KH * KW, C, OCp), lambda n, t: (0, 0, 0)),
            pl.BlockSpec((1, OCp), lambda n, t: (0, 0)),
        ],
        out_specs=pl.BlockSpec((1, TM, OCp), lambda n, t: (n, t, 0)),
        scratch_shapes=[pltpu.VMEM((TM, OCp), jnp.float32)],
        compiler_params=pltpu.CompilerParams(
            dimension_semantics=("parallel", "parallel"),
            vmem_limit_bytes=48 * 1024 * 1024),
    )(x_flat, w_mat, b_row)

    # Un-flatten, drop padded rows/columns/channels, apply stride, back to NCHW.
    # (The final transpose is kept only to match the PyTorch NCHW contract.)
    out = out_flat[:, :M_img, :OC].reshape(N, OH1, Wpp, OC)[:, :, :OW1, :]
    if sh != 1 or sw != 1:
        # TODO(synk): strided conv computes the dense stride-1 result and
        # subsamples (exact, but over-computes); a strided kernel would avoid it.
        out = out[:, ::sh, ::sw, :]
    return jnp.transpose(out, (0, 3, 1, 2))


# ------------------------- deterministic parameters -------------------------
def init_params(in_channels, out_channels, kernel_size, key):
    KH, KW = kernel_size
    kw_key, kb_key = jax.random.split(key)
    fan_in = in_channels * KH * KW
    bound = 1.0 / math.sqrt(fan_in)
    weight = jax.random.uniform(kw_key, (out_channels, in_channels, KH, KW),
                                jnp.float32, -bound, bound)
    bias = jax.random.uniform(kb_key, (out_channels,), jnp.float32, -bound, bound)
    # reset_parameters() rounds params onto the fixed-point grid
    return _quant(weight), _quant(bias)


if __name__ == "__main__":
    key = jax.random.PRNGKey(0)
    kx, kp = jax.random.split(key)

    N, Cin, H, W = 2, 4, 16, 16
    Cout, KH, KW = 8, 3, 3
    stride, padding, dilation = (1, 1), (1, 1), (1, 1)

    x = jax.random.normal(kx, (N, Cin, H, W), jnp.float32)
    weight, bias = init_params(Cin, Cout, (KH, KW), kp)

    conv = functools.partial(fixed_point_conv2d, stride=stride,
                             padding=padding, dilation=dilation)
    y = jax.jit(conv)(x, weight, bias)
    y = jax.block_until_ready(y)

    # reference check against XLA conv (pre-quant summation order differs, so
    # use a loose tolerance spanning a few fixed-point LSBs)
    ph, pw = padding
    ref = jax.lax.conv_general_dilated(
        x, weight, window_strides=stride, padding=[(ph, ph), (pw, pw)],
        rhs_dilation=dilation,
        dimension_numbers=("NCHW", "OIHW", "NCHW"))
    ref = _quant(ref + bias.reshape(1, Cout, 1, 1))
    assert y.shape == ref.shape
    assert float(jnp.max(jnp.abs(y - ref))) < 1e-3

    print("KERNEL_OK")
</pallas_src>

<mosaic_0001>
module attributes {stable_mosaic.version = 11 : i64} {
  func.func @_conv_rows_kernel(%arg0: i32, %arg1: i32, %arg2: memref<1x562x4xf32, #tpu.memory_space<vmem>>, %arg3: memref<9x4x128xf32, #tpu.memory_space<vmem>>, %arg4: memref<1x128xf32, #tpu.memory_space<vmem>>, %arg5: memref<1x256x128xf32, #tpu.memory_space<vmem>>, %arg6: memref<256x128xf32, #tpu.memory_space<vmem>>) attributes {dimension_semantics = [#tpu.dimension_semantics<parallel>, #tpu.dimension_semantics<parallel>], iteration_bounds = array<i64: 2, 2>, scalar_prefetch = 0 : i64, scratch_operands = 1 : i64, tpu.core_type = #tpu.core_type<tc>, window_params = [{transform_indices = @transform_0, window_bounds = array<i64: 1, 562, 4>}, {pipeline_mode = #tpu.pipeline_mode<synchronous>, transform_indices = @transform_1, window_bounds = array<i64: 9, 4, 128>}, {pipeline_mode = #tpu.pipeline_mode<synchronous>, transform_indices = @transform_2, window_bounds = array<i64: 1, 128>}, {transform_indices = @transform_3, window_bounds = array<i64: 1, 256, 128>}]} {
    %c256_i32 = arith.constant 256 : i32
    %0 = arith.muli %arg1, %c256_i32 : i32
    %1 = tpu.assume_multiple %0, 8 : i32
    %cst = arith.constant 0.000000e+00 : f32
    %2 = vector.broadcast %cst : f32 to vector<256x128xf32>
    %c0 = arith.constant 0 : index
    %c0_0 = arith.constant 0 : index
    %3 = vector.load %arg6[%c0, %c0_0] : memref<256x128xf32, #tpu.memory_space<vmem>>, vector<256x128xf32>
    tpu.vector_store %arg6[%c0, %c0_0], %2 {strides = array<i32>} : memref<256x128xf32, #tpu.memory_space<vmem>>, vector<256x128xf32>,
    %c0_i32 = arith.constant 0 : i32
    %4 = arith.addi %1, %c0_i32 : i32
    %c0_1 = arith.constant 0 : index
    %5 = arith.index_cast %4 : i32 to index
    %c0_2 = arith.constant 0 : index
    %6 = vector.load %arg2[%c0_1, %5, %c0_2] : memref<1x562x4xf32, #tpu.memory_space<vmem>>, vector<1x258x4xf32>
    %7 = vector.shape_cast %6 : vector<1x258x4xf32> to vector<258x4xf32>
    %8 = vector.extract_strided_slice %7 {offsets = [0, 0], sizes = [256, 4], strides = [1, 1]} : vector<258x4xf32> to vector<256x4xf32>
    %c0_3 = arith.constant 0 : index
    %c0_4 = arith.constant 0 : index
    %9 = vector.load %arg6[%c0_3, %c0_4] : memref<256x128xf32, #tpu.memory_space<vmem>>, vector<256x128xf32>
    %c0_5 = arith.constant 0 : index
    %c0_6 = arith.constant 0 : index
    %c0_7 = arith.constant 0 : index
    %10 = vector.load %arg3[%c0_5, %c0_6, %c0_7] : memref<9x4x128xf32, #tpu.memory_space<vmem>>, vector<1x4x128xf32>
    %11 = vector.shape_cast %10 : vector<1x4x128xf32> to vector<4x128xf32>
    %cst_8 = arith.constant dense<0.000000e+00> : vector<256x128xf32>
    %12 = tpu.matmul %8, %11, %cst_8 {dimension_numbers = #tpu.dot_dimension_numbers<[1], [0], [0], [1], [0, 0, 1, 1], [], []>} : vector<256x4xf32>, vector<4x128xf32>, vector<256x128xf32> -> vector<256x128xf32>
    %13 = arith.addf %9, %12 : vector<256x128xf32>
    %c0_9 = arith.constant 0 : index
    %c0_10 = arith.constant 0 : index
    %14 = vector.load %arg6[%c0_9, %c0_10] : memref<256x128xf32, #tpu.memory_space<vmem>>, vector<256x128xf32>
    tpu.vector_store %arg6[%c0_9, %c0_10], %13 {strides = array<i32>} : memref<256x128xf32, #tpu.memory_space<vmem>>, vector<256x128xf32>,
    %15 = vector.extract_strided_slice %7 {offsets = [1, 0], sizes = [256, 4], strides = [1, 1]} : vector<258x4xf32> to vector<256x4xf32>
    %c0_11 = arith.constant 0 : index
    %c0_12 = arith.constant 0 : index
    %16 = vector.load %arg6[%c0_11, %c0_12] : memref<256x128xf32, #tpu.memory_space<vmem>>, vector<256x128xf32>
    %c1 = arith.constant 1 : index
    %c0_13 = arith.constant 0 : index
    %c0_14 = arith.constant 0 : index
    %17 = vector.load %arg3[%c1, %c0_13, %c0_14] : memref<9x4x128xf32, #tpu.memory_space<vmem>>, vector<1x4x128xf32>
    %18 = vector.shape_cast %17 : vector<1x4x128xf32> to vector<4x128xf32>
    %cst_15 = arith.constant dense<0.000000e+00> : vector<256x128xf32>
    %19 = tpu.matmul %15, %18, %cst_15 {dimension_numbers = #tpu.dot_dimension_numbers<[1], [0], [0], [1], [0, 0, 1, 1], [], []>} : vector<256x4xf32>, vector<4x128xf32>, vector<256x128xf32> -> vector<256x128xf32>
    %20 = arith.addf %16, %19 : vector<256x128xf32>
    %c0_16 = arith.constant 0 : index
    %c0_17 = arith.constant 0 : index
    %21 = vector.load %arg6[%c0_16, %c0_17] : memref<256x128xf32, #tpu.memory_space<vmem>>, vector<256x128xf32>
    tpu.vector_store %arg6[%c0_16, %c0_17], %20 {strides = array<i32>} : memref<256x128xf32, #tpu.memory_space<vmem>>, vector<256x128xf32>,
    %22 = vector.extract_strided_slice %7 {offsets = [2, 0], sizes = [256, 4], strides = [1, 1]} : vector<258x4xf32> to vector<256x4xf32>
    %c0_18 = arith.constant 0 : index
    %c0_19 = arith.constant 0 : index
    %23 = vector.load %arg6[%c0_18, %c0_19] : memref<256x128xf32, #tpu.memory_space<vmem>>, vector<256x128xf32>
    %c2 = arith.constant 2 : index
    %c0_20 = arith.constant 0 : index
    %c0_21 = arith.constant 0 : index
    %24 = vector.load %arg3[%c2, %c0_20, %c0_21] : memref<9x4x128xf32, #tpu.memory_space<vmem>>, vector<1x4x128xf32>
    %25 = vector.shape_cast %24 : vector<1x4x128xf32> to vector<4x128xf32>
    %cst_22 = arith.constant dense<0.000000e+00> : vector<256x128xf32>
    %26 = tpu.matmul %22, %25, %cst_22 {dimension_numbers = #tpu.dot_dimension_numbers<[1], [0], [0], [1], [0, 0, 1, 1], [], []>} : vector<256x4xf32>, vector<4x128xf32>, vector<256x128xf32> -> vector<256x128xf32>
    %27 = arith.addf %23, %26 : vector<256x128xf32>
    %c0_23 = arith.constant 0 : index
    %c0_24 = arith.constant 0 : index
    %28 = vector.load %arg6[%c0_23, %c0_24] : memref<256x128xf32, #tpu.memory_space<vmem>>, vector<256x128xf32>
    tpu.vector_store %arg6[%c0_23, %c0_24], %27 {strides = array<i32>} : memref<256x128xf32, #tpu.memory_space<vmem>>, vector<256x128xf32>,
    %c24_i32 = arith.constant 24 : i32
    %29 = arith.addi %1, %c24_i32 : i32
    %c0_25 = arith.constant 0 : index
    %30 = arith.index_cast %29 : i32 to index
    %c0_26 = arith.constant 0 : index
    %31 = vector.load %arg2[%c0_25, %30, %c0_26] : memref<1x562x4xf32, #tpu.memory_space<vmem>>, vector<1x258x4xf32>
    %32 = vector.shape_cast %31 : vector<1x258x4xf32> to vector<258x4xf32>
    %33 = vector.extract_strided_slice %32 {offsets = [0, 0], sizes = [256, 4], strides = [1, 1]} : vector<258x4xf32> to vector<256x4xf32>
    %c0_27 = arith.constant 0 : index
    %c0_28 = arith.constant 0 : index
    %34 = vector.load %arg6[%c0_27, %c0_28] : memref<256x128xf32, #tpu.memory_space<vmem>>, vector<256x128xf32>
    %c3 = arith.constant 3 : index
    %c0_29 = arith.constant 0 : index
    %c0_30 = arith.constant 0 : index
    %35 = vector.load %arg3[%c3, %c0_29, %c0_30] : memref<9x4x128xf32, #tpu.memory_space<vmem>>, vector<1x4x128xf32>
    %36 = vector.shape_cast %35 : vector<1x4x128xf32> to vector<4x128xf32>
    %cst_31 = arith.constant dense<0.000000e+00> : vector<256x128xf32>
    %37 = tpu.matmul %33, %36, %cst_31 {dimension_numbers = #tpu.dot_dimension_numbers<[1], [0], [0], [1], [0, 0, 1, 1], [], []>} : vector<256x4xf32>, vector<4x128xf32>, vector<256x128xf32> -> vector<256x128xf32>
    %38 = arith.addf %34, %37 : vector<256x128xf32>
    %c0_32 = arith.constant 0 : index
    %c0_33 = arith.constant 0 : index
    %39 = vector.load %arg6[%c0_32, %c0_33] : memref<256x128xf32, #tpu.memory_space<vmem>>, vector<256x128xf32>
    tpu.vector_store %arg6[%c0_32, %c0_33], %38 {strides = array<i32>} : memref<256x128xf32, #tpu.memory_space<vmem>>, vector<256x128xf32>,
    %40 = vector.extract_strided_slice %32 {offsets = [1, 0], sizes = [256, 4], strides = [1, 1]} : vector<258x4xf32> to vector<256x4xf32>
    %c0_34 = arith.constant 0 : index
    %c0_35 = arith.constant 0 : index
    %41 = vector.load %arg6[%c0_34, %c0_35] : memref<256x128xf32, #tpu.memory_space<vmem>>, vector<256x128xf32>
    %c4 = arith.constant 4 : index
    %c0_36 = arith.constant 0 : index
    %c0_37 = arith.constant 0 : index
    %42 = vector.load %arg3[%c4, %c0_36, %c0_37] : memref<9x4x128xf32, #tpu.memory_space<vmem>>, vector<1x4x128xf32>
    %43 = vector.shape_cast %42 : vector<1x4x128xf32> to vector<4x128xf32>
    %cst_38 = arith.constant dense<0.000000e+00> : vector<256x128xf32>
    %44 = tpu.matmul %40, %43, %cst_38 {dimension_numbers = #tpu.dot_dimension_numbers<[1], [0], [0], [1], [0, 0, 1, 1], [], []>} : vector<256x4xf32>, vector<4x128xf32>, vector<256x128xf32> -> vector<256x128xf32>
    %45 = arith.addf %41, %44 : vector<256x128xf32>
    %c0_39 = arith.constant 0 : index
    %c0_40 = arith.constant 0 : index
    %46 = vector.load %arg6[%c0_39, %c0_40] : memref<256x128xf32, #tpu.memory_space<vmem>>, vector<256x128xf32>
    tpu.vector_store %arg6[%c0_39, %c0_40], %45 {strides = array<i32>} : memref<256x128xf32, #tpu.memory_space<vmem>>, vector<256x128xf32>,
    %47 = vector.extract_strided_slice %32 {offsets = [2, 0], sizes = [256, 4], strides = [1, 1]} : vector<258x4xf32> to vector<256x4xf32>
    %c0_41 = arith.constant 0 : index
    %c0_42 = arith.constant 0 : index
    %48 = vector.load %arg6[%c0_41, %c0_42] : memref<256x128xf32, #tpu.memory_space<vmem>>, vector<256x128xf32>
    %c5 = arith.constant 5 : index
    %c0_43 = arith.constant 0 : index
    %c0_44 = arith.constant 0 : index
    %49 = vector.load %arg3[%c5, %c0_43, %c0_44] : memref<9x4x128xf32, #tpu.memory_space<vmem>>, vector<1x4x128xf32>
    %50 = vector.shape_cast %49 : vector<1x4x128xf32> to vector<4x128xf32>
    %cst_45 = arith.constant dense<0.000000e+00> : vector<256x128xf32>
    %51 = tpu.matmul %47, %50, %cst_45 {dimension_numbers = #tpu.dot_dimension_numbers<[1], [0], [0], [1], [0, 0, 1, 1], [], []>} : vector<256x4xf32>, vector<4x128xf32>, vector<256x128xf32> -> vector<256x128xf32>
    %52 = arith.addf %48, %51 : vector<256x128xf32>
    %c0_46 = arith.constant 0 : index
    %c0_47 = arith.constant 0 : index
    %53 = vector.load %arg6[%c0_46, %c0_47] : memref<256x128xf32, #tpu.memory_space<vmem>>, vector<256x128xf32>
    tpu.vector_store %arg6[%c0_46, %c0_47], %52 {strides = array<i32>} : memref<256x128xf32, #tpu.memory_space<vmem>>, vector<256x128xf32>,
    %c48_i32 = arith.constant 48 : i32
    %54 = arith.addi %1, %c48_i32 : i32
    %c0_48 = arith.constant 0 : index
    %55 = arith.index_cast %54 : i32 to index
    %c0_49 = arith.constant 0 : index
    %56 = vector.load %arg2[%c0_48, %55, %c0_49] : memref<1x562x4xf32, #tpu.memory_space<vmem>>, vector<1x258x4xf32>
    %57 = vector.shape_cast %56 : vector<1x258x4xf32> to vector<258x4xf32>
    %58 = vector.extract_strided_slice %57 {offsets = [0, 0], sizes = [256, 4], strides = [1, 1]} : vector<258x4xf32> to vector<256x4xf32>
    %c0_50 = arith.constant 0 : index
    %c0_51 = arith.constant 0 : index
    %59 = vector.load %arg6[%c0_50, %c0_51] : memref<256x128xf32, #tpu.memory_space<vmem>>, vector<256x128xf32>
    %c6 = arith.constant 6 : index
    %c0_52 = arith.constant 0 : index
    %c0_53 = arith.constant 0 : index
    %60 = vector.load %arg3[%c6, %c0_52, %c0_53] : memref<9x4x128xf32, #tpu.memory_space<vmem>>, vector<1x4x128xf32>
    %61 = vector.shape_cast %60 : vector<1x4x128xf32> to vector<4x128xf32>
    %cst_54 = arith.constant dense<0.000000e+00> : vector<256x128xf32>
    %62 = tpu.matmul %58, %61, %cst_54 {dimension_numbers = #tpu.dot_dimension_numbers<[1], [0], [0], [1], [0, 0, 1, 1], [], []>} : vector<256x4xf32>, vector<4x128xf32>, vector<256x128xf32> -> vector<256x128xf32>
    %63 = arith.addf %59, %62 : vector<256x128xf32>
    %c0_55 = arith.constant 0 : index
    %c0_56 = arith.constant 0 : index
    %64 = vector.load %arg6[%c0_55, %c0_56] : memref<256x128xf32, #tpu.memory_space<vmem>>, vector<256x128xf32>
    tpu.vector_store %arg6[%c0_55, %c0_56], %63 {strides = array<i32>} : memref<256x128xf32, #tpu.memory_space<vmem>>, vector<256x128xf32>,
    %65 = vector.extract_strided_slice %57 {offsets = [1, 0], sizes = [256, 4], strides = [1, 1]} : vector<258x4xf32> to vector<256x4xf32>
    %c0_57 = arith.constant 0 : index
    %c0_58 = arith.constant 0 : index
    %66 = vector.load %arg6[%c0_57, %c0_58] : memref<256x128xf32, #tpu.memory_space<vmem>>, vector<256x128xf32>
    %c7 = arith.constant 7 : index
    %c0_59 = arith.constant 0 : index
    %c0_60 = arith.constant 0 : index
    %67 = vector.load %arg3[%c7, %c0_59, %c0_60] : memref<9x4x128xf32, #tpu.memory_space<vmem>>, vector<1x4x128xf32>
    %68 = vector.shape_cast %67 : vector<1x4x128xf32> to vector<4x128xf32>
    %cst_61 = arith.constant dense<0.000000e+00> : vector<256x128xf32>
    %69 = tpu.matmul %65, %68, %cst_61 {dimension_numbers = #tpu.dot_dimension_numbers<[1], [0], [0], [1], [0, 0, 1, 1], [], []>} : vector<256x4xf32>, vector<4x128xf32>, vector<256x128xf32> -> vector<256x128xf32>
    %70 = arith.addf %66, %69 : vector<256x128xf32>
    %c0_62 = arith.constant 0 : index
    %c0_63 = arith.constant 0 : index
    %71 = vector.load %arg6[%c0_62, %c0_63] : memref<256x128xf32, #tpu.memory_space<vmem>>, vector<256x128xf32>
    tpu.vector_store %arg6[%c0_62, %c0_63], %70 {strides = array<i32>} : memref<256x128xf32, #tpu.memory_space<vmem>>, vector<256x128xf32>,
    %72 = vector.extract_strided_slice %57 {offsets = [2, 0], sizes = [256, 4], strides = [1, 1]} : vector<258x4xf32> to vector<256x4xf32>
    %c0_64 = arith.constant 0 : index
    %c0_65 = arith.constant 0 : index
    %73 = vector.load %arg6[%c0_64, %c0_65] : memref<256x128xf32, #tpu.memory_space<vmem>>, vector<256x128xf32>
    %c8 = arith.constant 8 : index
    %c0_66 = arith.constant 0 : index
    %c0_67 = arith.constant 0 : index
    %74 = vector.load %arg3[%c8, %c0_66, %c0_67] : memref<9x4x128xf32, #tpu.memory_space<vmem>>, vector<1x4x128xf32>
    %75 = vector.shape_cast %74 : vector<1x4x128xf32> to vector<4x128xf32>
    %cst_68 = arith.constant dense<0.000000e+00> : vector<256x128xf32>
    %76 = tpu.matmul %72, %75, %cst_68 {dimension_numbers = #tpu.dot_dimension_numbers<[1], [0], [0], [1], [0, 0, 1, 1], [], []>} : vector<256x4xf32>, vector<4x128xf32>, vector<256x128xf32> -> vector<256x128xf32>
    %77 = arith.addf %73, %76 : vector<256x128xf32>
    %c0_69 = arith.constant 0 : index
    %c0_70 = arith.constant 0 : index
    %78 = vector.load %arg6[%c0_69, %c0_70] : memref<256x128xf32, #tpu.memory_space<vmem>>, vector<256x128xf32>
    tpu.vector_store %arg6[%c0_69, %c0_70], %77 {strides = array<i32>} : memref<256x128xf32, #tpu.memory_space<vmem>>, vector<256x128xf32>,
    %c0_71 = arith.constant 0 : index
    %c0_72 = arith.constant 0 : index
    %79 = vector.load %arg6[%c0_71, %c0_72] : memref<256x128xf32, #tpu.memory_space<vmem>>, vector<256x128xf32>
    %c0_73 = arith.constant 0 : index
    %c0_74 = arith.constant 0 : index
    %80 = vector.load %arg4[%c0_73, %c0_74] : memref<1x128xf32, #tpu.memory_space<vmem>>, vector<1x128xf32>
    %81 = vector.broadcast %80 : vector<1x128xf32> to vector<256x128xf32>
    %82 = arith.addf %79, %81 : vector<256x128xf32>
    %cst_75 = arith.constant 6.553600e+04 : f32
    %83 = vector.broadcast %cst_75 : f32 to vector<256x128xf32>
    %84 = arith.mulf %82, %83 : vector<256x128xf32>
    %85 = math.roundeven %84 : vector<256x128xf32>
    %cst_76 = arith.constant 1.52587891E-5 : f32
    %86 = vector.broadcast %cst_76 : f32 to vector<256x128xf32>
    %87 = arith.mulf %85, %86 : vector<256x128xf32>
    %c0_77 = arith.constant 0 : index
    %c0_78 = arith.constant 0 : index
    %c0_79 = arith.constant 0 : index
    %88 = vector.load %arg5[%c0_77, %c0_78, %c0_79] : memref<1x256x128xf32, #tpu.memory_space<vmem>>, vector<1x256x128xf32>
    %89 = vector.shape_cast %88 : vector<1x256x128xf32> to vector<256x128xf32>
    %90 = vector.shape_cast %87 : vector<256x128xf32> to vector<1x256x128xf32>
    tpu.vector_store %arg5[%c0_77, %c0_78, %c0_79], %90 {strides = array<i32>} : memref<1x256x128xf32, #tpu.memory_space<vmem>>, vector<1x256x128xf32>,
    return
  }
  func.func @transform_0(%arg0: i32, %arg1: i32) -> (i32, i32, i32) {
    %c0_i32 = arith.constant 0 : i32
    %c0_i32_0 = arith.constant 0 : i32
    %c0_i32_1 = arith.constant 0 : i32
    return %arg0, %c0_i32, %c0_i32_0 : i32, i32, i32
  }
  func.func @transform_1(%arg0: i32, %arg1: i32) -> (i32, i32, i32) {
    %c0_i32 = arith.constant 0 : i32
    %c0_i32_0 = arith.constant 0 : i32
    %c0_i32_1 = arith.constant 0 : i32
    %c0_i32_2 = arith.constant 0 : i32
    return %c0_i32, %c0_i32_0, %c0_i32_1 : i32, i32, i32
  }
  func.func @transform_2(%arg0: i32, %arg1: i32) -> (i32, i32) {
    %c0_i32 = arith.constant 0 : i32
    %c0_i32_0 = arith.constant 0 : i32
    %c0_i32_1 = arith.constant 0 : i32
    return %c0_i32, %c0_i32_0 : i32, i32
  }
  func.func @transform_3(%arg0: i32, %arg1: i32) -> (i32, i32, i32) {
    %c0_i32 = arith.constant 0 : i32
    %c0_i32_0 = arith.constant 0 : i32
    return %arg0, %arg1, %c0_i32 : i32, i32, i32
  }
}

</mosaic_0001>

<llo_original>
// kernel: fixed_point_conv2d.1
$region0: #{fixed_point_conv2d.1}
  #allocation0 [shape = 'u32[]', space=smem, size = 0x4, offset = 0x4, fixed_abs, tag = 'smem constant byte address 0x4 - core index']
  #allocation1 [shape = 'u32[144,128]{1,0:T(1,128)}', space=vmem, size = 0x12000, scoped, tag = 'internal scratch']
  #allocation2 [shape = 'f32[256,128]{1,0:T(8,128)}', space=vmem, size = 0x20000, scoped, tag = 'scratch operand']
  %s0 = inlined_call_operand.vmem [shape: f32[2,562,4], index: 0, kind: input, shape index: {}]
  %s1 = inlined_call_operand.vmem [shape: f32[9,4,128], index: 1, kind: input, shape index: {}]
  %s2 = inlined_call_operand.vmem [shape: f32[1,128], index: 2, kind: input, shape index: {}]
  %s3 = inlined_call_operand.vmem [shape: f32[2,512,128], index: 3, kind: output, shape index: {}]
  %s4 = sld [smem:[#allocation0]]
  $region45: #{fixed_point_conv2d.1} parent=0
    _
  %s6 = ssub.s32 1, %s4
  %s7 = scalar_select 0, %s6, %s4
  loop: start=0, step=1, limit=6
  $region2: #{fixed_point_conv2d.1} parent=0 // loop_pre_header
    _
  $region3: #{fixed_point_conv2d.1} parent=0 // loop_header
    %s9 = sphi 0, %s13
    %p10 = scmp.ge.s32.totalorder %s9, 6
    %s16 = sphi 0, %s28
    %s17 = sphi 0, %s24
    %s18 = sphi 0, %s16
    %s19 = sphi 0, %s17
    %s20 = sphi 0, %s18
    %s21 = sphi 0, %s19
    %s31 = sphi 0, %s33
    %s34 = sphi 0, %s31
    %s35 = sphi 0, %s34
    %s51 = sphi 0, %s35
    %s55 = sphi 0, %s55
    %s57 = sphi 0, %s55
    %s58 = sphi 0, %s57
    %s72 = sphi 0, %s58
    %s76 = sphi 0, %s76
    %s78 = sphi 0, %s76
    %s79 = sphi 0, %s78
    %s93 = sphi 0, %s79
    %s101 = sphi 0, %s103
    %s104 = sphi 0, %s101
    %s105 = sphi 0, %s104
    %s121 = sphi 0, %s105
  $region4: #{fixed_point_conv2d.1} parent=0 // loop_header_branch
    %12 = sbr.rel (%p10) target = $region8
  $region5: #{fixed_point_conv2d.1} parent=0 // loop_body
    %s14 = ssub.s32 %s9, 1
    %s15 = ssub.s32 %s9, 2
    %s22 = sadd.s32 1, %s17
    %p23 = scmp.ge.s32.totalorder %s22, 2
    %s24 = scalar_select %p23, 0, %s22
    %s25 = sadd.s32 1, %s16
    %s26 = scalar_select %p23, %s25, %s16
    %p27 = scmp.ge.s32.totalorder %s26, 2
    %s28 = scalar_select %p27, 0, %s26
    %s29 = ssub.s32 %s16, %s28
    %p30 = scmp.eq.s32.totalorder %s29, 0
    %s32 = sadd.s32 %s31, 1
    %s33 = scalar_select %p30, %s31, %s32
    %p36 = pneg %p30
    %p37 = scmp.eq.s32.totalorder %s9, 3
    %p38 = por %p36, %p37
    %p39 = scmp.ne.s32.totalorder %s31, %s34
    %p40 = scmp.eq.s32.totalorder %s9, 0
    %p41 = por %p39, %p40
    %p42 = scmp.ne.s32.totalorder %s31, %s34
    %p43 = scmp.eq.s32.totalorder %s14, 3
    %p44 = por %p42, %p43
    %p45 = scmp.ne.s32.totalorder %s34, %s35
    %p46 = scmp.eq.s32.totalorder %s14, 0
    %p47 = por %p45, %p46
    %p48 = scmp.ne.s32.totalorder %s34, %s35
    %p49 = scmp.eq.s32.totalorder %s15, 3
    %p50 = por %p48, %p49
    %p52 = scmp.ne.s32.totalorder %s35, %s51
    %p53 = scmp.eq.s32.totalorder %s15, 0
    %p54 = por %p52, %p53
    %s56 = sadd.s32 %s55, 1
    %p59 = scmp.eq.s32.totalorder %s9, 3
    %p60 = scmp.ne.s32.totalorder %s55, %s57
    %p61 = scmp.eq.s32.totalorder %s9, 0
    %p62 = por %p60, %p61
    %p63 = scmp.ne.s32.totalorder %s55, %s57
    %p64 = scmp.eq.s32.totalorder %s14, 3
    %p65 = por %p63, %p64
    %p66 = scmp.ne.s32.totalorder %s57, %s58
    %p67 = scmp.eq.s32.totalorder %s14, 0
    %p68 = por %p66, %p67
    %p69 = scmp.ne.s32.totalorder %s57, %s58
    %p70 = scmp.eq.s32.totalorder %s15, 3
    %p71 = por %p69, %p70
    %p73 = scmp.ne.s32.totalorder %s58, %s72
    %p74 = scmp.eq.s32.totalorder %s15, 0
    %p75 = por %p73, %p74
    %s77 = sadd.s32 %s76, 1
    %p80 = scmp.eq.s32.totalorder %s9, 3
    %p81 = scmp.ne.s32.totalorder %s76, %s78
    %p82 = scmp.eq.s32.totalorder %s9, 0
    %p83 = por %p81, %p82
    %p84 = scmp.ne.s32.totalorder %s76, %s78
    %p85 = scmp.eq.s32.totalorder %s14, 3
    %p86 = por %p84, %p85
    %p87 = scmp.ne.s32.totalorder %s78, %s79
    %p88 = scmp.eq.s32.totalorder %s14, 0
    %p89 = por %p87, %p88
    %p90 = scmp.ne.s32.totalorder %s78, %s79
    %p91 = scmp.eq.s32.totalorder %s15, 3
    %p92 = por %p90, %p91
    %p94 = scmp.ne.s32.totalorder %s79, %s93
    %p95 = scmp.eq.s32.totalorder %s15, 0
    %p96 = por %p94, %p95
    %s97 = ssub.s32 %s16, %s28
    %s98 = ssub.s32 %s17, %s24
    %s99 = sor.u32 %s97, %s98
    %p100 = scmp.eq.s32.totalorder %s99, 0
    %s102 = sadd.s32 %s101, 1
    %s103 = scalar_select %p100, %s101, %s102
    %p106 = pneg %p100
    %p107 = scmp.eq.s32.totalorder %s9, 3
    %p108 = por %p106, %p107
    %p109 = scmp.ne.s32.totalorder %s101, %s104
    %p110 = scmp.eq.s32.totalorder %s9, 0
    %p111 = por %p109, %p110
    %p112 = scmp.ne.s32.totalorder %s101, %s104
    %p113 = scmp.eq.s32.totalorder %s14, 3
    %p114 = por %p112, %p113
    %p115 = scmp.ne.s32.totalorder %s104, %s105
    %p116 = scmp.eq.s32.totalorder %s14, 0
    %p117 = por %p115, %p116
    %p118 = scmp.ne.s32.totalorder %s104, %s105
    %p119 = scmp.eq.s32.totalorder %s15, 3
    %p120 = por %p118, %p119
    %p122 = scmp.ne.s32.totalorder %s105, %s121
    %p123 = scmp.eq.s32.totalorder %s15, 0
    %p124 = por %p122, %p123
    %p125 = scmp.le.s32.totalorder 1, %s9
    %p126 = scmp.lt.s32.totalorder %s9, 5
    %p127 = pnand %p125, %p126
    %p128 = pneg %p127
    // Predicated region
    $region9: #{fixed_point_conv2d.1} parent=5 // pred_check
      _
    $region10: #{fixed_point_conv2d.1} parent=5 // pred_check_branch
      %130 = sbr.rel (%p127) target = $region12
    $region11: #{fixed_point_conv2d.1} parent=5 // pred_region
      %s131 = ssub.s32 %s9, 1
      // Predicated region
      $region13: #{fixed_point_conv2d.1} parent=11 // pred_check
        %p132 = pneg %p68
      $region14: #{fixed_point_conv2d.1} parent=11 // pred_check_branch
        %134 = sbr.rel (%p132) target = $region16
      $region15: #{fixed_point_conv2d.1} parent=11 // pred_region
        _
      $region16: #{fixed_point_conv2d.1} parent=11 // pred_fallthru
        _
      // Predicated region
      $region17: #{fixed_point_conv2d.1} parent=11 // pred_check
        %p135 = pneg %p89
      $region18: #{fixed_point_conv2d.1} parent=11 // pred_check_branch
        %137 = sbr.rel (%p135) target = $region20
      $region19: #{fixed_point_conv2d.1} parent=11 // pred_region
        _
      $region20: #{fixed_point_conv2d.1} parent=11 // pred_fallthru
        _
    $region12: #{fixed_point_conv2d.1} parent=5 // pred_fallthru
      _
    %p138 = scmp.lt.s32.totalorder %s9, 4
    // Predicated region
    $region21: #{fixed_point_conv2d.1} parent=5 // pred_check
      %p139 = pneg %p138
    $region22: #{fixed_point_conv2d.1} parent=5 // pred_check_branch
      %141 = sbr.rel (%p139) target = $region24
    $region23: #{fixed_point_conv2d.1} parent=5 // pred_region
      // Predicated region
      $region25: #{fixed_point_conv2d.1} parent=23 // pred_check
        %p142 = pneg %p41
      $region26: #{fixed_point_conv2d.1} parent=23 // pred_check_branch
        %144 = sbr.rel (%p142) target = $region28
      $region27: #{fixed_point_conv2d.1} parent=23 // pred_region
        %p145 = scmp.lt.s32.totalorder %s16, 1
        %s146 = scalar_select %p145, %s16, 1
        %s147 = smul.addr %s146, 71
        %s148 = smul.addr %s147, 8
        %s149 = scalar_lea.vmem %s0, %s148
      $region28: #{fixed_point_conv2d.1} parent=23 // pred_fallthru
        _
    $region24: #{fixed_point_conv2d.1} parent=5 // pred_fallthru
      _
    %p150 = scmp.le.s32.totalorder 1, %s9
    %p151 = scmp.lt.s32.totalorder %s9, 5
    %p152 = pnand %p150, %p151
    %p153 = pneg %p152
    // Predicated region
    $region29: #{fixed_point_conv2d.1} parent=5 // pred_check
      _
    $region30: #{fixed_point_conv2d.1} parent=5 // pred_check_branch
      %155 = sbr.rel (%p152) target = $region32
    $region31: #{fixed_point_conv2d.1} parent=5 // pred_region
      %s156 = ssub.s32 %s9, 1
      %p157 = scmp.lt.s32.totalorder %s18, 1
      %s158 = scalar_select %p157, %s18, 1
      %s159 = smul.addr %s158, 71
      %s160 = smul.addr %s159, 8
      %s161 = scalar_lea.vmem %s0, %s160
      %p162 = pneg %p47
      %p163 = pneg %p44
      %p164 = pneg %p68
      %p165 = pneg %p65
      %p166 = pneg %p89
      %p167 = pneg %p86
      %p168 = pneg %p117
      %p169 = pneg %p114
      %s170 = smul.u32 32, %s19
      %p171 = scmp.lt.s32.totalorder %s18, 1
      %s172 = scalar_select %p171, %s18, 1
      %p173 = scmp.lt.s32.totalorder %s170, 63
      %s174 = scalar_select %p173, %s170, 63
      %s175 = smul.addr %s172, 64
      %s176 = sadd.s32 %s174, %s175
      %s177 = smul.addr %s176, 8
      %s178 = scalar_lea.vmem %s3, %s177
      %p179 = scmp.lt.s32.totalorder %s18, 1
      %s180 = scalar_select %p179, %s18, 1
      %s181 = smul.addr %s180, 71
      %s182 = smul.addr %s181, 8
      %s183 = scalar_lea.vmem %s0, %s182
      %s184 = smul.u32 32, %s19
      %p185 = scmp.lt.s32.totalorder %s18, 1
      %s186 = scalar_select %p185, %s18, 1
      %p187 = scmp.lt.s32.totalorder %s184, 63
      %s188 = scalar_select %p187, %s184, 63
      %s189 = smul.addr %s186, 64
      %s190 = sadd.s32 %s188, %s189
      %s191 = smul.addr %s190, 8
      %s192 = scalar_lea.vmem %s3, %s191
      %s193 = smul.u32 32, %s19
      %s194 = smul.u32 %s19, 256
      %195 = vst [vmem:[#allocation2] sm:$0xff] 0.0
      %196 = vst [vmem:[#allocation2 + $0x8] sm:$0xff] 0.0
      %197 = vst [vmem:[#allocation2 + $0x10] sm:$0xff] 0.0
      %198 = vst [vmem:[#allocation2 + $0x18] sm:$0xff] 0.0
      %199 = vst [vmem:[#allocation2 + $0x20] sm:$0xff] 0.0
      %200 = vst [vmem:[#allocation2 + $0x28] sm:$0xff] 0.0
      %201 = vst [vmem:[#allocation2 + $0x30] sm:$0xff] 0.0
      %202 = vst [vmem:[#allocation2 + $0x38] sm:$0xff] 0.0
      %203 = vst [vmem:[#allocation2 + $0x40] sm:$0xff] 0.0
      %204 = vst [vmem:[#allocation2 + $0x48] sm:$0xff] 0.0
      %205 = vst [vmem:[#allocation2 + $0x50] sm:$0xff] 0.0
      %206 = vst [vmem:[#allocation2 + $0x58] sm:$0xff] 0.0
      %207 = vst [vmem:[#allocation2 + $0x60] sm:$0xff] 0.0
      %208 = vst [vmem:[#allocation2 + $0x68] sm:$0xff] 0.0
      %209 = vst [vmem:[#allocation2 + $0x70] sm:$0xff] 0.0
      %210 = vst [vmem:[#allocation2 + $0x78] sm:$0xff] 0.0
      %211 = vst [vmem:[#allocation2 + $0x80] sm:$0xff] 0.0
      %212 = vst [vmem:[#allocation2 + $0x88] sm:$0xff] 0.0
      %213 = vst [vmem:[#allocation2 + $0x90] sm:$0xff] 0.0
      %214 = vst [vmem:[#allocation2 + $0x98] sm:$0xff] 0.0
      %215 = vst [vmem:[#allocation2 + $0xa0] sm:$0xff] 0.0
      %216 = vst [vmem:[#allocation2 + $0xa8] sm:$0xff] 0.0
      %217 = vst [vmem:[#allocation2 + $0xb0] sm:$0xff] 0.0
      %218 = vst [vmem:[#allocation2 + $0xb8] sm:$0xff] 0.0
      %219 = vst [vmem:[#allocation2 + $0xc0] sm:$0xff] 0.0
      %220 = vst [vmem:[#allocation2 + $0xc8] sm:$0xff] 0.0
      %221 = vst [vmem:[#allocation2 + $0xd0] sm:$0xff] 0.0
      %222 = vst [vmem:[#allocation2 + $0xd8] sm:$0xff] 0.0
      %223 = vst [vmem:[#allocation2 + $0xe0] sm:$0xff] 0.0
      %224 = vst [vmem:[#allocation2 + $0xe8] sm:$0xff] 0.0
      %225 = vst [vmem:[#allocation2 + $0xf0] sm:$0xff] 0.0
      %226 = vst [vmem:[#allocation2 + $0xf8] sm:$0xff] 0.0
      %s227 = scalar_lea.vmem %s183, %s194
      %v228 = vld [vmem:[%s227] sm:$0xff]
      %v229 = vld [vmem:[%s227 + $0x8] sm:$0xff]
      %v230 = vld [vmem:[%s227 + $0x10] sm:$0xff]
      %v231 = vld [vmem:[%s227 + $0x18] sm:$0xff]
      %v232 = vld [vmem:[%s227 + $0x20] sm:$0xff]
      %v233 = vld [vmem:[%s227 + $0x28] sm:$0xff]
      %v234 = vld [vmem:[%s227 + $0x30] sm:$0xff]
      %v235 = vld [vmem:[%s227 + $0x38] sm:$0xff]
      %v236 = vld [vmem:[%s227 + $0x40] sm:$0xff]
      %v237 = vld [vmem:[%s227 + $0x48] sm:$0xff]
      %v238 = vld [vmem:[%s227 + $0x50] sm:$0xff]
      %v239 = vld [vmem:[%s227 + $0x58] sm:$0xff]
      %v240 = vld [vmem:[%s227 + $0x60] sm:$0xff]
      %v241 = vld [vmem:[%s227 + $0x68] sm:$0xff]
      %v242 = vld [vmem:[%s227 + $0x70] sm:$0xff]
      %v243 = vld [vmem:[%s227 + $0x78] sm:$0xff]
      %v244 = vld [vmem:[%s227 + $0x80] sm:$0xff]
      %v245 = vld [vmem:[%s227 + $0x88] sm:$0xff]
      %v246 = vld [vmem:[%s227 + $0x90] sm:$0xff]
      %v247 = vld [vmem:[%s227 + $0x98] sm:$0xff]
      %v248 = vld [vmem:[%s227 + $0xa0] sm:$0xff]
      %v249 = vld [vmem:[%s227 + $0xa8] sm:$0xff]
      %v250 = vld [vmem:[%s227 + $0xb0] sm:$0xff]
      %v251 = vld [vmem:[%s227 + $0xb8] sm:$0xff]
      %v252 = vld [vmem:[%s227 + $0xc0] sm:$0xff]
      %v253 = vld [vmem:[%s227 + $0xc8] sm:$0xff]
      %v254 = vld [vmem:[%s227 + $0xd0] sm:$0xff]
      %v255 = vld [vmem:[%s227 + $0xd8] sm:$0xff]
      %v256 = vld [vmem:[%s227 + $0xe0] sm:$0xff]
      %v257 = vld [vmem:[%s227 + $0xe8] sm:$0xff]
      %v258 = vld [vmem:[%s227 + $0xf0] sm:$0xff]
      %v259 = vld [vmem:[%s227 + $0xf8] sm:$0xff]
      %v260 = vld [vmem:[%s227 + $0x100] sm:$0x3]
      %v261 = vld [vmem:[#allocation2] sm:$0xff]
      %v262 = vld [vmem:[#allocation2 + $0x8] sm:$0xff]
      %v263 = vld [vmem:[#allocation2 + $0x10] sm:$0xff]
      %v264 = vld [vmem:[#allocation2 + $0x18] sm:$0xff]
      %v265 = vld [vmem:[#allocation2 + $0x20] sm:$0xff]
      %v266 = vld [vmem:[#allocation2 + $0x28] sm:$0xff]
      %v267 = vld [vmem:[#allocation2 + $0x30] sm:$0xff]
      %v268 = vld [vmem:[#allocation2 + $0x38] sm:$0xff]
      %v269 = vld [vmem:[#allocation2 + $0x40] sm:$0xff]
      %v270 = vld [vmem:[#allocation2 + $0x48] sm:$0xff]
      %v271 = vld [vmem:[#allocation2 + $0x50] sm:$0xff]
      %v272 = vld [vmem:[#allocation2 + $0x58] sm:$0xff]
      %v273 = vld [vmem:[#allocation2 + $0x60] sm:$0xff]
      %v274 = vld [vmem:[#allocation2 + $0x68] sm:$0xff]
      %v275 = vld [vmem:[#allocation2 + $0x70] sm:$0xff]
      %v276 = vld [vmem:[#allocation2 + $0x78] sm:$0xff]
      %v277 = vld [vmem:[#allocation2 + $0x80] sm:$0xff]
      %v278 = vld [vmem:[#allocation2 + $0x88] sm:$0xff]
      %v279 = vld [vmem:[#allocation2 + $0x90] sm:$0xff]
      %v280 = vld [vmem:[#allocation2 + $0x98] sm:$0xff]
      %v281 = vld [vmem:[#allocation2 + $0xa0] sm:$0xff]
      %v282 = vld [vmem:[#allocation2 + $0xa8] sm:$0xff]
      %v283 = vld [vmem:[#allocation2 + $0xb0] sm:$0xff]
      %v284 = vld [vmem:[#allocation2 + $0xb8] sm:$0xff]
      %v285 = vld [vmem:[#allocation2 + $0xc0] sm:$0xff]
      %v286 = vld [vmem:[#allocation2 + $0xc8] sm:$0xff]
      %v287 = vld [vmem:[#allocation2 + $0xd0] sm:$0xff]
      %v288 = vld [vmem:[#allocation2 + $0xd8] sm:$0xff]
      %v289 = vld [vmem:[#allocation2 + $0xe0] sm:$0xff]
      %v290 = vld [vmem:[#allocation2 + $0xe8] sm:$0xff]
      %v291 = vld [vmem:[#allocation2 + $0xf0] sm:$0xff]
      %v292 = vld [vmem:[#allocation2 + $0xf8] sm:$0xff]
      %v293 = vld [vmem:[%s1] sm:$0xf]
      %vm294 = vcmask 31744
      %v296 = vsel %vm294, %v228, 0
      %v299 = vsel %vm294, %v229, 0
      %v302 = vsel %vm294, %v230, 0
      %v305 = vsel %vm294, %v231, 0
      %v308 = vsel %vm294, %v232, 0
      %v311 = vsel %vm294, %v233, 0
      %v314 = vsel %vm294, %v234, 0
      %v317 = vsel %vm294, %v235, 0
      %v320 = vsel %vm294, %v236, 0
      %v323 = vsel %vm294, %v237, 0
      %v326 = vsel %vm294, %v238, 0
      %v329 = vsel %vm294, %v239, 0
      %v332 = vsel %vm294, %v240, 0
      %v335 = vsel %vm294, %v241, 0
      %v338 = vsel %vm294, %v242, 0
      %v341 = vsel %vm294, %v243, 0
      %v344 = vsel %vm294, %v244, 0
      %v347 = vsel %vm294, %v245, 0
      %v350 = vsel %vm294, %v246, 0
      %v353 = vsel %vm294, %v247, 0
      %v356 = vsel %vm294, %v248, 0
      %v359 = vsel %vm294, %v249, 0
      %v362 = vsel %vm294, %v250, 0
      %v365 = vsel %vm294, %v251, 0
      %v368 = vsel %vm294, %v252, 0
      %v371 = vsel %vm294, %v253, 0
      %v374 = vsel %vm294, %v254, 0
      %v377 = vsel %vm294, %v255, 0
      %v380 = vsel %vm294, %v256, 0
      %v383 = vsel %vm294, %v257, 0
      %v386 = vsel %vm294, %v258, 0
      %v389 = vsel %vm294, %v259, 0
      %vm391 = vcmask 1043456
      %v393 = vsel %vm391, %v293, 0
      %395 = vmatprep.subr.mxu0 0.0
      %396 = vmatpush1.msra.mxu0 %v393
      %397 = vmatprep.subr.mxu0 0.0
      %398 = vmatpush1.msra.mxu0 0.0
      %399 = vmatprep.subr.mxu0 0.0
      %400 = vmatpush1.msra.mxu0 0.0
      %401 = vmatprep.subr.mxu0 0.0
      %402 = vmatpush1.msra.mxu0 0.0
      %403 = vmatprep.subr.mxu0 0.0
      %404 = vmatpush1.msra.mxu0 0.0
      %405 = vmatprep.subr.mxu0 0.0
      %406 = vmatpush1.msra.mxu0 0.0
      %407 = vmatprep.subr.mxu0 0.0
      %408 = vmatpush1.msra.mxu0 0.0
      %409 = vmatprep.subr.mxu0 0.0
      %410 = vmatpush1.msra.mxu0 0.0
      %411 = vmatprep.subr.mxu0 0.0
      %412 = vmatpush1.msra.mxu0 0.0
      %413 = vmatprep.subr.mxu0 0.0
      %414 = vmatpush1.msra.mxu0 0.0
      %415 = vmatprep.subr.mxu0 0.0
      %416 = vmatpush1.msra.mxu0 0.0
      %417 = vmatprep.subr.mxu0 0.0
      %418 = vmatpush1.msra.mxu0 0.0
      %419 = vmatprep.subr.mxu0 0.0
      %420 = vmatpush1.msra.mxu0 0.0
      %421 = vmatprep.subr.mxu0 0.0
      %422 = vmatpush1.msra.mxu0 0.0
      %423 = vmatprep.subr.mxu0 0.0
      %424 = vmatpush1.msra.mxu0 0.0
      %425 = vmatprep.subr.mxu0 0.0
      %426 = vmatpush1.msra.mxu0 0.0
      %427 = vmatprep.subr.mxu0 0.0
      %428 = vmatpush1.msra.mxu0 0.0
      %429 = vmatprep.subr.mxu0 0.0
      %430 = vmatpush1.msra.mxu0 0.0
      %431 = vmatprep.subr.mxu0 0.0
      %432 = vmatpush1.msra.mxu0 0.0
      %433 = vmatprep.subr.mxu0 0.0
      %434 = vmatpush1.msra.mxu0 0.0
      %435 = vmatprep.subr.mxu0 0.0
      %436 = vmatpush1.msra.mxu0 0.0
      %437 = vmatprep.subr.mxu0 0.0
      %438 = vmatpush1.msra.mxu0 0.0
      %439 = vmatprep.subr.mxu0 0.0
      %440 = vmatpush1.msra.mxu0 0.0
      %441 = vmatprep.subr.mxu0 0.0
      %442 = vmatpush1.msra.mxu0 0.0
      %443 = vmatprep.subr.mxu0 0.0
      %444 = vmatpush1.msra.mxu0 0.0
      %445 = vmatprep.subr.mxu0 0.0
      %446 = vmatpush1.msra.mxu0 0.0
      %447 = vmatprep.subr.mxu0 0.0
      %448 = vmatpush1.msra.mxu0 0.0
      %449 = vmatprep.subr.mxu0 0.0
      %450 = vmatpush1.msra.mxu0 0.0
      %451 = vmatprep.subr.mxu0 0.0
      %452 = vmatpush1.msra.mxu0 0.0
      %453 = vmatprep.subr.mxu0 0.0
      %454 = vmatpush1.msra.mxu0 0.0
      %455 = vmatprep.subr.mxu0 0.0
      %456 = vmatpush1.msra.mxu0 0.0
      %457 = vmatprep.subr.mxu0 0.0
      %458 = vmatpush1.msra.mxu0 0.0
      %459 = vmatprep.mubr.f32.mxu0 0.0
      %460 = vmatmul.mubr.f32.gmra.mrb[0].mxu0 %v296
      %v461 = vpop.f32.mrb[0].mxu0
      %v462 = vadd.f32 0.0, %v461
      %v463 = vpop.f32.mrb[0].mxu0
      %464 = vmatprep.mubr.f32.mxu0 0.0
      %465 = vmatmul.mubr.f32.gmra.mrb[0].mxu0 %v299
      %v466 = vpop.f32.mrb[0].mxu0
      %v467 = vadd.f32 0.0, %v466
      %v468 = vpop.f32.mrb[0].mxu0
      %469 = vmatprep.mubr.f32.mxu0 0.0
      %470 = vmatmul.mubr.f32.gmra.mrb[0].mxu0 %v302
      %v471 = vpop.f32.mrb[0].mxu0
      %v472 = vadd.f32 0.0, %v471
      %v473 = vpop.f32.mrb[0].mxu0
      %474 = vmatprep.mubr.f32.mxu0 0.0
      %475 = vmatmul.mubr.f32.gmra.mrb[0].mxu0 %v305
      %v476 = vpop.f32.mrb[0].mxu0
      %v477 = vadd.f32 0.0, %v476
      %v478 = vpop.f32.mrb[0].mxu0
      %479 = vmatprep.mubr.f32.mxu0 0.0
      %480 = vmatmul.mubr.f32.gmra.mrb[0].mxu0 %v308
      %v481 = vpop.f32.mrb[0].mxu0
      %v482 = vadd.f32 0.0, %v481
      %v483 = vpop.f32.mrb[0].mxu0
      %484 = vmatprep.mubr.f32.mxu0 0.0
      %485 = vmatmul.mubr.f32.gmra.mrb[0].mxu0 %v311
      %v486 = vpop.f32.mrb[0].mxu0
      %v487 = vadd.f32 0.0, %v486
      %v488 = vpop.f32.mrb[0].mxu0
      %489 = vmatprep.mubr.f32.mxu0 0.0
      %490 = vmatmul.mubr.f32.gmra.mrb[0].mxu0 %v314
      %v491 = vpop.f32.mrb[0].mxu0
      %v492 = vadd.f32 0.0, %v491
      %v493 = vpop.f32.mrb[0].mxu0
      %494 = vmatprep.mubr.f32.mxu0 0.0
      %495 = vmatmul.mubr.f32.gmra.mrb[0].mxu0 %v317
      %v496 = vpop.f32.mrb[0].mxu0
      %v497 = vadd.f32 0.0, %v496
      %v498 = vpop.f32.mrb[0].mxu0
      %499 = vmatprep.mubr.f32.mxu0 0.0
      %500 = vmatmul.mubr.f32.gmra.mrb[0].mxu0 %v320
      %v501 = vpop.f32.mrb[0].mxu0
      %v502 = vadd.f32 0.0, %v501
      %v503 = vpop.f32.mrb[0].mxu0
      %504 = vmatprep.mubr.f32.mxu0 0.0
      %505 = vmatmul.mubr.f32.gmra.mrb[0].mxu0 %v323
      %v506 = vpop.f32.mrb[0].mxu0
      %v507 = vadd.f32 0.0, %v506
      %v508 = vpop.f32.mrb[0].mxu0
      %509 = vmatprep.mubr.f32.mxu0 0.0
      %510 = vmatmul.mubr.f32.gmra.mrb[0].mxu0 %v326
      %v511 = vpop.f32.mrb[0].mxu0
      %v512 = vadd.f32 0.0, %v511
      %v513 = vpop.f32.mrb[0].mxu0
      %514 = vmatprep.mubr.f32.mxu0 0.0
      %515 = vmatmul.mubr.f32.gmra.mrb[0].mxu0 %v329
      %v516 = vpop.f32.mrb[0].mxu0
      %v517 = vadd.f32 0.0, %v516
      %v518 = vpop.f32.mrb[0].mxu0
      %519 = vmatprep.mubr.f32.mxu0 0.0
      %520 = vmatmul.mubr.f32.gmra.mrb[0].mxu0 %v332
      %v521 = vpop.f32.mrb[0].mxu0
      %v522 = vadd.f32 0.0, %v521
      %v523 = vpop.f32.mrb[0].mxu0
      %524 = vmatprep.mubr.f32.mxu0 0.0
      %525 = vmatmul.mubr.f32.gmra.mrb[0].mxu0 %v335
      %v526 = vpop.f32.mrb[0].mxu0
      %v527 = vadd.f32 0.0, %v526
      %v528 = vpop.f32.mrb[0].mxu0
      %529 = vmatprep.mubr.f32.mxu0 0.0
      %530 = vmatmul.mubr.f32.gmra.mrb[0].mxu0 %v338
      %v531 = vpop.f32.mrb[0].mxu0
      %v532 = vadd.f32 0.0, %v531
      %v533 = vpop.f32.mrb[0].mxu0
      %534 = vmatprep.mubr.f32.mxu0 0.0
      %535 = vmatmul.mubr.f32.gmra.mrb[0].mxu0 %v341
      %v536 = vpop.f32.mrb[0].mxu0
      %v537 = vadd.f32 0.0, %v536
      %v538 = vpop.f32.mrb[0].mxu0
      %539 = vmatprep.mubr.f32.mxu0 0.0
      %540 = vmatmul.mubr.f32.gmra.mrb[0].mxu0 %v344
      %v541 = vpop.f32.mrb[0].mxu0
      %v542 = vadd.f32 0.0, %v541
      %v543 = vpop.f32.mrb[0].mxu0
      %544 = vmatprep.mubr.f32.mxu0 0.0
      %545 = vmatmul.mubr.f32.gmra.mrb[0].mxu0 %v347
      %v546 = vpop.f32.mrb[0].mxu0
      %v547 = vadd.f32 0.0, %v546
      %v548 = vpop.f32.mrb[0].mxu0
      %549 = vmatprep.mubr.f32.mxu0 0.0
      %550 = vmatmul.mubr.f32.gmra.mrb[0].mxu0 %v350
      %v551 = vpop.f32.mrb[0].mxu0
      %v552 = vadd.f32 0.0, %v551
      %v553 = vpop.f32.mrb[0].mxu0
      %554 = vmatprep.mubr.f32.mxu0 0.0
      %555 = vmatmul.mubr.f32.gmra.mrb[0].mxu0 %v353
      %v556 = vpop.f32.mrb[0].mxu0
      %v557 = vadd.f32 0.0, %v556
      %v558 = vpop.f32.mrb[0].mxu0
      %559 = vmatprep.mubr.f32.mxu0 0.0
      %560 = vmatmul.mubr.f32.gmra.mrb[0].mxu0 %v356
      %v561 = vpop.f32.mrb[0].mxu0
      %v562 = vadd.f32 0.0, %v561
      %v563 = vpop.f32.mrb[0].mxu0
      %564 = vmatprep.mubr.f32.mxu0 0.0
      %565 = vmatmul.mubr.f32.gmra.mrb[0].mxu0 %v359
      %v566 = vpop.f32.mrb[0].mxu0
      %v567 = vadd.f32 0.0, %v566
      %v568 = vpop.f32.mrb[0].mxu0
      %569 = vmatprep.mubr.f32.mxu0 0.0
      %570 = vmatmul.mubr.f32.gmra.mrb[0].mxu0 %v362
      %v571 = vpop.f32.mrb[0].mxu0
      %v572 = vadd.f32 0.0, %v571
      %v573 = vpop.f32.mrb[0].mxu0
      %574 = vmatprep.mubr.f32.mxu0 0.0
      %575 = vmatmul.mubr.f32.gmra.mrb[0].mxu0 %v365
      %v576 = vpop.f32.mrb[0].mxu0
      %v577 = vadd.f32 0.0, %v576
      %v578 = vpop.f32.mrb[0].mxu0
      %579 = vmatprep.mubr.f32.mxu0 0.0
      %580 = vmatmul.mubr.f32.gmra.mrb[0].mxu0 %v368
      %v581 = vpop.f32.mrb[0].mxu0
      %v582 = vadd.f32 0.0, %v581
      %v583 = vpop.f32.mrb[0].mxu0
      %584 = vmatprep.mubr.f32.mxu0 0.0
      %585 = vmatmul.mubr.f32.gmra.mrb[0].mxu0 %v371
      %v586 = vpop.f32.mrb[0].mxu0
      %v587 = vadd.f32 0.0, %v586
      %v588 = vpop.f32.mrb[0].mxu0
      %589 = vmatprep.mubr.f32.mxu0 0.0
      %590 = vmatmul.mubr.f32.gmra.mrb[0].mxu0 %v374
      %v591 = vpop.f32.mrb[0].mxu0
      %v592 = vadd.f32 0.0, %v591
      %v593 = vpop.f32.mrb[0].mxu0
      %594 = vmatprep.mubr.f32.mxu0 0.0
      %595 = vmatmul.mubr.f32.gmra.mrb[0].mxu0 %v377
      %v596 = vpop.f32.mrb[0].mxu0
      %v597 = vadd.f32 0.0, %v596
      %v598 = vpop.f32.mrb[0].mxu0
      %599 = vmatprep.mubr.f32.mxu0 0.0
      %600 = vmatmul.mubr.f32.gmra.mrb[0].mxu0 %v380
      %v601 = vpop.f32.mrb[0].mxu0
      %v602 = vadd.f32 0.0, %v601
      %v603 = vpop.f32.mrb[0].mxu0
      %604 = vmatprep.mubr.f32.mxu0 0.0
      %605 = vmatmul.mubr.f32.gmra.mrb[0].mxu0 %v383
      %v606 = vpop.f32.mrb[0].mxu0
      %v607 = vadd.f32 0.0, %v606
      %v608 = vpop.f32.mrb[0].mxu0
      %609 = vmatprep.mubr.f32.mxu0 0.0
      %610 = vmatmul.mubr.f32.gmra.mrb[0].mxu0 %v386
      %v611 = vpop.f32.mrb[0].mxu0
      %v612 = vadd.f32 0.0, %v611
      %v613 = vpop.f32.mrb[0].mxu0
      %614 = vmatprep.mubr.f32.mxu0 0.0
      %615 = vmatmul.mubr.f32.gmra.mrb[0].mxu0 %v389
      %v616 = vpop.f32.mrb[0].mxu0
      %v617 = vadd.f32 0.0, %v616
      %v618 = vpop.f32.mrb[0].mxu0
      %619 = vdwg.mxu0
      %v620 = vadd.f32 %v261, %v462
      %v621 = vadd.f32 %v262, %v467
      %v622 = vadd.f32 %v263, %v472
      %v623 = vadd.f32 %v264, %v477
      %v624 = vadd.f32 %v265, %v482
      %v625 = vadd.f32 %v266, %v487
      %v626 = vadd.f32 %v267, %v492
      %v627 = vadd.f32 %v268, %v497
      %v628 = vadd.f32 %v269, %v502
      %v629 = vadd.f32 %v270, %v507
      %v630 = vadd.f32 %v271, %v512
      %v631 = vadd.f32 %v272, %v517
      %v632 = vadd.f32 %v273, %v522
      %v633 = vadd.f32 %v274, %v527
      %v634 = vadd.f32 %v275, %v532
      %v635 = vadd.f32 %v276, %v537
      %v636 = vadd.f32 %v277, %v542
      %v637 = vadd.f32 %v278, %v547
      %v638 = vadd.f32 %v279, %v552
      %v639 = vadd.f32 %v280, %v557
      %v640 = vadd.f32 %v281, %v562
      %v641 = vadd.f32 %v282, %v567
      %v642 = vadd.f32 %v283, %v572
      %v643 = vadd.f32 %v284, %v577
      %v644 = vadd.f32 %v285, %v582
      %v645 = vadd.f32 %v286, %v587
      %v646 = vadd.f32 %v287, %v592
      %v647 = vadd.f32 %v288, %v597
      %v648 = vadd.f32 %v289, %v602
      %v649 = vadd.f32 %v290, %v607
      %v650 = vadd.f32 %v291, %v612
      %v651 = vadd.f32 %v292, %v617
      %652 = vst [vmem:[#allocation2] sm:$0xff] %v620
      %653 = vst [vmem:[#allocation2 + $0x8] sm:$0xff] %v621
      %654 = vst [vmem:[#allocation2 + $0x10] sm:$0xff] %v622
      %655 = vst [vmem:[#allocation2 + $0x18] sm:$0xff] %v623
      %656 = vst [vmem:[#allocation2 + $0x20] sm:$0xff] %v624
      %657 = vst [vmem:[#allocation2 + $0x28] sm:$0xff] %v625
      %658 = vst [vmem:[#allocation2 + $0x30] sm:$0xff] %v626
      %659 = vst [vmem:[#allocation2 + $0x38] sm:$0xff] %v627
      %660 = vst [vmem:[#allocation2 + $0x40] sm:$0xff] %v628
      %661 = vst [vmem:[#allocation2 + $0x48] sm:$0xff] %v629
      %662 = vst [vmem:[#allocation2 + $0x50] sm:$0xff] %v630
      %663 = vst [vmem:[#allocation2 + $0x58] sm:$0xff] %v631
      %664 = vst [vmem:[#allocation2 + $0x60] sm:$0xff] %v632
      %665 = vst [vmem:[#allocation2 + $0x68] sm:$0xff] %v633
      %666 = vst [vmem:[#allocation2 + $0x70] sm:$0xff] %v634
      %667 = vst [vmem:[#allocation2 + $0x78] sm:$0xff] %v635
      %668 = vst [vmem:[#allocation2 + $0x80] sm:$0xff] %v636
      %669 = vst [vmem:[#allocation2 + $0x88] sm:$0xff] %v637
      %670 = vst [vmem:[#allocation2 + $0x90] sm:$0xff] %v638
      %671 = vst [vmem:[#allocation2 + $0x98] sm:$0xff] %v639
      %672 = vst [vmem:[#allocation2 + $0xa0] sm:$0xff] %v640
      %673 = vst [vmem:[#allocation2 + $0xa8] sm:$0xff] %v641
      %674 = vst [vmem:[#allocation2 + $0xb0] sm:$0xff] %v642
      %675 = vst [vmem:[#allocation2 + $0xb8] sm:$0xff] %v643
      %676 = vst [vmem:[#allocation2 + $0xc0] sm:$0xff] %v644
      %677 = vst [vmem:[#allocation2 + $0xc8] sm:$0xff] %v645
      %678 = vst [vmem:[#allocation2 + $0xd0] sm:$0xff] %v646
      %679 = vst [vmem:[#allocation2 + $0xd8] sm:$0xff] %v647
      %680 = vst [vmem:[#allocation2 + $0xe0] sm:$0xff] %v648
      %681 = vst [vmem:[#allocation2 + $0xe8] sm:$0xff] %v649
      %682 = vst [vmem:[#allocation2 + $0xf0] sm:$0xff] %v650
      %683 = vst [vmem:[#allocation2 + $0xf8] sm:$0xff] %v651
      %v684 = vld [vmem:[#allocation2] sm:$0xff]
      %v685 = vld [vmem:[#allocation2 + $0x8] sm:$0xff]
      %v686 = vld [vmem:[#allocation2 + $0x10] sm:$0xff]
      %v687 = vld [vmem:[#allocation2 + $0x18] sm:$0xff]
      %v688 = vld [vmem:[#allocation2 + $0x20] sm:$0xff]
      %v689 = vld [vmem:[#allocation2 + $0x28] sm:$0xff]
      %v690 = vld [vmem:[#allocation2 + $0x30] sm:$0xff]
      %v691 = vld [vmem:[#allocation2 + $0x38] sm:$0xff]
      %v692 = vld [vmem:[#allocation2 + $0x40] sm:$0xff]
      %v693 = vld [vmem:[#allocation2 + $0x48] sm:$0xff]
      %v694 = vld [vmem:[#allocation2 + $0x50] sm:$0xff]
      %v695 = vld [vmem:[#allocation2 + $0x58] sm:$0xff]
      %v696 = vld [vmem:[#allocation2 + $0x60] sm:$0xff]
      %v697 = vld [vmem:[#allocation2 + $0x68] sm:$0xff]
      %v698 = vld [vmem:[#allocation2 + $0x70] sm:$0xff]
      %v699 = vld [vmem:[#allocation2 + $0x78] sm:$0xff]
      %v700 = vld [vmem:[#allocation2 + $0x80] sm:$0xff]
      %v701 = vld [vmem:[#allocation2 + $0x88] sm:$0xff]
      %v702 = vld [vmem:[#allocation2 + $0x90] sm:$0xff]
      %v703 = vld [vmem:[#allocation2 + $0x98] sm:$0xff]
      %v704 = vld [vmem:[#allocation2 + $0xa0] sm:$0xff]
      %v705 = vld [vmem:[#allocation2 + $0xa8] sm:$0xff]
      %v706 = vld [vmem:[#allocation2 + $0xb0] sm:$0xff]
      %v707 = vld [vmem:[#allocation2 + $0xb8] sm:$0xff]
      %v708 = vld [vmem:[#allocation2 + $0xc0] sm:$0xff]
      %v709 = vld [vmem:[#allocation2 + $0xc8] sm:$0xff]
      %v710 = vld [vmem:[#allocation2 + $0xd0] sm:$0xff]
      %v711 = vld [vmem:[#allocation2 + $0xd8] sm:$0xff]
      %v712 = vld [vmem:[#allocation2 + $0xe0] sm:$0xff]
      %v713 = vld [vmem:[#allocation2 + $0xe8] sm:$0xff]
      %v714 = vld [vmem:[#allocation2 + $0xf0] sm:$0xff]
      %v715 = vld [vmem:[#allocation2 + $0xf8] sm:$0xff]
      %s716 = scalar_lea.vmem %s1, 4
      %v717 = vld [vmem:[%s716] sm:$0xf]
      %vm719 = vcmask 1046528
      %v720 = vrot.slane %v228, 1
      %v721 = vrot.slane %v229, 1
      %v722 = vsel %vm719, %v720, %v721
      %v723 = vrot.slane %v230, 1
      %v724 = vsel %vm719, %v721, %v723
      %v725 = vrot.slane %v231, 1
      %v726 = vsel %vm719, %v723, %v725
      %v727 = vrot.slane %v232, 1
      %v728 = vsel %vm719, %v725, %v727
      %v729 = vrot.slane %v233, 1
      %v730 = vsel %vm719, %v727, %v729
      %v731 = vrot.slane %v234, 1
      %v732 = vsel %vm719, %v729, %v731
      %v733 = vrot.slane %v235, 1
      %v734 = vsel %vm719, %v731, %v733
      %v735 = vrot.slane %v236, 1
      %v736 = vsel %vm719, %v733, %v735
      %v737 = vrot.slane %v237, 1
      %v738 = vsel %vm719, %v735, %v737
      %v739 = vrot.slane %v238, 1
      %v740 = vsel %vm719, %v737, %v739
      %v741 = vrot.slane %v239, 1
      %v742 = vsel %vm719, %v739, %v741
      %v743 = vrot.slane %v240, 1
      %v744 = vsel %vm719, %v741, %v743
      %v745 = vrot.slane %v241, 1
      %v746 = vsel %vm719, %v743, %v745
      %v747 = vrot.slane %v242, 1
      %v748 = vsel %vm719, %v745, %v747
      %v749 = vrot.slane %v243, 1
      %v750 = vsel %vm719, %v747, %v749
      %v751 = vrot.slane %v244, 1
      %v752 = vsel %vm719, %v749, %v751
      %v753 = vrot.slane %v245, 1
      %v754 = vsel %vm719, %v751, %v753
      %v755 = vrot.slane %v246, 1
      %v756 = vsel %vm719, %v753, %v755
      %v757 = vrot.slane %v247, 1
      %v758 = vsel %vm719, %v755, %v757
      %v759 = vrot.slane %v248, 1
      %v760 = vsel %vm719, %v757, %v759
      %v761 = vrot.slane %v249, 1
      %v762 = vsel %vm719, %v759, %v761
      %v763 = vrot.slane %v250, 1
      %v764 = vsel %vm719, %v761, %v763
      %v765 = vrot.slane %v251, 1
      %v766 = vsel %vm719, %v763, %v765
      %v767 = vrot.slane %v252, 1
      %v768 = vsel %vm719, %v765, %v767
      %v769 = vrot.slane %v253, 1
      %v770 = vsel %vm719, %v767, %v769
      %v771 = vrot.slane %v254, 1
      %v772 = vsel %vm719, %v769, %v771
      %v773 = vrot.slane %v255, 1
      %v774 = vsel %vm719, %v771, %v773
      %v775 = vrot.slane %v256, 1
      %v776 = vsel %vm719, %v773, %v775
      %v777 = vrot.slane %v257, 1
      %v778 = vsel %vm719, %v775, %v777
      %v779 = vrot.slane %v258, 1
      %v780 = vsel %vm719, %v777, %v779
      %v781 = vrot.slane %v259, 1
      %v782 = vsel %vm719, %v779, %v781
      %v783 = vrot.slane %v260, 1
      %v784 = vsel %vm719, %v781, %v783
      %v785 = vsel %vm294, %v722, 0
      %v787 = vsel %vm294, %v724, 0
      %v789 = vsel %vm294, %v726, 0
      %v791 = vsel %vm294, %v728, 0
      %v793 = vsel %vm294, %v730, 0
      %v795 = vsel %vm294, %v732, 0
      %v797 = vsel %vm294, %v734, 0
      %v799 = vsel %vm294, %v736, 0
      %v801 = vsel %vm294, %v738, 0
      %v803 = vsel %vm294, %v740, 0
      %v805 = vsel %vm294, %v742, 0
      %v807 = vsel %vm294, %v744, 0
      %v809 = vsel %vm294, %v746, 0
      %v811 = vsel %vm294, %v748, 0
      %v813 = vsel %vm294, %v750, 0
      %v815 = vsel %vm294, %v752, 0
      %v817 = vsel %vm294, %v754, 0
      %v819 = vsel %vm294, %v756, 0
      %v821 = vsel %vm294, %v758, 0
      %v823 = vsel %vm294, %v760, 0
      %v825 = vsel %vm294, %v762, 0
      %v827 = vsel %vm294, %v764, 0
      %v829 = vsel %vm294, %v766, 0
      %v831 = vsel %vm294, %v768, 0
      %v833 = vsel %vm294, %v770, 0
      %v835 = vsel %vm294, %v772, 0
      %v837 = vsel %vm294, %v774, 0
      %v839 = vsel %vm294, %v776, 0
      %v841 = vsel %vm294, %v778, 0
      %v843 = vsel %vm294, %v780, 0
      %v845 = vsel %vm294, %v782, 0
      %v847 = vsel %vm294, %v784, 0
      %v850 = vsel %vm391, %v717, 0
      %852 = vmatprep.subr.mxu0 0.0
      %853 = vmatpush1.msra.mxu0 %v850
      %854 = vmatprep.subr.mxu0 0.0
      %855 = vmatpush1.msra.mxu0 0.0
      %856 = vmatprep.subr.mxu0 0.0
      %857 = vmatpush1.msra.mxu0 0.0
      %858 = vmatprep.subr.mxu0 0.0
      %859 = vmatpush1.msra.mxu0 0.0
      %860 = vmatprep.subr.mxu0 0.0
      %861 = vmatpush1.msra.mxu0 0.0
      %862 = vmatprep.subr.mxu0 0.0
      %863 = vmatpush1.msra.mxu0 0.0
      %864 = vmatprep.subr.mxu0 0.0
      %865 = vmatpush1.msra.mxu0 0.0
      %866 = vmatprep.subr.mxu0 0.0
      %867 = vmatpush1.msra.mxu0 0.0
      %868 = vmatprep.subr.mxu0 0.0
      %869 = vmatpush1.msra.mxu0 0.0
      %870 = vmatprep.subr.mxu0 0.0
      %871 = vmatpush1.msra.mxu0 0.0
      %872 = vmatprep.subr.mxu0 0.0
      %873 = vmatpush1.msra.mxu0 0.0
      %874 = vmatprep.subr.mxu0 0.0
      %875 = vmatpush1.msra.mxu0 0.0
      %876 = vmatprep.subr.mxu0 0.0
      %877 = vmatpush1.msra.mxu0 0.0
      %878 = vmatprep.subr.mxu0 0.0
      %879 = vmatpush1.msra.mxu0 0.0
      %880 = vmatprep.subr.mxu0 0.0
      %881 = vmatpush1.msra.mxu0 0.0
      %882 = vmatprep.subr.mxu0 0.0
      %883 = vmatpush1.msra.mxu0 0.0
      %884 = vmatprep.subr.mxu0 0.0
      %885 = vmatpush1.msra.mxu0 0.0
      %886 = vmatprep.subr.mxu0 0.0
      %887 = vmatpush1.msra.mxu0 0.0
      %888 = vmatprep.subr.mxu0 0.0
      %889 = vmatpush1.msra.mxu0 0.0
      %890 = vmatprep.subr.mxu0 0.0
      %891 = vmatpush1.msra.mxu0 0.0
      %892 = vmatprep.subr.mxu0 0.0
      %893 = vmatpush1.msra.mxu0 0.0
      %894 = vmatprep.subr.mxu0 0.0
      %895 = vmatpush1.msra.mxu0 0.0
      %896 = vmatprep.subr.mxu0 0.0
      %897 = vmatpush1.msra.mxu0 0.0
      %898 = vmatprep.subr.mxu0 0.0
      %899 = vmatpush1.msra.mxu0 0.0
      %900 = vmatprep.subr.mxu0 0.0
      %901 = vmatpush1.msra.mxu0 0.0
      %902 = vmatprep.subr.mxu0 0.0
      %903 = vmatpush1.msra.mxu0 0.0
      %904 = vmatprep.subr.mxu0 0.0
      %905 = vmatpush1.msra.mxu0 0.0
      %906 = vmatprep.subr.mxu0 0.0
      %907 = vmatpush1.msra.mxu0 0.0
      %908 = vmatprep.subr.mxu0 0.0
      %909 = vmatpush1.msra.mxu0 0.0
      %910 = vmatprep.subr.mxu0 0.0
      %911 = vmatpush1.msra.mxu0 0.0
      %912 = vmatprep.subr.mxu0 0.0
      %913 = vmatpush1.msra.mxu0 0.0
      %914 = vmatprep.subr.mxu0 0.0
      %915 = vmatpush1.msra.mxu0 0.0
      %916 = vmatprep.mubr.f32.mxu0 0.0
      %917 = vmatmul.mubr.f32.gmra.mrb[0].mxu0 %v785
      %v918 = vpop.f32.mrb[0].mxu0
      %v919 = vadd.f32 0.0, %v918
      %v920 = vpop.f32.mrb[0].mxu0
      %921 = vmatprep.mubr.f32.mxu0 0.0
      %922 = vmatmul.mubr.f32.gmra.mrb[0].mxu0 %v787
      %v923 = vpop.f32.mrb[0].mxu0
      %v924 = vadd.f32 0.0, %v923
      %v925 = vpop.f32.mrb[0].mxu0
      %926 = vmatprep.mubr.f32.mxu0 0.0
      %927 = vmatmul.mubr.f32.gmra.mrb[0].mxu0 %v789
      %v928 = vpop.f32.mrb[0].mxu0
      %v929 = vadd.f32 0.0, %v928
      %v930 = vpop.f32.mrb[0].mxu0
      %931 = vmatprep.mubr.f32.mxu0 0.0
      %932 = vmatmul.mubr.f32.gmra.mrb[0].mxu0 %v791
      %v933 = vpop.f32.mrb[0].mxu0
      %v934 = vadd.f32 0.0, %v933
      %v935 = vpop.f32.mrb[0].mxu0
      %936 = vmatprep.mubr.f32.mxu0 0.0
      %937 = vmatmul.mubr.f32.gmra.mrb[0].mxu0 %v793
      %v938 = vpop.f32.mrb[0].mxu0
      %v939 = vadd.f32 0.0, %v938
      %v940 = vpop.f32.mrb[0].mxu0
      %941 = vmatprep.mubr.f32.mxu0 0.0
      %942 = vmatmul.mubr.f32.gmra.mrb[0].mxu0 %v795
      %v943 = vpop.f32.mrb[0].mxu0
      %v944 = vadd.f32 0.0, %v943
      %v945 = vpop.f32.mrb[0].mxu0
      %946 = vmatprep.mubr.f32.mxu0 0.0
      %947 = vmatmul.mubr.f32.gmra.mrb[0].mxu0 %v797
      %v948 = vpop.f32.mrb[0].mxu0
      %v949 = vadd.f32 0.0, %v948
      %v950 = vpop.f32.mrb[0].mxu0
      %951 = vmatprep.mubr.f32.mxu0 0.0
      %952 = vmatmul.mubr.f32.gmra.mrb[0].mxu0 %v799
      %v953 = vpop.f32.mrb[0].mxu0
      %v954 = vadd.f32 0.0, %v953
      %v955 = vpop.f32.mrb[0].mxu0
      %956 = vmatprep.mubr.f32.mxu0 0.0
      %957 = vmatmul.mubr.f32.gmra.mrb[0].mxu0 %v801
      %v958 = vpop.f32.mrb[0].mxu0
      %v959 = vadd.f32 0.0, %v958
      %v960 = vpop.f32.mrb[0].mxu0
      %961 = vmatprep.mubr.f32.mxu0 0.0
      %962 = vmatmul.mubr.f32.gmra.mrb[0].mxu0 %v803
      %v963 = vpop.f32.mrb[0].mxu0
      %v964 = vadd.f32 0.0, %v963
      %v965 = vpop.f32.mrb[0].mxu0
      %966 = vmatprep.mubr.f32.mxu0 0.0
      %967 = vmatmul.mubr.f32.gmra.mrb[0].mxu0 %v805
      %v968 = vpop.f32.mrb[0].mxu0
      %v969 = vadd.f32 0.0, %v968
      %v970 = vpop.f32.mrb[0].mxu0
      %971 = vmatprep.mubr.f32.mxu0 0.0
      %972 = vmatmul.mubr.f32.gmra.mrb[0].mxu0 %v807
      %v973 = vpop.f32.mrb[0].mxu0
      %v974 = vadd.f32 0.0, %v973
      %v975 = vpop.f32.mrb[0].mxu0
      %976 = vmatprep.mubr.f32.mxu0 0.0
      %977 = vmatmul.mubr.f32.gmra.mrb[0].mxu0 %v809
      %v978 = vpop.f32.mrb[0].mxu0
      %v979 = vadd.f32 0.0, %v978
      %v980 = vpop.f32.mrb[0].mxu0
      %981 = vmatprep.mubr.f32.mxu0 0.0
      %982 = vmatmul.mubr.f32.gmra.mrb[0].mxu0 %v811
      %v983 = vpop.f32.mrb[0].mxu0
      %v984 = vadd.f32 0.0, %v983
      %v985 = vpop.f32.mrb[0].mxu0
      %986 = vmatprep.mubr.f32.mxu0 0.0
      %987 = vmatmul.mubr.f32.gmra.mrb[0].mxu0 %v813
      %v988 = vpop.f32.mrb[0].mxu0
      %v989 = vadd.f32 0.0, %v988
      %v990 = vpop.f32.mrb[0].mxu0
      %991 = vmatprep.mubr.f32.mxu0 0.0
      %992 = vmatmul.mubr.f32.gmra.mrb[0].mxu0 %v815
      %v993 = vpop.f32.mrb[0].mxu0
      %v994 = vadd.f32 0.0, %v993
      %v995 = vpop.f32.mrb[0].mxu0
      %996 = vmatprep.mubr.f32.mxu0 0.0
      %997 = vmatmul.mubr.f32.gmra.mrb[0].mxu0 %v817
      %v998 = vpop.f32.mrb[0].mxu0
      %v999 = vadd.f32 0.0, %v998
      %v1000 = vpop.f32.mrb[0].mxu0
      %1001 = vmatprep.mubr.f32.mxu0 0.0
      %1002 = vmatmul.mubr.f32.gmra.mrb[0].mxu0 %v819
      %v1003 = vpop.f32.mrb[0].mxu0
      %v1004 = vadd.f32 0.0, %v1003
      %v1005 = vpop.f32.mrb[0].mxu0
      %1006 = vmatprep.mubr.f32.mxu0 0.0
      %1007 = vmatmul.mubr.f32.gmra.mrb[0].mxu0 %v821
      %v1008 = vpop.f32.mrb[0].mxu0
      %v1009 = vadd.f32 0.0, %v1008
      %v1010 = vpop.f32.mrb[0].mxu0
      %1011 = vmatprep.mubr.f32.mxu0 0.0
      %1012 = vmatmul.mubr.f32.gmra.mrb[0].mxu0 %v823
      %v1013 = vpop.f32.mrb[0].mxu0
      %v1014 = vadd.f32 0.0, %v1013
      %v1015 = vpop.f32.mrb[0].mxu0
      %1016 = vmatprep.mubr.f32.mxu0 0.0
      %1017 = vmatmul.mubr.f32.gmra.mrb[0].mxu0 %v825
      %v1018 = vpop.f32.mrb[0].mxu0
      %v1019 = vadd.f32 0.0, %v1018
      %v1020 = vpop.f32.mrb[0].mxu0
      %1021 = vmatprep.mubr.f32.mxu0 0.0
      %1022 = vmatmul.mubr.f32.gmra.mrb[0].mxu0 %v827
      %v1023 = vpop.f32.mrb[0].mxu0
      %v1024 = vadd.f32 0.0, %v1023
      %v1025 = vpop.f32.mrb[0].mxu0
      %1026 = vmatprep.mubr.f32.mxu0 0.0
      %1027 = vmatmul.mubr.f32.gmra.mrb[0].mxu0 %v829
      %v1028 = vpop.f32.mrb[0].mxu0
      %v1029 = vadd.f32 0.0, %v1028
      %v1030 = vpop.f32.mrb[0].mxu0
      %1031 = vmatprep.mubr.f32.mxu0 0.0
      %1032 = vmatmul.mubr.f32.gmra.mrb[0].mxu0 %v831
      %v1033 = vpop.f32.mrb[0].mxu0
      %v1034 = vadd.f32 0.0, %v1033
      %v1035 = vpop.f32.mrb[0].mxu0
      %1036 = vmatprep.mubr.f32.mxu0 0.0
      %1037 = vmatmul.mubr.f32.gmra.mrb[0].mxu0 %v833
      %v1038 = vpop.f32.mrb[0].mxu0
      %v1039 = vadd.f32 0.0, %v1038
      %v1040 = vpop.f32.mrb[0].mxu0
      %1041 = vmatprep.mubr.f32.mxu0 0.0
      %1042 = vmatmul.mubr.f32.gmra.mrb[0].mxu0 %v835
      %v1043 = vpop.f32.mrb[0].mxu0
      %v1044 = vadd.f32 0.0, %v1043
      %v1045 = vpop.f32.mrb[0].mxu0
      %1046 = vmatprep.mubr.f32.mxu0 0.0
      %1047 = vmatmul.mubr.f32.gmra.mrb[0].mxu0 %v837
      %v1048 = vpop.f32.mrb[0].mxu0
      %v1049 = vadd.f32 0.0, %v1048
      %v1050 = vpop.f32.mrb[0].mxu0
      %1051 = vmatprep.mubr.f32.mxu0 0.0
      %1052 = vmatmul.mubr.f32.gmra.mrb[0].mxu0 %v839
      %v1053 = vpop.f32.mrb[0].mxu0
      %v1054 = vadd.f32 0.0, %v1053
      %v1055 = vpop.f32.mrb[0].mxu0
      %1056 = vmatprep.mubr.f32.mxu0 0.0
      %1057 = vmatmul.mubr.f32.gmra.mrb[0].mxu0 %v841
      %v1058 = vpop.f32.mrb[0].mxu0
      %v1059 = vadd.f32 0.0, %v1058
      %v1060 = vpop.f32.mrb[0].mxu0
      %1061 = vmatprep.mubr.f32.mxu0 0.0
      %1062 = vmatmul.mubr.f32.gmra.mrb[0].mxu0 %v843
      %v1063 = vpop.f32.mrb[0].mxu0
      %v1064 = vadd.f32 0.0, %v1063
      %v1065 = vpop.f32.mrb[0].mxu0
      %1066 = vmatprep.mubr.f32.mxu0 0.0
      %1067 = vmatmul.mubr.f32.gmra.mrb[0].mxu0 %v845
      %v1068 = vpop.f32.mrb[0].mxu0
      %v1069 = vadd.f32 0.0, %v1068
      %v1070 = vpop.f32.mrb[0].mxu0
      %1071 = vmatprep.mubr.f32.mxu0 0.0
      %1072 = vmatmul.mubr.f32.gmra.mrb[0].mxu0 %v847
      %v1073 = vpop.f32.mrb[0].mxu0
      %v1074 = vadd.f32 0.0, %v1073
      %v1075 = vpop.f32.mrb[0].mxu0
      %1076 = vdwg.mxu0
      %v1077 = vadd.f32 %v684, %v919
      %v1078 = vadd.f32 %v685, %v924
      %v1079 = vadd.f32 %v686, %v929
      %v1080 = vadd.f32 %v687, %v934
      %v1081 = vadd.f32 %v688, %v939
      %v1082 = vadd.f32 %v689, %v944
      %v1083 = vadd.f32 %v690, %v949
      %v1084 = vadd.f32 %v691, %v954
      %v1085 = vadd.f32 %v692, %v959
      %v1086 = vadd.f32 %v693, %v964
      %v1087 = vadd.f32 %v694, %v969
      %v1088 = vadd.f32 %v695, %v974
      %v1089 = vadd.f32 %v696, %v979
      %v1090 = vadd.f32 %v697, %v984
      %v1091 = vadd.f32 %v698, %v989
      %v1092 = vadd.f32 %v699, %v994
      %v1093 = vadd.f32 %v700, %v999
      %v1094 = vadd.f32 %v701, %v1004
      %v1095 = vadd.f32 %v702, %v1009
      %v1096 = vadd.f32 %v703, %v1014
      %v1097 = vadd.f32 %v704, %v1019
      %v1098 = vadd.f32 %v705, %v1024
      %v1099 = vadd.f32 %v706, %v1029
      %v1100 = vadd.f32 %v707, %v1034
      %v1101 = vadd.f32 %v708, %v1039
      %v1102 = vadd.f32 %v709, %v1044
      %v1103 = vadd.f32 %v710, %v1049
      %v1104 = vadd.f32 %v711, %v1054
      %v1105 = vadd.f32 %v712, %v1059
      %v1106 = vadd.f32 %v713, %v1064
      %v1107 = vadd.f32 %v714, %v1069
      %v1108 = vadd.f32 %v715, %v1074
      %1109 = vst [vmem:[#allocation2] sm:$0xff] %v1077
      %1110 = vst [vmem:[#allocation2 + $0x8] sm:$0xff] %v1078
      %1111 = vst [vmem:[#allocation2 + $0x10] sm:$0xff] %v1079
      %1112 = vst [vmem:[#allocation2 + $0x18] sm:$0xff] %v1080
      %1113 = vst [vmem:[#allocation2 + $0x20] sm:$0xff] %v1081
      %1114 = vst [vmem:[#allocation2 + $0x28] sm:$0xff] %v1082
      %1115 = vst [vmem:[#allocation2 + $0x30] sm:$0xff] %v1083
      %1116 = vst [vmem:[#allocation2 + $0x38] sm:$0xff] %v1084
      %1117 = vst [vmem:[#allocation2 + $0x40] sm:$0xff] %v1085
      %1118 = vst [vmem:[#allocation2 + $0x48] sm:$0xff] %v1086
      %1119 = vst [vmem:[#allocation2 + $0x50] sm:$0xff] %v1087
      %1120 = vst [vmem:[#allocation2 + $0x58] sm:$0xff] %v1088
      %1121 = vst [vmem:[#allocation2 + $0x60] sm:$0xff] %v1089
      %1122 = vst [vmem:[#allocation2 + $0x68] sm:$0xff] %v1090
      %1123 = vst [vmem:[#allocation2 + $0x70] sm:$0xff] %v1091
      %1124 = vst [vmem:[#allocation2 + $0x78] sm:$0xff] %v1092
      %1125 = vst [vmem:[#allocation2 + $0x80] sm:$0xff] %v1093
      %1126 = vst [vmem:[#allocation2 + $0x88] sm:$0xff] %v1094
      %1127 = vst [vmem:[#allocation2 + $0x90] sm:$0xff] %v1095
      %1128 = vst [vmem:[#allocation2 + $0x98] sm:$0xff] %v1096
      %1129 = vst [vmem:[#allocation2 + $0xa0] sm:$0xff] %v1097
      %1130 = vst [vmem:[#allocation2 + $0xa8] sm:$0xff] %v1098
      %1131 = vst [vmem:[#allocation2 + $0xb0] sm:$0xff] %v1099
      %1132 = vst [vmem:[#allocation2 + $0xb8] sm:$0xff] %v1100
      %1133 = vst [vmem:[#allocation2 + $0xc0] sm:$0xff] %v1101
      %1134 = vst [vmem:[#allocation2 + $0xc8] sm:$0xff] %v1102
      %1135 = vst [vmem:[#allocation2 + $0xd0] sm:$0xff] %v1103
      %1136 = vst [vmem:[#allocation2 + $0xd8] sm:$0xff] %v1104
      %1137 = vst [vmem:[#allocation2 + $0xe0] sm:$0xff] %v1105
      %1138 = vst [vmem:[#allocation2 + $0xe8] sm:$0xff] %v1106
      %1139 = vst [vmem:[#allocation2 + $0xf0] sm:$0xff] %v1107
      %1140 = vst [vmem:[#allocation2 + $0xf8] sm:$0xff] %v1108
      %v1141 = vld [vmem:[#allocation2] sm:$0xff]
      %v1142 = vld [vmem:[#allocation2 + $0x8] sm:$0xff]
      %v1143 = vld [vmem:[#allocation2 + $0x10] sm:$0xff]
      %v1144 = vld [vmem:[#allocation2 + $0x18] sm:$0xff]
      %v1145 = vld [vmem:[#allocation2 + $0x20] sm:$0xff]
      %v1146 = vld [vmem:[#allocation2 + $0x28] sm:$0xff]
      %v1147 = vld [vmem:[#allocation2 + $0x30] sm:$0xff]
      %v1148 = vld [vmem:[#allocation2 + $0x38] sm:$0xff]
      %v1149 = vld [vmem:[#allocation2 + $0x40] sm:$0xff]
      %v1150 = vld [vmem:[#allocation2 + $0x48] sm:$0xff]
      %v1151 = vld [vmem:[#allocation2 + $0x50] sm:$0xff]
      %v1152 = vld [vmem:[#allocation2 + $0x58] sm:$0xff]
      %v1153 = vld [vmem:[#allocation2 + $0x60] sm:$0xff]
      %v1154 = vld [vmem:[#allocation2 + $0x68] sm:$0xff]
      %v1155 = vld [vmem:[#allocation2 + $0x70] sm:$0xff]
      %v1156 = vld [vmem:[#allocation2 + $0x78] sm:$0xff]
      %v1157 = vld [vmem:[#allocation2 + $0x80] sm:$0xff]
      %v1158 = vld [vmem:[#allocation2 + $0x88] sm:$0xff]
      %v1159 = vld [vmem:[#allocation2 + $0x90] sm:$0xff]
      %v1160 = vld [vmem:[#allocation2 + $0x98] sm:$0xff]
      %v1161 = vld [vmem:[#allocation2 + $0xa0] sm:$0xff]
      %v1162 = vld [vmem:[#allocation2 + $0xa8] sm:$0xff]
      %v1163 = vld [vmem:[#allocation2 + $0xb0] sm:$0xff]
      %v1164 = vld [vmem:[#allocation2 + $0xb8] sm:$0xff]
      %v1165 = vld [vmem:[#allocation2 + $0xc0] sm:$0xff]
      %v1166 = vld [vmem:[#allocation2 + $0xc8] sm:$0xff]
      %v1167 = vld [vmem:[#allocation2 + $0xd0] sm:$0xff]
      %v1168 = vld [vmem:[#allocation2 + $0xd8] sm:$0xff]
      %v1169 = vld [vmem:[#allocation2 + $0xe0] sm:$0xff]
      %v1170 = vld [vmem:[#allocation2 + $0xe8] sm:$0xff]
      %v1171 = vld [vmem:[#allocation2 + $0xf0] sm:$0xff]
      %v1172 = vld [vmem:[#allocation2 + $0xf8] sm:$0xff]
      %s1173 = scalar_lea.vmem %s1, 8
      %v1174 = vld [vmem:[%s1173] sm:$0xf]
      %vm1175 = vcmask 1045504
      %v1176 = vrot.slane %v228, 2
      %v1177 = vrot.slane %v229, 2
      %v1178 = vsel %vm1175, %v1176, %v1177
      %v1179 = vrot.slane %v230, 2
      %v1180 = vsel %vm1175, %v1177, %v1179
      %v1181 = vrot.slane %v231, 2
      %v1182 = vsel %vm1175, %v1179, %v1181
      %v1183 = vrot.slane %v232, 2
      %v1184 = vsel %vm1175, %v1181, %v1183
      %v1185 = vrot.slane %v233, 2
      %v1186 = vsel %vm1175, %v1183, %v1185
      %v1187 = vrot.slane %v234, 2
      %v1188 = vsel %vm1175, %v1185, %v1187
      %v1189 = vrot.slane %v235, 2
      %v1190 = vsel %vm1175, %v1187, %v1189
      %v1191 = vrot.slane %v236, 2
      %v1192 = vsel %vm1175, %v1189, %v1191
      %v1193 = vrot.slane %v237, 2
      %v1194 = vsel %vm1175, %v1191, %v1193
      %v1195 = vrot.slane %v238, 2
      %v1196 = vsel %vm1175, %v1193, %v1195
      %v1197 = vrot.slane %v239, 2
      %v1198 = vsel %vm1175, %v1195, %v1197
      %v1199 = vrot.slane %v240, 2
      %v1200 = vsel %vm1175, %v1197, %v1199
      %v1201 = vrot.slane %v241, 2
      %v1202 = vsel %vm1175, %v1199, %v1201
      %v1203 = vrot.slane %v242, 2
      %v1204 = vsel %vm1175, %v1201, %v1203
      %v1205 = vrot.slane %v243, 2
      %v1206 = vsel %vm1175, %v1203, %v1205
      %v1207 = vrot.slane %v244, 2
      %v1208 = vsel %vm1175, %v1205, %v1207
      %v1209 = vrot.slane %v245, 2
      %v1210 = vsel %vm1175, %v1207, %v1209
      %v1211 = vrot.slane %v246, 2
      %v1212 = vsel %vm1175, %v1209, %v1211
      %v1213 = vrot.slane %v247, 2
      %v1214 = vsel %vm1175, %v1211, %v1213
      %v1215 = vrot.slane %v248, 2
      %v1216 = vsel %vm1175, %v1213, %v1215
      %v1217 = vrot.slane %v249, 2
      %v1218 = vsel %vm1175, %v1215, %v1217
      %v1219 = vrot.slane %v250, 2
      %v1220 = vsel %vm1175, %v1217, %v1219
      %v1221 = vrot.slane %v251, 2
      %v1222 = vsel %vm1175, %v1219, %v1221
      %v1223 = vrot.slane %v252, 2
      %v1224 = vsel %vm1175, %v1221, %v1223
      %v1225 = vrot.slane %v253, 2
      %v1226 = vsel %vm1175, %v1223, %v1225
      %v1227 = vrot.slane %v254, 2
      %v1228 = vsel %vm1175, %v1225, %v1227
      %v1229 = vrot.slane %v255, 2
      %v1230 = vsel %vm1175, %v1227, %v1229
      %v1231 = vrot.slane %v256, 2
      %v1232 = vsel %vm1175, %v1229, %v1231
      %v1233 = vrot.slane %v257, 2
      %v1234 = vsel %vm1175, %v1231, %v1233
      %v1235 = vrot.slane %v258, 2
      %v1236 = vsel %vm1175, %v1233, %v1235
      %v1237 = vrot.slane %v259, 2
      %v1238 = vsel %vm1175, %v1235, %v1237
      %v1239 = vrot.slane %v260, 2
      %v1240 = vsel %vm1175, %v1237, %v1239
      %v1241 = vsel %vm294, %v1178, 0
      %v1243 = vsel %vm294, %v1180, 0
      %v1245 = vsel %vm294, %v1182, 0
      %v1247 = vsel %vm294, %v1184, 0
      %v1249 = vsel %vm294, %v1186, 0
      %v1251 = vsel %vm294, %v1188, 0
      %v1253 = vsel %vm294, %v1190, 0
      %v1255 = vsel %vm294, %v1192, 0
      %v1257 = vsel %vm294, %v1194, 0
      %v1259 = vsel %vm294, %v1196, 0
      %v1261 = vsel %vm294, %v1198, 0
      %v1263 = vsel %vm294, %v1200, 0
      %v1265 = vsel %vm294, %v1202, 0
      %v1267 = vsel %vm294, %v1204, 0
      %v1269 = vsel %vm294, %v1206, 0
      %v1271 = vsel %vm294, %v1208, 0
      %v1273 = vsel %vm294, %v1210, 0
      %v1275 = vsel %vm294, %v1212, 0
      %v1277 = vsel %vm294, %v1214, 0
      %v1279 = vsel %vm294, %v1216, 0
      %v1281 = vsel %vm294, %v1218, 0
      %v1283 = vsel %vm294, %v1220, 0
      %v1285 = vsel %vm294, %v1222, 0
      %v1287 = vsel %vm294, %v1224, 0
      %v1289 = vsel %vm294, %v1226, 0
      %v1291 = vsel %vm294, %v1228, 0
      %v1293 = vsel %vm294, %v1230, 0
      %v1295 = vsel %vm294, %v1232, 0
      %v1297 = vsel %vm294, %v1234, 0
      %v1299 = vsel %vm294, %v1236, 0
      %v1301 = vsel %vm294, %v1238, 0
      %v1303 = vsel %vm294, %v1240, 0
      %v1306 = vsel %vm391, %v1174, 0
      %1308 = vmatprep.subr.mxu0 0.0
      %1309 = vmatpush1.msra.mxu0 %v1306
      %1310 = vmatprep.subr.mxu0 0.0
      %1311 = vmatpush1.msra.mxu0 0.0
      %1312 = vmatprep.subr.mxu0 0.0
      %1313 = vmatpush1.msra.mxu0 0.0
      %1314 = vmatprep.subr.mxu0 0.0
      %1315 = vmatpush1.msra.mxu0 0.0
      %1316 = vmatprep.subr.mxu0 0.0
      %1317 = vmatpush1.msra.mxu0 0.0
      %1318 = vmatprep.subr.mxu0 0.0
      %1319 = vmatpush1.msra.mxu0 0.0
      %1320 = vmatprep.subr.mxu0 0.0
      %1321 = vmatpush1.msra.mxu0 0.0
      %1322 = vmatprep.subr.mxu0 0.0
      %1323 = vmatpush1.msra.mxu0 0.0
      %1324 = vmatprep.subr.mxu0 0.0
      %1325 = vmatpush1.msra.mxu0 0.0
      %1326 = vmatprep.subr.mxu0 0.0
      %1327 = vmatpush1.msra.mxu0 0.0
      %1328 = vmatprep.subr.mxu0 0.0
      %1329 = vmatpush1.msra.mxu0 0.0
      %1330 = vmatprep.subr.mxu0 0.0
      %1331 = vmatpush1.msra.mxu0 0.0
      %1332 = vmatprep.subr.mxu0 0.0
      %1333 = vmatpush1.msra.mxu0 0.0
      %1334 = vmatprep.subr.mxu0 0.0
      %1335 = vmatpush1.msra.mxu0 0.0
      %1336 = vmatprep.subr.mxu0 0.0
      %1337 = vmatpush1.msra.mxu0 0.0
      %1338 = vmatprep.subr.mxu0 0.0
      %1339 = vmatpush1.msra.mxu0 0.0
      %1340 = vmatprep.subr.mxu0 0.0
      %1341 = vmatpush1.msra.mxu0 0.0
      %1342 = vmatprep.subr.mxu0 0.0
      %1343 = vmatpush1.msra.mxu0 0.0
      %1344 = vmatprep.subr.mxu0 0.0
      %1345 = vmatpush1.msra.mxu0 0.0
      %1346 = vmatprep.subr.mxu0 0.0
      %1347 = vmatpush1.msra.mxu0 0.0
      %1348 = vmatprep.subr.mxu0 0.0
      %1349 = vmatpush1.msra.mxu0 0.0
      %1350 = vmatprep.subr.mxu0 0.0
      %1351 = vmatpush1.msra.mxu0 0.0
      %1352 = vmatprep.subr.mxu0 0.0
      %1353 = vmatpush1.msra.mxu0 0.0
      %1354 = vmatprep.subr.mxu0 0.0
      %1355 = vmatpush1.msra.mxu0 0.0
      %1356 = vmatprep.subr.mxu0 0.0
      %1357 = vmatpush1.msra.mxu0 0.0
      %1358 = vmatprep.subr.mxu0 0.0
      %1359 = vmatpush1.msra.mxu0 0.0
      %1360 = vmatprep.subr.mxu0 0.0
      %1361 = vmatpush1.msra.mxu0 0.0
      %1362 = vmatprep.subr.mxu0 0.0
      %1363 = vmatpush1.msra.mxu0 0.0
      %1364 = vmatprep.subr.mxu0 0.0
      %1365 = vmatpush1.msra.mxu0 0.0
      %1366 = vmatprep.subr.mxu0 0.0
      %1367 = vmatpush1.msra.mxu0 0.0
      %1368 = vmatprep.subr.mxu0 0.0
      %1369 = vmatpush1.msra.mxu0 0.0
      %1370 = vmatprep.subr.mxu0 0.0
      %1371 = vmatpush1.msra.mxu0 0.0
      %1372 = vmatprep.mubr.f32.mxu0 0.0
      %1373 = vmatmul.mubr.f32.gmra.mrb[0].mxu0 %v1241
      %v1374 = vpop.f32.mrb[0].mxu0
      %v1375 = vadd.f32 0.0, %v1374
      %v1376 = vpop.f32.mrb[0].mxu0
      %1377 = vmatprep.mubr.f32.mxu0 0.0
      %1378 = vmatmul.mubr.f32.gmra.mrb[0].mxu0 %v1243
      %v1379 = vpop.f32.mrb[0].mxu0
      %v1380 = vadd.f32 0.0, %v1379
      %v1381 = vpop.f32.mrb[0].mxu0
      %1382 = vmatprep.mubr.f32.mxu0 0.0
      %1383 = vmatmul.mubr.f32.gmra.mrb[0].mxu0 %v1245
      %v1384 = vpop.f32.mrb[0].mxu0
      %v1385 = vadd.f32 0.0, %v1384
      %v1386 = vpop.f32.mrb[0].mxu0
      %1387 = vmatprep.mubr.f32.mxu0 0.0
      %1388 = vmatmul.mubr.f32.gmra.mrb[0].mxu0 %v1247
      %v1389 = vpop.f32.mrb[0].mxu0
      %v1390 = vadd.f32 0.0, %v1389
      %v1391 = vpop.f32.mrb[0].mxu0
      %1392 = vmatprep.mubr.f32.mxu0 0.0
      %1393 = vmatmul.mubr.f32.gmra.mrb[0].mxu0 %v1249
      %v1394 = vpop.f32.mrb[0].mxu0
      %v1395 = vadd.f32 0.0, %v1394
      %v1396 = vpop.f32.mrb[0].mxu0
      %1397 = vmatprep.mubr.f32.mxu0 0.0
      %1398 = vmatmul.mubr.f32.gmra.mrb[0].mxu0 %v1251
      %v1399 = vpop.f32.mrb[0].mxu0
      %v1400 = vadd.f32 0.0, %v1399
      %v1401 = vpop.f32.mrb[0].mxu0
      %1402 = vmatprep.mubr.f32.mxu0 0.0
      %1403 = vmatmul.mubr.f32.gmra.mrb[0].mxu0 %v1253
      %v1404 = vpop.f32.mrb[0].mxu0
      %v1405 = vadd.f32 0.0, %v1404
      %v1406 = vpop.f32.mrb[0].mxu0
      %1407 = vmatprep.mubr.f32.mxu0 0.0
      %1408 = vmatmul.mubr.f32.gmra.mrb[0].mxu0 %v1255
      %v1409 = vpop.f32.mrb[0].mxu0
      %v1410 = vadd.f32 0.0, %v1409
      %v1411 = vpop.f32.mrb[0].mxu0
      %1412 = vmatprep.mubr.f32.mxu0 0.0
      %1413 = vmatmul.mubr.f32.gmra.mrb[0].mxu0 %v1257
      %v1414 = vpop.f32.mrb[0].mxu0
      %v1415 = vadd.f32 0.0, %v1414
      %v1416 = vpop.f32.mrb[0].mxu0
      %1417 = vmatprep.mubr.f32.mxu0 0.0
      %1418 = vmatmul.mubr.f32.gmra.mrb[0].mxu0 %v1259
      %v1419 = vpop.f32.mrb[0].mxu0
      %v1420 = vadd.f32 0.0, %v1419
      %v1421 = vpop.f32.mrb[0].mxu0
      %1422 = vmatprep.mubr.f32.mxu0 0.0
      %1423 = vmatmul.mubr.f32.gmra.mrb[0].mxu0 %v1261
      %v1424 = vpop.f32.mrb[0].mxu0
      %v1425 = vadd.f32 0.0, %v1424
      %v1426 = vpop.f32.mrb[0].mxu0
      %1427 = vmatprep.mubr.f32.mxu0 0.0
      %1428 = vmatmul.mubr.f32.gmra.mrb[0].mxu0 %v1263
      %v1429 = vpop.f32.mrb[0].mxu0
      %v1430 = vadd.f32 0.0, %v1429
      %v1431 = vpop.f32.mrb[0].mxu0
      %1432 = vmatprep.mubr.f32.mxu0 0.0
      %1433 = vmatmul.mubr.f32.gmra.mrb[0].mxu0 %v1265
      %v1434 = vpop.f32.mrb[0].mxu0
      %v1435 = vadd.f32 0.0, %v1434
      %v1436 = vpop.f32.mrb[0].mxu0
      %1437 = vmatprep.mubr.f32.mxu0 0.0
      %1438 = vmatmul.mubr.f32.gmra.mrb[0].mxu0 %v1267
      %v1439 = vpop.f32.mrb[0].mxu0
      %v1440 = vadd.f32 0.0, %v1439
      %v1441 = vpop.f32.mrb[0].mxu0
      %1442 = vmatprep.mubr.f32.mxu0 0.0
      %1443 = vmatmul.mubr.f32.gmra.mrb[0].mxu0 %v1269
      %v1444 = vpop.f32.mrb[0].mxu0
      %v1445 = vadd.f32 0.0, %v1444
      %v1446 = vpop.f32.mrb[0].mxu0
      %1447 = vmatprep.mubr.f32.mxu0 0.0
      %1448 = vmatmul.mubr.f32.gmra.mrb[0].mxu0 %v1271
      %v1449 = vpop.f32.mrb[0].mxu0
      %v1450 = vadd.f32 0.0, %v1449
      %v1451 = vpop.f32.mrb[0].mxu0
      %1452 = vmatprep.mubr.f32.mxu0 0.0
      %1453 = vmatmul.mubr.f32.gmra.mrb[0].mxu0 %v1273
      %v1454 = vpop.f32.mrb[0].mxu0
      %v1455 = vadd.f32 0.0, %v1454
      %v1456 = vpop.f32.mrb[0].mxu0
      %1457 = vmatprep.mubr.f32.mxu0 0.0
      %1458 = vmatmul.mubr.f32.gmra.mrb[0].mxu0 %v1275
      %v1459 = vpop.f32.mrb[0].mxu0
      %v1460 = vadd.f32 0.0, %v1459
      %v1461 = vpop.f32.mrb[0].mxu0
      %1462 = vmatprep.mubr.f32.mxu0 0.0
      %1463 = vmatmul.mubr.f32.gmra.mrb[0].mxu0 %v1277
      %v1464 = vpop.f32.mrb[0].mxu0
      %v1465 = vadd.f32 0.0, %v1464
      %v1466 = vpop.f32.mrb[0].mxu0
      %1467 = vmatprep.mubr.f32.mxu0 0.0
      %1468 = vmatmul.mubr.f32.gmra.mrb[0].mxu0 %v1279
      %v1469 = vpop.f32.mrb[0].mxu0
      %v1470 = vadd.f32 0.0, %v1469
      %v1471 = vpop.f32.mrb[0].mxu0
      %1472 = vmatprep.mubr.f32.mxu0 0.0
      %1473 = vmatmul.mubr.f32.gmra.mrb[0].mxu0 %v1281
      %v1474 = vpop.f32.mrb[0].mxu0
      %v1475 = vadd.f32 0.0, %v1474
      %v1476 = vpop.f32.mrb[0].mxu0
      %1477 = vmatprep.mubr.f32.mxu0 0.0
      %1478 = vmatmul.mubr.f32.gmra.mrb[0].mxu0 %v1283
      %v1479 = vpop.f32.mrb[0].mxu0
      %v1480 = vadd.f32 0.0, %v1479
      %v1481 = vpop.f32.mrb[0].mxu0
      %1482 = vmatprep.mubr.f32.mxu0 0.0
      %1483 = vmatmul.mubr.f32.gmra.mrb[0].mxu0 %v1285
      %v1484 = vpop.f32.mrb[0].mxu0
      %v1485 = vadd.f32 0.0, %v1484
      %v1486 = vpop.f32.mrb[0].mxu0
      %1487 = vmatprep.mubr.f32.mxu0 0.0
      %1488 = vmatmul.mubr.f32.gmra.mrb[0].mxu0 %v1287
      %v1489 = vpop.f32.mrb[0].mxu0
      %v1490 = vadd.f32 0.0, %v1489
      %v1491 = vpop.f32.mrb[0].mxu0
      %1492 = vmatprep.mubr.f32.mxu0 0.0
      %1493 = vmatmul.mubr.f32.gmra.mrb[0].mxu0 %v1289
      %v1494 = vpop.f32.mrb[0].mxu0
      %v1495 = vadd.f32 0.0, %v1494
      %v1496 = vpop.f32.mrb[0].mxu0
      %1497 = vmatprep.mubr.f32.mxu0 0.0
      %1498 = vmatmul.mubr.f32.gmra.mrb[0].mxu0 %v1291
      %v1499 = vpop.f32.mrb[0].mxu0
      %v1500 = vadd.f32 0.0, %v1499
      %v1501 = vpop.f32.mrb[0].mxu0
      %1502 = vmatprep.mubr.f32.mxu0 0.0
      %1503 = vmatmul.mubr.f32.gmra.mrb[0].mxu0 %v1293
      %v1504 = vpop.f32.mrb[0].mxu0
      %v1505 = vadd.f32 0.0, %v1504
      %v1506 = vpop.f32.mrb[0].mxu0
      %1507 = vmatprep.mubr.f32.mxu0 0.0
      %1508 = vmatmul.mubr.f32.gmra.mrb[0].mxu0 %v1295
      %v1509 = vpop.f32.mrb[0].mxu0
      %v1510 = vadd.f32 0.0, %v1509
      %v1511 = vpop.f32.mrb[0].mxu0
      %1512 = vmatprep.mubr.f32.mxu0 0.0
      %1513 = vmatmul.mubr.f32.gmra.mrb[0].mxu0 %v1297
      %v1514 = vpop.f32.mrb[0].mxu0
      %v1515 = vadd.f32 0.0, %v1514
      %v1516 = vpop.f32.mrb[0].mxu0
      %1517 = vmatprep.mubr.f32.mxu0 0.0
      %1518 = vmatmul.mubr.f32.gmra.mrb[0].mxu0 %v1299
      %v1519 = vpop.f32.mrb[0].mxu0
      %v1520 = vadd.f32 0.0, %v1519
      %v1521 = vpop.f32.mrb[0].mxu0
      %1522 = vmatprep.mubr.f32.mxu0 0.0
      %1523 = vmatmul.mubr.f32.gmra.mrb[0].mxu0 %v1301
      %v1524 = vpop.f32.mrb[0].mxu0
      %v1525 = vadd.f32 0.0, %v1524
      %v1526 = vpop.f32.mrb[0].mxu0
      %1527 = vmatprep.mubr.f32.mxu0 0.0
      %1528 = vmatmul.mubr.f32.gmra.mrb[0].mxu0 %v1303
      %v1529 = vpop.f32.mrb[0].mxu0
      %v1530 = vadd.f32 0.0, %v1529
      %v1531 = vpop.f32.mrb[0].mxu0
      %1532 = vdwg.mxu0
      %v1533 = vadd.f32 %v1141, %v1375
      %v1534 = vadd.f32 %v1142, %v1380
      %v1535 = vadd.f32 %v1143, %v1385
      %v1536 = vadd.f32 %v1144, %v1390
      %v1537 = vadd.f32 %v1145, %v1395
      %v1538 = vadd.f32 %v1146, %v1400
      %v1539 = vadd.f32 %v1147, %v1405
      %v1540 = vadd.f32 %v1148, %v1410
      %v1541 = vadd.f32 %v1149, %v1415
      %v1542 = vadd.f32 %v1150, %v1420
      %v1543 = vadd.f32 %v1151, %v1425
      %v1544 = vadd.f32 %v1152, %v1430
      %v1545 = vadd.f32 %v1153, %v1435
      %v1546 = vadd.f32 %v1154, %v1440
      %v1547 = vadd.f32 %v1155, %v1445
      %v1548 = vadd.f32 %v1156, %v1450
      %v1549 = vadd.f32 %v1157, %v1455
      %v1550 = vadd.f32 %v1158, %v1460
      %v1551 = vadd.f32 %v1159, %v1465
      %v1552 = vadd.f32 %v1160, %v1470
      %v1553 = vadd.f32 %v1161, %v1475
      %v1554 = vadd.f32 %v1162, %v1480
      %v1555 = vadd.f32 %v1163, %v1485
      %v1556 = vadd.f32 %v1164, %v1490
      %v1557 = vadd.f32 %v1165, %v1495
      %v1558 = vadd.f32 %v1166, %v1500
      %v1559 = vadd.f32 %v1167, %v1505
      %v1560 = vadd.f32 %v1168, %v1510
      %v1561 = vadd.f32 %v1169, %v1515
      %v1562 = vadd.f32 %v1170, %v1520
      %v1563 = vadd.f32 %v1171, %v1525
      %v1564 = vadd.f32 %v1172, %v1530
      %1565 = vst [vmem:[#allocation2] sm:$0xff] %v1533
      %1566 = vst [vmem:[#allocation2 + $0x8] sm:$0xff] %v1534
      %1567 = vst [vmem:[#allocation2 + $0x10] sm:$0xff] %v1535
      %1568 = vst [vmem:[#allocation2 + $0x18] sm:$0xff] %v1536
      %1569 = vst [vmem:[#allocation2 + $0x20] sm:$0xff] %v1537
      %1570 = vst [vmem:[#allocation2 + $0x28] sm:$0xff] %v1538
      %1571 = vst [vmem:[#allocation2 + $0x30] sm:$0xff] %v1539
      %1572 = vst [vmem:[#allocation2 + $0x38] sm:$0xff] %v1540
      %1573 = vst [vmem:[#allocation2 + $0x40] sm:$0xff] %v1541
      %1574 = vst [vmem:[#allocation2 + $0x48] sm:$0xff] %v1542
      %1575 = vst [vmem:[#allocation2 + $0x50] sm:$0xff] %v1543
      %1576 = vst [vmem:[#allocation2 + $0x58] sm:$0xff] %v1544
      %1577 = vst [vmem:[#allocation2 + $0x60] sm:$0xff] %v1545
      %1578 = vst [vmem:[#allocation2 + $0x68] sm:$0xff] %v1546
      %1579 = vst [vmem:[#allocation2 + $0x70] sm:$0xff] %v1547
      %1580 = vst [vmem:[#allocation2 + $0x78] sm:$0xff] %v1548
      %1581 = vst [vmem:[#allocation2 + $0x80] sm:$0xff] %v1549
      %1582 = vst [vmem:[#allocation2 + $0x88] sm:$0xff] %v1550
      %1583 = vst [vmem:[#allocation2 + $0x90] sm:$0xff] %v1551
      %1584 = vst [vmem:[#allocation2 + $0x98] sm:$0xff] %v1552
      %1585 = vst [vmem:[#allocation2 + $0xa0] sm:$0xff] %v1553
      %1586 = vst [vmem:[#allocation2 + $0xa8] sm:$0xff] %v1554
      %1587 = vst [vmem:[#allocation2 + $0xb0] sm:$0xff] %v1555
      %1588 = vst [vmem:[#allocation2 + $0xb8] sm:$0xff] %v1556
      %1589 = vst [vmem:[#allocation2 + $0xc0] sm:$0xff] %v1557
      %1590 = vst [vmem:[#allocation2 + $0xc8] sm:$0xff] %v1558
      %1591 = vst [vmem:[#allocation2 + $0xd0] sm:$0xff] %v1559
      %1592 = vst [vmem:[#allocation2 + $0xd8] sm:$0xff] %v1560
      %1593 = vst [vmem:[#allocation2 + $0xe0] sm:$0xff] %v1561
      %1594 = vst [vmem:[#allocation2 + $0xe8] sm:$0xff] %v1562
      %1595 = vst [vmem:[#allocation2 + $0xf0] sm:$0xff] %v1563
      %1596 = vst [vmem:[#allocation2 + $0xf8] sm:$0xff] %v1564
      %s1597 = sadd.s32 %s194, 24
      %s1598 = scalar_lea.vmem %s183, %s1597
      %v1599 = vld [vmem:[%s1598] sm:$0xff]
      %v1600 = vld [vmem:[%s1598 + $0x8] sm:$0xff]
      %v1601 = vld [vmem:[%s1598 + $0x10] sm:$0xff]
      %v1602 = vld [vmem:[%s1598 + $0x18] sm:$0xff]
      %v1603 = vld [vmem:[%s1598 + $0x20] sm:$0xff]
      %v1604 = vld [vmem:[%s1598 + $0x28] sm:$0xff]
      %v1605 = vld [vmem:[%s1598 + $0x30] sm:$0xff]
      %v1606 = vld [vmem:[%s1598 + $0x38] sm:$0xff]
      %v1607 = vld [vmem:[%s1598 + $0x40] sm:$0xff]
      %v1608 = vld [vmem:[%s1598 + $0x48] sm:$0xff]
      %v1609 = vld [vmem:[%s1598 + $0x50] sm:$0xff]
      %v1610 = vld [vmem:[%s1598 + $0x58] sm:$0xff]
      %v1611 = vld [vmem:[%s1598 + $0x60] sm:$0xff]
      %v1612 = vld [vmem:[%s1598 + $0x68] sm:$0xff]
      %v1613 = vld [vmem:[%s1598 + $0x70] sm:$0xff]
      %v1614 = vld [vmem:[%s1598 + $0x78] sm:$0xff]
      %v1615 = vld [vmem:[%s1598 + $0x80] sm:$0xff]
      %v1616 = vld [vmem:[%s1598 + $0x88] sm:$0xff]
      %v1617 = vld [vmem:[%s1598 + $0x90] sm:$0xff]
      %v1618 = vld [vmem:[%s1598 + $0x98] sm:$0xff]
      %v1619 = vld [vmem:[%s1598 + $0xa0] sm:$0xff]
      %v1620 = vld [vmem:[%s1598 + $0xa8] sm:$0xff]
      %v1621 = vld [vmem:[%s1598 + $0xb0] sm:$0xff]
      %v1622 = vld [vmem:[%s1598 + $0xb8] sm:$0xff]
      %v1623 = vld [vmem:[%s1598 + $0xc0] sm:$0xff]
      %v1624 = vld [vmem:[%s1598 + $0xc8] sm:$0xff]
      %v1625 = vld [vmem:[%s1598 + $0xd0] sm:$0xff]
      %v1626 = vld [vmem:[%s1598 + $0xd8] sm:$0xff]
      %v1627 = vld [vmem:[%s1598 + $0xe0] sm:$0xff]
      %v1628 = vld [vmem:[%s1598 + $0xe8] sm:$0xff]
      %v1629 = vld [vmem:[%s1598 + $0xf0] sm:$0xff]
      %v1630 = vld [vmem:[%s1598 + $0xf8] sm:$0xff]
      %v1631 = vld [vmem:[%s1598 + $0x100] sm:$0x3]
      %v1632 = vld [vmem:[#allocation2] sm:$0xff]
      %v1633 = vld [vmem:[#allocation2 + $0x8] sm:$0xff]
      %v1634 = vld [vmem:[#allocation2 + $0x10] sm:$0xff]
      %v1635 = vld [vmem:[#allocation2 + $0x18] sm:$0xff]
      %v1636 = vld [vmem:[#allocation2 + $0x20] sm:$0xff]
      %v1637 = vld [vmem:[#allocation2 + $0x28] sm:$0xff]
      %v1638 = vld [vmem:[#allocation2 + $0x30] sm:$0xff]
      %v1639 = vld [vmem:[#allocation2 + $0x38] sm:$0xff]
      %v1640 = vld [vmem:[#allocation2 + $0x40] sm:$0xff]
      %v1641 = vld [vmem:[#allocation2 + $0x48] sm:$0xff]
      %v1642 = vld [vmem:[#allocation2 + $0x50] sm:$0xff]
      %v1643 = vld [vmem:[#allocation2 + $0x58] sm:$0xff]
      %v1644 = vld [vmem:[#allocation2 + $0x60] sm:$0xff]
      %v1645 = vld [vmem:[#allocation2 + $0x68] sm:$0xff]
      %v1646 = vld [vmem:[#allocation2 + $0x70] sm:$0xff]
      %v1647 = vld [vmem:[#allocation2 + $0x78] sm:$0xff]
      %v1648 = vld [vmem:[#allocation2 + $0x80] sm:$0xff]
      %v1649 = vld [vmem:[#allocation2 + $0x88] sm:$0xff]
      %v1650 = vld [vmem:[#allocation2 + $0x90] sm:$0xff]
      %v1651 = vld [vmem:[#allocation2 + $0x98] sm:$0xff]
      %v1652 = vld [vmem:[#allocation2 + $0xa0] sm:$0xff]
      %v1653 = vld [vmem:[#allocation2 + $0xa8] sm:$0xff]
      %v1654 = vld [vmem:[#allocation2 + $0xb0] sm:$0xff]
      %v1655 = vld [vmem:[#allocation2 + $0xb8] sm:$0xff]
      %v1656 = vld [vmem:[#allocation2 + $0xc0] sm:$0xff]
      %v1657 = vld [vmem:[#allocation2 + $0xc8] sm:$0xff]
      %v1658 = vld [vmem:[#allocation2 + $0xd0] sm:$0xff]
      %v1659 = vld [vmem:[#allocation2 + $0xd8] sm:$0xff]
      %v1660 = vld [vmem:[#allocation2 + $0xe0] sm:$0xff]
      %v1661 = vld [vmem:[#allocation2 + $0xe8] sm:$0xff]
      %v1662 = vld [vmem:[#allocation2 + $0xf0] sm:$0xff]
      %v1663 = vld [vmem:[#allocation2 + $0xf8] sm:$0xff]
      %s1664 = scalar_lea.vmem %s1, 12
      %v1665 = vld [vmem:[%s1664] sm:$0xf]
      %v1667 = vsel %vm294, %v1599, 0
      %v1670 = vsel %vm294, %v1600, 0
      %v1673 = vsel %vm294, %v1601, 0
      %v1676 = vsel %vm294, %v1602, 0
      %v1679 = vsel %vm294, %v1603, 0
      %v1682 = vsel %vm294, %v1604, 0
      %v1685 = vsel %vm294, %v1605, 0
      %v1688 = vsel %vm294, %v1606, 0
      %v1691 = vsel %vm294, %v1607, 0
      %v1694 = vsel %vm294, %v1608, 0
      %v1697 = vsel %vm294, %v1609, 0
      %v1700 = vsel %vm294, %v1610, 0
      %v1703 = vsel %vm294, %v1611, 0
      %v1706 = vsel %vm294, %v1612, 0
      %v1709 = vsel %vm294, %v1613, 0
      %v1712 = vsel %vm294, %v1614, 0
      %v1715 = vsel %vm294, %v1615, 0
      %v1718 = vsel %vm294, %v1616, 0
      %v1721 = vsel %vm294, %v1617, 0
      %v1724 = vsel %vm294, %v1618, 0
      %v1727 = vsel %vm294, %v1619, 0
      %v1730 = vsel %vm294, %v1620, 0
      %v1733 = vsel %vm294, %v1621, 0
      %v1736 = vsel %vm294, %v1622, 0
      %v1739 = vsel %vm294, %v1623, 0
      %v1742 = vsel %vm294, %v1624, 0
      %v1745 = vsel %vm294, %v1625, 0
      %v1748 = vsel %vm294, %v1626, 0
      %v1751 = vsel %vm294, %v1627, 0
      %v1754 = vsel %vm294, %v1628, 0
      %v1757 = vsel %vm294, %v1629, 0
      %v1760 = vsel %vm294, %v1630, 0
      %v1763 = vsel %vm391, %v1665, 0
      %1765 = vmatprep.subr.mxu0 0.0
      %1766 = vmatpush1.msra.mxu0 %v1763
      %1767 = vmatprep.subr.mxu0 0.0
      %1768 = vmatpush1.msra.mxu0 0.0
      %1769 = vmatprep.subr.mxu0 0.0
      %1770 = vmatpush1.msra.mxu0 0.0
      %1771 = vmatprep.subr.mxu0 0.0
      %1772 = vmatpush1.msra.mxu0 0.0
      %1773 = vmatprep.subr.mxu0 0.0
      %1774 = vmatpush1.msra.mxu0 0.0
      %1775 = vmatprep.subr.mxu0 0.0
      %1776 = vmatpush1.msra.mxu0 0.0
      %1777 = vmatprep.subr.mxu0 0.0
      %1778 = vmatpush1.msra.mxu0 0.0
      %1779 = vmatprep.subr.mxu0 0.0
      %1780 = vmatpush1.msra.mxu0 0.0
      %1781 = vmatprep.subr.mxu0 0.0
      %1782 = vmatpush1.msra.mxu0 0.0
      %1783 = vmatprep.subr.mxu0 0.0
      %1784 = vmatpush1.msra.mxu0 0.0
      %1785 = vmatprep.subr.mxu0 0.0
      %1786 = vmatpush1.msra.mxu0 0.0
      %1787 = vmatprep.subr.mxu0 0.0
      %1788 = vmatpush1.msra.mxu0 0.0
      %1789 = vmatprep.subr.mxu0 0.0
      %1790 = vmatpush1.msra.mxu0 0.0
      %1791 = vmatprep.subr.mxu0 0.0
      %1792 = vmatpush1.msra.mxu0 0.0
      %1793 = vmatprep.subr.mxu0 0.0
      %1794 = vmatpush1.msra.mxu0 0.0
      %1795 = vmatprep.subr.mxu0 0.0
      %1796 = vmatpush1.msra.mxu0 0.0
      %1797 = vmatprep.subr.mxu0 0.0
      %1798 = vmatpush1.msra.mxu0 0.0
      %1799 = vmatprep.subr.mxu0 0.0
      %1800 = vmatpush1.msra.mxu0 0.0
      %1801 = vmatprep.subr.mxu0 0.0
      %1802 = vmatpush1.msra.mxu0 0.0
      %1803 = vmatprep.subr.mxu0 0.0
      %1804 = vmatpush1.msra.mxu0 0.0
      %1805 = vmatprep.subr.mxu0 0.0
      %1806 = vmatpush1.msra.mxu0 0.0
      %1807 = vmatprep.subr.mxu0 0.0
      %1808 = vmatpush1.msra.mxu0 0.0
      %1809 = vmatprep.subr.mxu0 0.0
      %1810 = vmatpush1.msra.mxu0 0.0
      %1811 = vmatprep.subr.mxu0 0.0
      %1812 = vmatpush1.msra.mxu0 0.0
      %1813 = vmatprep.subr.mxu0 0.0
      %1814 = vmatpush1.msra.mxu0 0.0
      %1815 = vmatprep.subr.mxu0 0.0
      %1816 = vmatpush1.msra.mxu0 0.0
      %1817 = vmatprep.subr.mxu0 0.0
      %1818 = vmatpush1.msra.mxu0 0.0
      %1819 = vmatprep.subr.mxu0 0.0
      %1820 = vmatpush1.msra.mxu0 0.0
      %1821 = vmatprep.subr.mxu0 0.0
      %1822 = vmatpush1.msra.mxu0 0.0
      %1823 = vmatprep.subr.mxu0 0.0
      %1824 = vmatpush1.msra.mxu0 0.0
      %1825 = vmatprep.subr.mxu0 0.0
      %1826 = vmatpush1.msra.mxu0 0.0
      %1827 = vmatprep.subr.mxu0 0.0
      %1828 = vmatpush1.msra.mxu0 0.0
      %1829 = vmatprep.mubr.f32.mxu0 0.0
      %1830 = vmatmul.mubr.f32.gmra.mrb[0].mxu0 %v1667
      %v1831 = vpop.f32.mrb[0].mxu0
      %v1832 = vadd.f32 0.0, %v1831
      %v1833 = vpop.f32.mrb[0].mxu0
      %1834 = vmatprep.mubr.f32.mxu0 0.0
      %1835 = vmatmul.mubr.f32.gmra.mrb[0].mxu0 %v1670
      %v1836 = vpop.f32.mrb[0].mxu0
      %v1837 = vadd.f32 0.0, %v1836
      %v1838 = vpop.f32.mrb[0].mxu0
      %1839 = vmatprep.mubr.f32.mxu0 0.0
      %1840 = vmatmul.mubr.f32.gmra.mrb[0].mxu0 %v1673
      %v1841 = vpop.f32.mrb[0].mxu0
      %v1842 = vadd.f32 0.0, %v1841
      %v1843 = vpop.f32.mrb[0].mxu0
      %1844 = vmatprep.mubr.f32.mxu0 0.0
      %1845 = vmatmul.mubr.f32.gmra.mrb[0].mxu0 %v1676
      %v1846 = vpop.f32.mrb[0].mxu0
      %v1847 = vadd.f32 0.0, %v1846
      %v1848 = vpop.f32.mrb[0].mxu0
      %1849 = vmatprep.mubr.f32.mxu0 0.0
      %1850 = vmatmul.mubr.f32.gmra.mrb[0].mxu0 %v1679
      %v1851 = vpop.f32.mrb[0].mxu0
      %v1852 = vadd.f32 0.0, %v1851
      %v1853 = vpop.f32.mrb[0].mxu0
      %1854 = vmatprep.mubr.f32.mxu0 0.0
      %1855 = vmatmul.mubr.f32.gmra.mrb[0].mxu0 %v1682
      %v1856 = vpop.f32.mrb[0].mxu0
      %v1857 = vadd.f32 0.0, %v1856
      %v1858 = vpop.f32.mrb[0].mxu0
      %1859 = vmatprep.mubr.f32.mxu0 0.0
      %1860 = vmatmul.mubr.f32.gmra.mrb[0].mxu0 %v1685
      %v1861 = vpop.f32.mrb[0].mxu0
      %v1862 = vadd.f32 0.0, %v1861
      %v1863 = vpop.f32.mrb[0].mxu0
      %1864 = vmatprep.mubr.f32.mxu0 0.0
      %1865 = vmatmul.mubr.f32.gmra.mrb[0].mxu0 %v1688
      %v1866 = vpop.f32.mrb[0].mxu0
      %v1867 = vadd.f32 0.0, %v1866
      %v1868 = vpop.f32.mrb[0].mxu0
      %1869 = vmatprep.mubr.f32.mxu0 0.0
      %1870 = vmatmul.mubr.f32.gmra.mrb[0].mxu0 %v1691
      %v1871 = vpop.f32.mrb[0].mxu0
      %v1872 = vadd.f32 0.0, %v1871
      %v1873 = vpop.f32.mrb[0].mxu0
      %1874 = vmatprep.mubr.f32.mxu0 0.0
      %1875 = vmatmul.mubr.f32.gmra.mrb[0].mxu0 %v1694
      %v1876 = vpop.f32.mrb[0].mxu0
      %v1877 = vadd.f32 0.0, %v1876
      %v1878 = vpop.f32.mrb[0].mxu0
      %1879 = vmatprep.mubr.f32.mxu0 0.0
      %1880 = vmatmul.mubr.f32.gmra.mrb[0].mxu0 %v1697
      %v1881 = vpop.f32.mrb[0].mxu0
      %v1882 = vadd.f32 0.0, %v1881
      %v1883 = vpop.f32.mrb[0].mxu0
      %1884 = vmatprep.mubr.f32.mxu0 0.0
      %1885 = vmatmul.mubr.f32.gmra.mrb[0].mxu0 %v1700
      %v1886 = vpop.f32.mrb[0].mxu0
      %v1887 = vadd.f32 0.0, %v1886
      %v1888 = vpop.f32.mrb[0].mxu0
      %1889 = vmatprep.mubr.f32.mxu0 0.0
      %1890 = vmatmul.mubr.f32.gmra.mrb[0].mxu0 %v1703
      %v1891 = vpop.f32.mrb[0].mxu0
      %v1892 = vadd.f32 0.0, %v1891
      %v1893 = vpop.f32.mrb[0].mxu0
      %1894 = vmatprep.mubr.f32.mxu0 0.0
      %1895 = vmatmul.mubr.f32.gmra.mrb[0].mxu0 %v1706
      %v1896 = vpop.f32.mrb[0].mxu0
      %v1897 = vadd.f32 0.0, %v1896
      %v1898 = vpop.f32.mrb[0].mxu0
      %1899 = vmatprep.mubr.f32.mxu0 0.0
      %1900 = vmatmul.mubr.f32.gmra.mrb[0].mxu0 %v1709
      %v1901 = vpop.f32.mrb[0].mxu0
      %v1902 = vadd.f32 0.0, %v1901
      %v1903 = vpop.f32.mrb[0].mxu0
      %1904 = vmatprep.mubr.f32.mxu0 0.0
      %1905 = vmatmul.mubr.f32.gmra.mrb[0].mxu0 %v1712
      %v1906 = vpop.f32.mrb[0].mxu0
      %v1907 = vadd.f32 0.0, %v1906
      %v1908 = vpop.f32.mrb[0].mxu0
      %1909 = vmatprep.mubr.f32.mxu0 0.0
      %1910 = vmatmul.mubr.f32.gmra.mrb[0].mxu0 %v1715
      %v1911 = vpop.f32.mrb[0].mxu0
      %v1912 = vadd.f32 0.0, %v1911
      %v1913 = vpop.f32.mrb[0].mxu0
      %1914 = vmatprep.mubr.f32.mxu0 0.0
      %1915 = vmatmul.mubr.f32.gmra.mrb[0].mxu0 %v1718
      %v1916 = vpop.f32.mrb[0].mxu0
      %v1917 = vadd.f32 0.0, %v1916
      %v1918 = vpop.f32.mrb[0].mxu0
      %1919 = vmatprep.mubr.f32.mxu0 0.0
      %1920 = vmatmul.mubr.f32.gmra.mrb[0].mxu0 %v1721
      %v1921 = vpop.f32.mrb[0].mxu0
      %v1922 = vadd.f32 0.0, %v1921
      %v1923 = vpop.f32.mrb[0].mxu0
      %1924 = vmatprep.mubr.f32.mxu0 0.0
      %1925 = vmatmul.mubr.f32.gmra.mrb[0].mxu0 %v1724
      %v1926 = vpop.f32.mrb[0].mxu0
      %v1927 = vadd.f32 0.0, %v1926
      %v1928 = vpop.f32.mrb[0].mxu0
      %1929 = vmatprep.mubr.f32.mxu0 0.0
      %1930 = vmatmul.mubr.f32.gmra.mrb[0].mxu0 %v1727
      %v1931 = vpop.f32.mrb[0].mxu0
      %v1932 = vadd.f32 0.0, %v1931
      %v1933 = vpop.f32.mrb[0].mxu0
      %1934 = vmatprep.mubr.f32.mxu0 0.0
      %1935 = vmatmul.mubr.f32.gmra.mrb[0].mxu0 %v1730
      %v1936 = vpop.f32.mrb[0].mxu0
      %v1937 = vadd.f32 0.0, %v1936
      %v1938 = vpop.f32.mrb[0].mxu0
      %1939 = vmatprep.mubr.f32.mxu0 0.0
      %1940 = vmatmul.mubr.f32.gmra.mrb[0].mxu0 %v1733
      %v1941 = vpop.f32.mrb[0].mxu0
      %v1942 = vadd.f32 0.0, %v1941
      %v1943 = vpop.f32.mrb[0].mxu0
      %1944 = vmatprep.mubr.f32.mxu0 0.0
      %1945 = vmatmul.mubr.f32.gmra.mrb[0].mxu0 %v1736
      %v1946 = vpop.f32.mrb[0].mxu0
      %v1947 = vadd.f32 0.0, %v1946
      %v1948 = vpop.f32.mrb[0].mxu0
      %1949 = vmatprep.mubr.f32.mxu0 0.0
      %1950 = vmatmul.mubr.f32.gmra.mrb[0].mxu0 %v1739
      %v1951 = vpop.f32.mrb[0].mxu0
      %v1952 = vadd.f32 0.0, %v1951
      %v1953 = vpop.f32.mrb[0].mxu0
      %1954 = vmatprep.mubr.f32.mxu0 0.0
      %1955 = vmatmul.mubr.f32.gmra.mrb[0].mxu0 %v1742
      %v1956 = vpop.f32.mrb[0].mxu0
      %v1957 = vadd.f32 0.0, %v1956
      %v1958 = vpop.f32.mrb[0].mxu0
      %1959 = vmatprep.mubr.f32.mxu0 0.0
      %1960 = vmatmul.mubr.f32.gmra.mrb[0].mxu0 %v1745
      %v1961 = vpop.f32.mrb[0].mxu0
      %v1962 = vadd.f32 0.0, %v1961
      %v1963 = vpop.f32.mrb[0].mxu0
      %1964 = vmatprep.mubr.f32.mxu0 0.0
      %1965 = vmatmul.mubr.f32.gmra.mrb[0].mxu0 %v1748
      %v1966 = vpop.f32.mrb[0].mxu0
      %v1967 = vadd.f32 0.0, %v1966
      %v1968 = vpop.f32.mrb[0].mxu0
      %1969 = vmatprep.mubr.f32.mxu0 0.0
      %1970 = vmatmul.mubr.f32.gmra.mrb[0].mxu0 %v1751
      %v1971 = vpop.f32.mrb[0].mxu0
      %v1972 = vadd.f32 0.0, %v1971
      %v1973 = vpop.f32.mrb[0].mxu0
      %1974 = vmatprep.mubr.f32.mxu0 0.0
      %1975 = vmatmul.mubr.f32.gmra.mrb[0].mxu0 %v1754
      %v1976 = vpop.f32.mrb[0].mxu0
      %v1977 = vadd.f32 0.0, %v1976
      %v1978 = vpop.f32.mrb[0].mxu0
      %1979 = vmatprep.mubr.f32.mxu0 0.0
      %1980 = vmatmul.mubr.f32.gmra.mrb[0].mxu0 %v1757
      %v1981 = vpop.f32.mrb[0].mxu0
      %v1982 = vadd.f32 0.0, %v1981
      %v1983 = vpop.f32.mrb[0].mxu0
      %1984 = vmatprep.mubr.f32.mxu0 0.0
      %1985 = vmatmul.mubr.f32.gmra.mrb[0].mxu0 %v1760
      %v1986 = vpop.f32.mrb[0].mxu0
      %v1987 = vadd.f32 0.0, %v1986
      %v1988 = vpop.f32.mrb[0].mxu0
      %1989 = vdwg.mxu0
      %v1990 = vadd.f32 %v1632, %v1832
      %v1991 = vadd.f32 %v1633, %v1837
      %v1992 = vadd.f32 %v1634, %v1842
      %v1993 = vadd.f32 %v1635, %v1847
      %v1994 = vadd.f32 %v1636, %v1852
      %v1995 = vadd.f32 %v1637, %v1857
      %v1996 = vadd.f32 %v1638, %v1862
      %v1997 = vadd.f32 %v1639, %v1867
      %v1998 = vadd.f32 %v1640, %v1872
      %v1999 = vadd.f32 %v1641, %v1877
      %v2000 = vadd.f32 %v1642, %v1882
      %v2001 = vadd.f32 %v1643, %v1887
      %v2002 = vadd.f32 %v1644, %v1892
      %v2003 = vadd.f32 %v1645, %v1897
      %v2004 = vadd.f32 %v1646, %v1902
      %v2005 = vadd.f32 %v1647, %v1907
      %v2006 = vadd.f32 %v1648, %v1912
      %v2007 = vadd.f32 %v1649, %v1917
      %v2008 = vadd.f32 %v1650, %v1922
      %v2009 = vadd.f32 %v1651, %v1927
      %v2010 = vadd.f32 %v1652, %v1932
      %v2011 = vadd.f32 %v1653, %v1937
      %v2012 = vadd.f32 %v1654, %v1942
      %v2013 = vadd.f32 %v1655, %v1947
      %v2014 = vadd.f32 %v1656, %v1952
      %v2015 = vadd.f32 %v1657, %v1957
      %v2016 = vadd.f32 %v1658, %v1962
      %v2017 = vadd.f32 %v1659, %v1967
      %v2018 = vadd.f32 %v1660, %v1972
      %v2019 = vadd.f32 %v1661, %v1977
      %v2020 = vadd.f32 %v1662, %v1982
      %v2021 = vadd.f32 %v1663, %v1987
      %2022 = vst [vmem:[#allocation2] sm:$0xff] %v1990
      %2023 = vst [vmem:[#allocation2 + $0x8] sm:$0xff] %v1991
      %2024 = vst [vmem:[#allocation2 + $0x10] sm:$0xff] %v1992
      %2025 = vst [vmem:[#allocation2 + $0x18] sm:$0xff] %v1993
      %2026 = vst [vmem:[#allocation2 + $0x20] sm:$0xff] %v1994
      %2027 = vst [vmem:[#allocation2 + $0x28] sm:$0xff] %v1995
      %2028 = vst [vmem:[#allocation2 + $0x30] sm:$0xff] %v1996
      %2029 = vst [vmem:[#allocation2 + $0x38] sm:$0xff] %v1997
      %2030 = vst [vmem:[#allocation2 + $0x40] sm:$0xff] %v1998
      %2031 = vst [vmem:[#allocation2 + $0x48] sm:$0xff] %v1999
      %2032 = vst [vmem:[#allocation2 + $0x50] sm:$0xff] %v2000
      %2033 = vst [vmem:[#allocation2 + $0x58] sm:$0xff] %v2001
      %2034 = vst [vmem:[#allocation2 + $0x60] sm:$0xff] %v2002
      %2035 = vst [vmem:[#allocation2 + $0x68] sm:$0xff] %v2003
      %2036 = vst [vmem:[#allocation2 + $0x70] sm:$0xff] %v2004
      %2037 = vst [vmem:[#allocation2 + $0x78] sm:$0xff] %v2005
      %2038 = vst [vmem:[#allocation2 + $0x80] sm:$0xff] %v2006
      %2039 = vst [vmem:[#allocation2 + $0x88] sm:$0xff] %v2007
      %2040 = vst [vmem:[#allocation2 + $0x90] sm:$0xff] %v2008
      %2041 = vst [vmem:[#allocation2 + $0x98] sm:$0xff] %v2009
      %2042 = vst [vmem:[#allocation2 + $0xa0] sm:$0xff] %v2010
      %2043 = vst [vmem:[#allocation2 + $0xa8] sm:$0xff] %v2011
      %2044 = vst [vmem:[#allocation2 + $0xb0] sm:$0xff] %v2012
      %2045 = vst [vmem:[#allocation2 + $0xb8] sm:$0xff] %v2013
      %2046 = vst [vmem:[#allocation2 + $0xc0] sm:$0xff] %v2014
      %2047 = vst [vmem:[#allocation2 + $0xc8] sm:$0xff] %v2015
      %2048 = vst [vmem:[#allocation2 + $0xd0] sm:$0xff] %v2016
      %2049 = vst [vmem:[#allocation2 + $0xd8] sm:$0xff] %v2017
      %2050 = vst [vmem:[#allocation2 + $0xe0] sm:$0xff] %v2018
      %2051 = vst [vmem:[#allocation2 + $0xe8] sm:$0xff] %v2019
      %2052 = vst [vmem:[#allocation2 + $0xf0] sm:$0xff] %v2020
      %2053 = vst [vmem:[#allocation2 + $0xf8] sm:$0xff] %v2021
      %v2054 = vld [vmem:[#allocation2] sm:$0xff]
      %v2055 = vld [vmem:[#allocation2 + $0x8] sm:$0xff]
      %v2056 = vld [vmem:[#allocation2 + $0x10] sm:$0xff]
      %v2057 = vld [vmem:[#allocation2 + $0x18] sm:$0xff]
      %v2058 = vld [vmem:[#allocation2 + $0x20] sm:$0xff]
      %v2059 = vld [vmem:[#allocation2 + $0x28] sm:$0xff]
      %v2060 = vld [vmem:[#allocation2 + $0x30] sm:$0xff]
      %v2061 = vld [vmem:[#allocation2 + $0x38] sm:$0xff]
      %v2062 = vld [vmem:[#allocation2 + $0x40] sm:$0xff]
      %v2063 = vld [vmem:[#allocation2 + $0x48] sm:$0xff]
      %v2064 = vld [vmem:[#allocation2 + $0x50] sm:$0xff]
      %v2065 = vld [vmem:[#allocation2 + $0x58] sm:$0xff]
      %v2066 = vld [vmem:[#allocation2 + $0x60] sm:$0xff]
      %v2067 = vld [vmem:[#allocation2 + $0x68] sm:$0xff]
      %v2068 = vld [vmem:[#allocation2 + $0x70] sm:$0xff]
      %v2069 = vld [vmem:[#allocation2 + $0x78] sm:$0xff]
      %v2070 = vld [vmem:[#allocation2 + $0x80] sm:$0xff]
      %v2071 = vld [vmem:[#allocation2 + $0x88] sm:$0xff]
      %v2072 = vld [vmem:[#allocation2 + $0x90] sm:$0xff]
      %v2073 = vld [vmem:[#allocation2 + $0x98] sm:$0xff]
      %v2074 = vld [vmem:[#allocation2 + $0xa0] sm:$0xff]
      %v2075 = vld [vmem:[#allocation2 + $0xa8] sm:$0xff]
      %v2076 = vld [vmem:[#allocation2 + $0xb0] sm:$0xff]
      %v2077 = vld [vmem:[#allocation2 + $0xb8] sm:$0xff]
      %v2078 = vld [vmem:[#allocation2 + $0xc0] sm:$0xff]
      %v2079 = vld [vmem:[#allocation2 + $0xc8] sm:$0xff]
      %v2080 = vld [vmem:[#allocation2 + $0xd0] sm:$0xff]
      %v2081 = vld [vmem:[#allocation2 + $0xd8] sm:$0xff]
      %v2082 = vld [vmem:[#allocation2 + $0xe0] sm:$0xff]
      %v2083 = vld [vmem:[#allocation2 + $0xe8] sm:$0xff]
      %v2084 = vld [vmem:[#allocation2 + $0xf0] sm:$0xff]
      %v2085 = vld [vmem:[#allocation2 + $0xf8] sm:$0xff]
      %s2086 = scalar_lea.vmem %s1, 16
      %v2087 = vld [vmem:[%s2086] sm:$0xf]
      %v2089 = vrot.slane %v1599, 1
      %v2090 = vrot.slane %v1600, 1
      %v2091 = vsel %vm719, %v2089, %v2090
      %v2092 = vrot.slane %v1601, 1
      %v2093 = vsel %vm719, %v2090, %v2092
      %v2094 = vrot.slane %v1602, 1
      %v2095 = vsel %vm719, %v2092, %v2094
      %v2096 = vrot.slane %v1603, 1
      %v2097 = vsel %vm719, %v2094, %v2096
      %v2098 = vrot.slane %v1604, 1
      %v2099 = vsel %vm719, %v2096, %v2098
      %v2100 = vrot.slane %v1605, 1
      %v2101 = vsel %vm719, %v2098, %v2100
      %v2102 = vrot.slane %v1606, 1
      %v2103 = vsel %vm719, %v2100, %v2102
      %v2104 = vrot.slane %v1607, 1
      %v2105 = vsel %vm719, %v2102, %v2104
      %v2106 = vrot.slane %v1608, 1
      %v2107 = vsel %vm719, %v2104, %v2106
      %v2108 = vrot.slane %v1609, 1
      %v2109 = vsel %vm719, %v2106, %v2108
      %v2110 = vrot.slane %v1610, 1
      %v2111 = vsel %vm719, %v2108, %v2110
      %v2112 = vrot.slane %v1611, 1
      %v2113 = vsel %vm719, %v2110, %v2112
      %v2114 = vrot.slane %v1612, 1
      %v2115 = vsel %vm719, %v2112, %v2114
      %v2116 = vrot.slane %v1613, 1
      %v2117 = vsel %vm719, %v2114, %v2116
      %v2118 = vrot.slane %v1614, 1
      %v2119 = vsel %vm719, %v2116, %v2118
      %v2120 = vrot.slane %v1615, 1
      %v2121 = vsel %vm719, %v2118, %v2120
      %v2122 = vrot.slane %v1616, 1
      %v2123 = vsel %vm719, %v2120, %v2122
      %v2124 = vrot.slane %v1617, 1
      %v2125 = vsel %vm719, %v2122, %v2124
      %v2126 = vrot.slane %v1618, 1
      %v2127 = vsel %vm719, %v2124, %v2126
      %v2128 = vrot.slane %v1619, 1
      %v2129 = vsel %vm719, %v2126, %v2128
      %v2130 = vrot.slane %v1620, 1
      %v2131 = vsel %vm719, %v2128, %v2130
      %v2132 = vrot.slane %v1621, 1
      %v2133 = vsel %vm719, %v2130, %v2132
      %v2134 = vrot.slane %v1622, 1
      %v2135 = vsel %vm719, %v2132, %v2134
      %v2136 = vrot.slane %v1623, 1
      %v2137 = vsel %vm719, %v2134, %v2136
      %v2138 = vrot.slane %v1624, 1
      %v2139 = vsel %vm719, %v2136, %v2138
      %v2140 = vrot.slane %v1625, 1
      %v2141 = vsel %vm719, %v2138, %v2140
      %v2142 = vrot.slane %v1626, 1
      %v2143 = vsel %vm719, %v2140, %v2142
      %v2144 = vrot.slane %v1627, 1
      %v2145 = vsel %vm719, %v2142, %v2144
      %v2146 = vrot.slane %v1628, 1
      %v2147 = vsel %vm719, %v2144, %v2146
      %v2148 = vrot.slane %v1629, 1
      %v2149 = vsel %vm719, %v2146, %v2148
      %v2150 = vrot.slane %v1630, 1
      %v2151 = vsel %vm719, %v2148, %v2150
      %v2152 = vrot.slane %v1631, 1
      %v2153 = vsel %vm719, %v2150, %v2152
      %v2154 = vsel %vm294, %v2091, 0
      %v2156 = vsel %vm294, %v2093, 0
      %v2158 = vsel %vm294, %v2095, 0
      %v2160 = vsel %vm294, %v2097, 0
      %v2162 = vsel %vm294, %v2099, 0
      %v2164 = vsel %vm294, %v2101, 0
      %v2166 = vsel %vm294, %v2103, 0
      %v2168 = vsel %vm294, %v2105, 0
      %v2170 = vsel %vm294, %v2107, 0
      %v2172 = vsel %vm294, %v2109, 0
      %v2174 = vsel %vm294, %v2111, 0
      %v2176 = vsel %vm294, %v2113, 0
      %v2178 = vsel %vm294, %v2115, 0
      %v2180 = vsel %vm294, %v2117, 0
      %v2182 = vsel %vm294, %v2119, 0
      %v2184 = vsel %vm294, %v2121, 0
      %v2186 = vsel %vm294, %v2123, 0
      %v2188 = vsel %vm294, %v2125, 0
      %v2190 = vsel %vm294, %v2127, 0
      %v2192 = vsel %vm294, %v2129, 0
      %v2194 = vsel %vm294, %v2131, 0
      %v2196 = vsel %vm294, %v2133, 0
      %v2198 = vsel %vm294, %v2135, 0
      %v2200 = vsel %vm294, %v2137, 0
      %v2202 = vsel %vm294, %v2139, 0
      %v2204 = vsel %vm294, %v2141, 0
      %v2206 = vsel %vm294, %v2143, 0
      %v2208 = vsel %vm294, %v2145, 0
      %v2210 = vsel %vm294, %v2147, 0
      %v2212 = vsel %vm294, %v2149, 0
      %v2214 = vsel %vm294, %v2151, 0
      %v2216 = vsel %vm294, %v2153, 0
      %v2219 = vsel %vm391, %v2087, 0
      %2221 = vmatprep.subr.mxu0 0.0
      %2222 = vmatpush1.msra.mxu0 %v2219
      %2223 = vmatprep.subr.mxu0 0.0
      %2224 = vmatpush1.msra.mxu0 0.0
      %2225 = vmatprep.subr.mxu0 0.0
      %2226 = vmatpush1.msra.mxu0 0.0
      %2227 = vmatprep.subr.mxu0 0.0
      %2228 = vmatpush1.msra.mxu0 0.0
      %2229 = vmatprep.subr.mxu0 0.0
      %2230 = vmatpush1.msra.mxu0 0.0
      %2231 = vmatprep.subr.mxu0 0.0
      %2232 = vmatpush1.msra.mxu0 0.0
      %2233 = vmatprep.subr.mxu0 0.0
      %2234 = vmatpush1.msra.mxu0 0.0
      %2235 = vmatprep.subr.mxu0 0.0
      %2236 = vmatpush1.msra.mxu0 0.0
      %2237 = vmatprep.subr.mxu0 0.0
      %2238 = vmatpush1.msra.mxu0 0.0
      %2239 = vmatprep.subr.mxu0 0.0
      %2240 = vmatpush1.msra.mxu0 0.0
      %2241 = vmatprep.subr.mxu0 0.0
      %2242 = vmatpush1.msra.mxu0 0.0
      %2243 = vmatprep.subr.mxu0 0.0
      %2244 = vmatpush1.msra.mxu0 0.0
      %2245 = vmatprep.subr.mxu0 0.0
      %2246 = vmatpush1.msra.mxu0 0.0
      %2247 = vmatprep.subr.mxu0 0.0
      %2248 = vmatpush1.msra.mxu0 0.0
      %2249 = vmatprep.subr.mxu0 0.0
      %2250 = vmatpush1.msra.mxu0 0.0
      %2251 = vmatprep.subr.mxu0 0.0
      %2252 = vmatpush1.msra.mxu0 0.0
      %2253 = vmatprep.subr.mxu0 0.0
      %2254 = vmatpush1.msra.mxu0 0.0
      %2255 = vmatprep.subr.mxu0 0.0
      %2256 = vmatpush1.msra.mxu0 0.0
      %2257 = vmatprep.subr.mxu0 0.0
      %2258 = vmatpush1.msra.mxu0 0.0
      %2259 = vmatprep.subr.mxu0 0.0
      %2260 = vmatpush1.msra.mxu0 0.0
      %2261 = vmatprep.subr.mxu0 0.0
      %2262 = vmatpush1.msra.mxu0 0.0
      %2263 = vmatprep.subr.mxu0 0.0
      %2264 = vmatpush1.msra.mxu0 0.0
      %2265 = vmatprep.subr.mxu0 0.0
      %2266 = vmatpush1.msra.mxu0 0.0
      %2267 = vmatprep.subr.mxu0 0.0
      %2268 = vmatpush1.msra.mxu0 0.0
      %2269 = vmatprep.subr.mxu0 0.0
      %2270 = vmatpush1.msra.mxu0 0.0
      %2271 = vmatprep.subr.mxu0 0.0
      %2272 = vmatpush1.msra.mxu0 0.0
      %2273 = vmatprep.subr.mxu0 0.0
      %2274 = vmatpush1.msra.mxu0 0.0
      %2275 = vmatprep.subr.mxu0 0.0
      %2276 = vmatpush1.msra.mxu0 0.0
      %2277 = vmatprep.subr.mxu0 0.0
      %2278 = vmatpush1.msra.mxu0 0.0
      %2279 = vmatprep.subr.mxu0 0.0
      %2280 = vmatpush1.msra.mxu0 0.0
      %2281 = vmatprep.subr.mxu0 0.0
      %2282 = vmatpush1.msra.mxu0 0.0
      %2283 = vmatprep.subr.mxu0 0.0
      %2284 = vmatpush1.msra.mxu0 0.0
      %2285 = vmatprep.mubr.f32.mxu0 0.0
      %2286 = vmatmul.mubr.f32.gmra.mrb[0].mxu0 %v2154
      %v2287 = vpop.f32.mrb[0].mxu0
      %v2288 = vadd.f32 0.0, %v2287
      %v2289 = vpop.f32.mrb[0].mxu0
      %2290 = vmatprep.mubr.f32.mxu0 0.0
      %2291 = vmatmul.mubr.f32.gmra.mrb[0].mxu0 %v2156
      %v2292 = vpop.f32.mrb[0].mxu0
      %v2293 = vadd.f32 0.0, %v2292
      %v2294 = vpop.f32.mrb[0].mxu0
      %2295 = vmatprep.mubr.f32.mxu0 0.0
      %2296 = vmatmul.mubr.f32.gmra.mrb[0].mxu0 %v2158
      %v2297 = vpop.f32.mrb[0].mxu0
      %v2298 = vadd.f32 0.0, %v2297
      %v2299 = vpop.f32.mrb[0].mxu0
      %2300 = vmatprep.mubr.f32.mxu0 0.0
      %2301 = vmatmul.mubr.f32.gmra.mrb[0].mxu0 %v2160
      %v2302 = vpop.f32.mrb[0].mxu0
      %v2303 = vadd.f32 0.0, %v2302
      %v2304 = vpop.f32.mrb[0].mxu0
      %2305 = vmatprep.mubr.f32.mxu0 0.0
      %2306 = vmatmul.mubr.f32.gmra.mrb[0].mxu0 %v2162
      %v2307 = vpop.f32.mrb[0].mxu0
      %v2308 = vadd.f32 0.0, %v2307
      %v2309 = vpop.f32.mrb[0].mxu0
      %2310 = vmatprep.mubr.f32.mxu0 0.0
      %2311 = vmatmul.mubr.f32.gmra.mrb[0].mxu0 %v2164
      %v2312 = vpop.f32.mrb[0].mxu0
      %v2313 = vadd.f32 0.0, %v2312
      %v2314 = vpop.f32.mrb[0].mxu0
      %2315 = vmatprep.mubr.f32.mxu0 0.0
      %2316 = vmatmul.mubr.f32.gmra.mrb[0].mxu0 %v2166
      %v2317 = vpop.f32.mrb[0].mxu0
      %v2318 = vadd.f32 0.0, %v2317
      %v2319 = vpop.f32.mrb[0].mxu0
      %2320 = vmatprep.mubr.f32.mxu0 0.0
      %2321 = vmatmul.mubr.f32.gmra.mrb[0].mxu0 %v2168
      %v2322 = vpop.f32.mrb[0].mxu0
      %v2323 = vadd.f32 0.0, %v2322
      %v2324 = vpop.f32.mrb[0].mxu0
      %2325 = vmatprep.mubr.f32.mxu0 0.0
      %2326 = vmatmul.mubr.f32.gmra.mrb[0].mxu0 %v2170
      %v2327 = vpop.f32.mrb[0].mxu0
      %v2328 = vadd.f32 0.0, %v2327
      %v2329 = vpop.f32.mrb[0].mxu0
      %2330 = vmatprep.mubr.f32.mxu0 0.0
      %2331 = vmatmul.mubr.f32.gmra.mrb[0].mxu0 %v2172
      %v2332 = vpop.f32.mrb[0].mxu0
      %v2333 = vadd.f32 0.0, %v2332
      %v2334 = vpop.f32.mrb[0].mxu0
      %2335 = vmatprep.mubr.f32.mxu0 0.0
      %2336 = vmatmul.mubr.f32.gmra.mrb[0].mxu0 %v2174
      %v2337 = vpop.f32.mrb[0].mxu0
      %v2338 = vadd.f32 0.0, %v2337
      %v2339 = vpop.f32.mrb[0].mxu0
      %2340 = vmatprep.mubr.f32.mxu0 0.0
      %2341 = vmatmul.mubr.f32.gmra.mrb[0].mxu0 %v2176
      %v2342 = vpop.f32.mrb[0].mxu0
      %v2343 = vadd.f32 0.0, %v2342
      %v2344 = vpop.f32.mrb[0].mxu0
      %2345 = vmatprep.mubr.f32.mxu0 0.0
      %2346 = vmatmul.mubr.f32.gmra.mrb[0].mxu0 %v2178
      %v2347 = vpop.f32.mrb[0].mxu0
      %v2348 = vadd.f32 0.0, %v2347
      %v2349 = vpop.f32.mrb[0].mxu0
      %2350 = vmatprep.mubr.f32.mxu0 0.0
      %2351 = vmatmul.mubr.f32.gmra.mrb[0].mxu0 %v2180
      %v2352 = vpop.f32.mrb[0].mxu0
      %v2353 = vadd.f32 0.0, %v2352
      %v2354 = vpop.f32.mrb[0].mxu0
      %2355 = vmatprep.mubr.f32.mxu0 0.0
      %2356 = vmatmul.mubr.f32.gmra.mrb[0].mxu0 %v2182
      %v2357 = vpop.f32.mrb[0].mxu0
      %v2358 = vadd.f32 0.0, %v2357
      %v2359 = vpop.f32.mrb[0].mxu0
      %2360 = vmatprep.mubr.f32.mxu0 0.0
      %2361 = vmatmul.mubr.f32.gmra.mrb[0].mxu0 %v2184
      %v2362 = vpop.f32.mrb[0].mxu0
      %v2363 = vadd.f32 0.0, %v2362
      %v2364 = vpop.f32.mrb[0].mxu0
      %2365 = vmatprep.mubr.f32.mxu0 0.0
      %2366 = vmatmul.mubr.f32.gmra.mrb[0].mxu0 %v2186
      %v2367 = vpop.f32.mrb[0].mxu0
      %v2368 = vadd.f32 0.0, %v2367
      %v2369 = vpop.f32.mrb[0].mxu0
      %2370 = vmatprep.mubr.f32.mxu0 0.0
      %2371 = vmatmul.mubr.f32.gmra.mrb[0].mxu0 %v2188
      %v2372 = vpop.f32.mrb[0].mxu0
      %v2373 = vadd.f32 0.0, %v2372
      %v2374 = vpop.f32.mrb[0].mxu0
      %2375 = vmatprep.mubr.f32.mxu0 0.0
      %2376 = vmatmul.mubr.f32.gmra.mrb[0].mxu0 %v2190
      %v2377 = vpop.f32.mrb[0].mxu0
      %v2378 = vadd.f32 0.0, %v2377
      %v2379 = vpop.f32.mrb[0].mxu0
      %2380 = vmatprep.mubr.f32.mxu0 0.0
      %2381 = vmatmul.mubr.f32.gmra.mrb[0].mxu0 %v2192
      %v2382 = vpop.f32.mrb[0].mxu0
      %v2383 = vadd.f32 0.0, %v2382
      %v2384 = vpop.f32.mrb[0].mxu0
      %2385 = vmatprep.mubr.f32.mxu0 0.0
      %2386 = vmatmul.mubr.f32.gmra.mrb[0].mxu0 %v2194
      %v2387 = vpop.f32.mrb[0].mxu0
      %v2388 = vadd.f32 0.0, %v2387
      %v2389 = vpop.f32.mrb[0].mxu0
      %2390 = vmatprep.mubr.f32.mxu0 0.0
      %2391 = vmatmul.mubr.f32.gmra.mrb[0].mxu0 %v2196
      %v2392 = vpop.f32.mrb[0].mxu0
      %v2393 = vadd.f32 0.0, %v2392
      %v2394 = vpop.f32.mrb[0].mxu0
      %2395 = vmatprep.mubr.f32.mxu0 0.0
      %2396 = vmatmul.mubr.f32.gmra.mrb[0].mxu0 %v2198
      %v2397 = vpop.f32.mrb[0].mxu0
      %v2398 = vadd.f32 0.0, %v2397
      %v2399 = vpop.f32.mrb[0].mxu0
      %2400 = vmatprep.mubr.f32.mxu0 0.0
      %2401 = vmatmul.mubr.f32.gmra.mrb[0].mxu0 %v2200
      %v2402 = vpop.f32.mrb[0].mxu0
      %v2403 = vadd.f32 0.0, %v2402
      %v2404 = vpop.f32.mrb[0].mxu0
      %2405 = vmatprep.mubr.f32.mxu0 0.0
      %2406 = vmatmul.mubr.f32.gmra.mrb[0].mxu0 %v2202
      %v2407 = vpop.f32.mrb[0].mxu0
      %v2408 = vadd.f32 0.0, %v2407
      %v2409 = vpop.f32.mrb[0].mxu0
      %2410 = vmatprep.mubr.f32.mxu0 0.0
      %2411 = vmatmul.mubr.f32.gmra.mrb[0].mxu0 %v2204
      %v2412 = vpop.f32.mrb[0].mxu0
      %v2413 = vadd.f32 0.0, %v2412
      %v2414 = vpop.f32.mrb[0].mxu0
      %2415 = vmatprep.mubr.f32.mxu0 0.0
      %2416 = vmatmul.mubr.f32.gmra.mrb[0].mxu0 %v2206
      %v2417 = vpop.f32.mrb[0].mxu0
      %v2418 = vadd.f32 0.0, %v2417
      %v2419 = vpop.f32.mrb[0].mxu0
      %2420 = vmatprep.mubr.f32.mxu0 0.0
      %2421 = vmatmul.mubr.f32.gmra.mrb[0].mxu0 %v2208
      %v2422 = vpop.f32.mrb[0].mxu0
      %v2423 = vadd.f32 0.0, %v2422
      %v2424 = vpop.f32.mrb[0].mxu0
      %2425 = vmatprep.mubr.f32.mxu0 0.0
      %2426 = vmatmul.mubr.f32.gmra.mrb[0].mxu0 %v2210
      %v2427 = vpop.f32.mrb[0].mxu0
      %v2428 = vadd.f32 0.0, %v2427
      %v2429 = vpop.f32.mrb[0].mxu0
      %2430 = vmatprep.mubr.f32.mxu0 0.0
      %2431 = vmatmul.mubr.f32.gmra.mrb[0].mxu0 %v2212
      %v2432 = vpop.f32.mrb[0].mxu0
      %v2433 = vadd.f32 0.0, %v2432
      %v2434 = vpop.f32.mrb[0].mxu0
      %2435 = vmatprep.mubr.f32.mxu0 0.0
      %2436 = vmatmul.mubr.f32.gmra.mrb[0].mxu0 %v2214
      %v2437 = vpop.f32.mrb[0].mxu0
      %v2438 = vadd.f32 0.0, %v2437
      %v2439 = vpop.f32.mrb[0].mxu0
      %2440 = vmatprep.mubr.f32.mxu0 0.0
      %2441 = vmatmul.mubr.f32.gmra.mrb[0].mxu0 %v2216
      %v2442 = vpop.f32.mrb[0].mxu0
      %v2443 = vadd.f32 0.0, %v2442
      %v2444 = vpop.f32.mrb[0].mxu0
      %2445 = vdwg.mxu0
      %v2446 = vadd.f32 %v2054, %v2288
      %v2447 = vadd.f32 %v2055, %v2293
      %v2448 = vadd.f32 %v2056, %v2298
      %v2449 = vadd.f32 %v2057, %v2303
      %v2450 = vadd.f32 %v2058, %v2308
      %v2451 = vadd.f32 %v2059, %v2313
      %v2452 = vadd.f32 %v2060, %v2318
      %v2453 = vadd.f32 %v2061, %v2323
      %v2454 = vadd.f32 %v2062, %v2328
      %v2455 = vadd.f32 %v2063, %v2333
      %v2456 = vadd.f32 %v2064, %v2338
      %v2457 = vadd.f32 %v2065, %v2343
      %v2458 = vadd.f32 %v2066, %v2348
      %v2459 = vadd.f32 %v2067, %v2353
      %v2460 = vadd.f32 %v2068, %v2358
      %v2461 = vadd.f32 %v2069, %v2363
      %v2462 = vadd.f32 %v2070, %v2368
      %v2463 = vadd.f32 %v2071, %v2373
      %v2464 = vadd.f32 %v2072, %v2378
      %v2465 = vadd.f32 %v2073, %v2383
      %v2466 = vadd.f32 %v2074, %v2388
      %v2467 = vadd.f32 %v2075, %v2393
      %v2468 = vadd.f32 %v2076, %v2398
      %v2469 = vadd.f32 %v2077, %v2403
      %v2470 = vadd.f32 %v2078, %v2408
      %v2471 = vadd.f32 %v2079, %v2413
      %v2472 = vadd.f32 %v2080, %v2418
      %v2473 = vadd.f32 %v2081, %v2423
      %v2474 = vadd.f32 %v2082, %v2428
      %v2475 = vadd.f32 %v2083, %v2433
      %v2476 = vadd.f32 %v2084, %v2438
      %v2477 = vadd.f32 %v2085, %v2443
      %2478 = vst [vmem:[#allocation2] sm:$0xff] %v2446
      %2479 = vst [vmem:[#allocation2 + $0x8] sm:$0xff] %v2447
      %2480 = vst [vmem:[#allocation2 + $0x10] sm:$0xff] %v2448
      %2481 = vst [vmem:[#allocation2 + $0x18] sm:$0xff] %v2449
      %2482 = vst [vmem:[#allocation2 + $0x20] sm:$0xff] %v2450
      %2483 = vst [vmem:[#allocation2 + $0x28] sm:$0xff] %v2451
      %2484 = vst [vmem:[#allocation2 + $0x30] sm:$0xff] %v2452
      %2485 = vst [vmem:[#allocation2 + $0x38] sm:$0xff] %v2453
      %2486 = vst [vmem:[#allocation2 + $0x40] sm:$0xff] %v2454
      %2487 = vst [vmem:[#allocation2 + $0x48] sm:$0xff] %v2455
      %2488 = vst [vmem:[#allocation2 + $0x50] sm:$0xff] %v2456
      %2489 = vst [vmem:[#allocation2 + $0x58] sm:$0xff] %v2457
      %2490 = vst [vmem:[#allocation2 + $0x60] sm:$0xff] %v2458
      %2491 = vst [vmem:[#allocation2 + $0x68] sm:$0xff] %v2459
      %2492 = vst [vmem:[#allocation2 + $0x70] sm:$0xff] %v2460
      %2493 = vst [vmem:[#allocation2 + $0x78] sm:$0xff] %v2461
      %2494 = vst [vmem:[#allocation2 + $0x80] sm:$0xff] %v2462
      %2495 = vst [vmem:[#allocation2 + $0x88] sm:$0xff] %v2463
      %2496 = vst [vmem:[#allocation2 + $0x90] sm:$0xff] %v2464
      %2497 = vst [vmem:[#allocation2 + $0x98] sm:$0xff] %v2465
      %2498 = vst [vmem:[#allocation2 + $0xa0] sm:$0xff] %v2466
      %2499 = vst [vmem:[#allocation2 + $0xa8] sm:$0xff] %v2467
      %2500 = vst [vmem:[#allocation2 + $0xb0] sm:$0xff] %v2468
      %2501 = vst [vmem:[#allocation2 + $0xb8] sm:$0xff] %v2469
      %2502 = vst [vmem:[#allocation2 + $0xc0] sm:$0xff] %v2470
      %2503 = vst [vmem:[#allocation2 + $0xc8] sm:$0xff] %v2471
      %2504 = vst [vmem:[#allocation2 + $0xd0] sm:$0xff] %v2472
      %2505 = vst [vmem:[#allocation2 + $0xd8] sm:$0xff] %v2473
      %2506 = vst [vmem:[#allocation2 + $0xe0] sm:$0xff] %v2474
      %2507 = vst [vmem:[#allocation2 + $0xe8] sm:$0xff] %v2475
      %2508 = vst [vmem:[#allocation2 + $0xf0] sm:$0xff] %v2476
      %2509 = vst [vmem:[#allocation2 + $0xf8] sm:$0xff] %v2477
      %v2510 = vld [vmem:[#allocation2] sm:$0xff]
      %v2511 = vld [vmem:[#allocation2 + $0x8] sm:$0xff]
      %v2512 = vld [vmem:[#allocation2 + $0x10] sm:$0xff]
      %v2513 = vld [vmem:[#allocation2 + $0x18] sm:$0xff]
      %v2514 = vld [vmem:[#allocation2 + $0x20] sm:$0xff]
      %v2515 = vld [vmem:[#allocation2 + $0x28] sm:$0xff]
      %v2516 = vld [vmem:[#allocation2 + $0x30] sm:$0xff]
      %v2517 = vld [vmem:[#allocation2 + $0x38] sm:$0xff]
      %v2518 = vld [vmem:[#allocation2 + $0x40] sm:$0xff]
      %v2519 = vld [vmem:[#allocation2 + $0x48] sm:$0xff]
      %v2520 = vld [vmem:[#allocation2 + $0x50] sm:$0xff]
      %v2521 = vld [vmem:[#allocation2 + $0x58] sm:$0xff]
      %v2522 = vld [vmem:[#allocation2 + $0x60] sm:$0xff]
      %v2523 = vld [vmem:[#allocation2 + $0x68] sm:$0xff]
      %v2524 = vld [vmem:[#allocation2 + $0x70] sm:$0xff]
      %v2525 = vld [vmem:[#allocation2 + $0x78] sm:$0xff]
      %v2526 = vld [vmem:[#allocation2 + $0x80] sm:$0xff]
      %v2527 = vld [vmem:[#allocation2 + $0x88] sm:$0xff]
      %v2528 = vld [vmem:[#allocation2 + $0x90] sm:$0xff]
      %v2529 = vld [vmem:[#allocation2 + $0x98] sm:$0xff]
      %v2530 = vld [vmem:[#allocation2 + $0xa0] sm:$0xff]
      %v2531 = vld [vmem:[#allocation2 + $0xa8] sm:$0xff]
      %v2532 = vld [vmem:[#allocation2 + $0xb0] sm:$0xff]
      %v2533 = vld [vmem:[#allocation2 + $0xb8] sm:$0xff]
      %v2534 = vld [vmem:[#allocation2 + $0xc0] sm:$0xff]
      %v2535 = vld [vmem:[#allocation2 + $0xc8] sm:$0xff]
      %v2536 = vld [vmem:[#allocation2 + $0xd0] sm:$0xff]
      %v2537 = vld [vmem:[#allocation2 + $0xd8] sm:$0xff]
      %v2538 = vld [vmem:[#allocation2 + $0xe0] sm:$0xff]
      %v2539 = vld [vmem:[#allocation2 + $0xe8] sm:$0xff]
      %v2540 = vld [vmem:[#allocation2 + $0xf0] sm:$0xff]
      %v2541 = vld [vmem:[#allocation2 + $0xf8] sm:$0xff]
      %s2542 = scalar_lea.vmem %s1, 20
      %v2543 = vld [vmem:[%s2542] sm:$0xf]
      %v2544 = vrot.slane %v1599, 2
      %v2545 = vrot.slane %v1600, 2
      %v2546 = vsel %vm1175, %v2544, %v2545
      %v2547 = vrot.slane %v1601, 2
      %v2548 = vsel %vm1175, %v2545, %v2547
      %v2549 = vrot.slane %v1602, 2
      %v2550 = vsel %vm1175, %v2547, %v2549
      %v2551 = vrot.slane %v1603, 2
      %v2552 = vsel %vm1175, %v2549, %v2551
      %v2553 = vrot.slane %v1604, 2
      %v2554 = vsel %vm1175, %v2551, %v2553
      %v2555 = vrot.slane %v1605, 2
      %v2556 = vsel %vm1175, %v2553, %v2555
      %v2557 = vrot.slane %v1606, 2
      %v2558 = vsel %vm1175, %v2555, %v2557
      %v2559 = vrot.slane %v1607, 2
      %v2560 = vsel %vm1175, %v2557, %v2559
      %v2561 = vrot.slane %v1608, 2
      %v2562 = vsel %vm1175, %v2559, %v2561
      %v2563 = vrot.slane %v1609, 2
      %v2564 = vsel %vm1175, %v2561, %v2563
      %v2565 = vrot.slane %v1610, 2
      %v2566 = vsel %vm1175, %v2563, %v2565
      %v2567 = vrot.slane %v1611, 2
      %v2568 = vsel %vm1175, %v2565, %v2567
      %v2569 = vrot.slane %v1612, 2
      %v2570 = vsel %vm1175, %v2567, %v2569
      %v2571 = vrot.slane %v1613, 2
      %v2572 = vsel %vm1175, %v2569, %v2571
      %v2573 = vrot.slane %v1614, 2
      %v2574 = vsel %vm1175, %v2571, %v2573
      %v2575 = vrot.slane %v1615, 2
      %v2576 = vsel %vm1175, %v2573, %v2575
      %v2577 = vrot.slane %v1616, 2
      %v2578 = vsel %vm1175, %v2575, %v2577
      %v2579 = vrot.slane %v1617, 2
      %v2580 = vsel %vm1175, %v2577, %v2579
      %v2581 = vrot.slane %v1618, 2
      %v2582 = vsel %vm1175, %v2579, %v2581
      %v2583 = vrot.slane %v1619, 2
      %v2584 = vsel %vm1175, %v2581, %v2583
      %v2585 = vrot.slane %v1620, 2
      %v2586 = vsel %vm1175, %v2583, %v2585
      %v2587 = vrot.slane %v1621, 2
      %v2588 = vsel %vm1175, %v2585, %v2587
      %v2589 = vrot.slane %v1622, 2
      %v2590 = vsel %vm1175, %v2587, %v2589
      %v2591 = vrot.slane %v1623, 2
      %v2592 = vsel %vm1175, %v2589, %v2591
      %v2593 = vrot.slane %v1624, 2
      %v2594 = vsel %vm1175, %v2591, %v2593
      %v2595 = vrot.slane %v1625, 2
      %v2596 = vsel %vm1175, %v2593, %v2595
      %v2597 = vrot.slane %v1626, 2
      %v2598 = vsel %vm1175, %v2595, %v2597
      %v2599 = vrot.slane %v1627, 2
      %v2600 = vsel %vm1175, %v2597, %v2599
      %v2601 = vrot.slane %v1628, 2
      %v2602 = vsel %vm1175, %v2599, %v2601
      %v2603 = vrot.slane %v1629, 2
      %v2604 = vsel %vm1175, %v2601, %v2603
      %v2605 = vrot.slane %v1630, 2
      %v2606 = vsel %vm1175, %v2603, %v2605
      %v2607 = vrot.slane %v1631, 2
      %v2608 = vsel %vm1175, %v2605, %v2607
      %v2609 = vsel %vm294, %v2546, 0
      %v2611 = vsel %vm294, %v2548, 0
      %v2613 = vsel %vm294, %v2550, 0
      %v2615 = vsel %vm294, %v2552, 0
      %v2617 = vsel %vm294, %v2554, 0
      %v2619 = vsel %vm294, %v2556, 0
      %v2621 = vsel %vm294, %v2558, 0
      %v2623 = vsel %vm294, %v2560, 0
      %v2625 = vsel %vm294, %v2562, 0
      %v2627 = vsel %vm294, %v2564, 0
      %v2629 = vsel %vm294, %v2566, 0
      %v2631 = vsel %vm294, %v2568, 0
      %v2633 = vsel %vm294, %v2570, 0
      %v2635 = vsel %vm294, %v2572, 0
      %v2637 = vsel %vm294, %v2574, 0
      %v2639 = vsel %vm294, %v2576, 0
      %v2641 = vsel %vm294, %v2578, 0
      %v2643 = vsel %vm294, %v2580, 0
      %v2645 = vsel %vm294, %v2582, 0
      %v2647 = vsel %vm294, %v2584, 0
      %v2649 = vsel %vm294, %v2586, 0
      %v2651 = vsel %vm294, %v2588, 0
      %v2653 = vsel %vm294, %v2590, 0
      %v2655 = vsel %vm294, %v2592, 0
      %v2657 = vsel %vm294, %v2594, 0
      %v2659 = vsel %vm294, %v2596, 0
      %v2661 = vsel %vm294, %v2598, 0
      %v2663 = vsel %vm294, %v2600, 0
      %v2665 = vsel %vm294, %v2602, 0
      %v2667 = vsel %vm294, %v2604, 0
      %v2669 = vsel %vm294, %v2606, 0
      %v2671 = vsel %vm294, %v2608, 0
      %v2674 = vsel %vm391, %v2543, 0
      %2676 = vmatprep.subr.mxu0 0.0
      %2677 = vmatpush1.msra.mxu0 %v2674
      %2678 = vmatprep.subr.mxu0 0.0
      %2679 = vmatpush1.msra.mxu0 0.0
      %2680 = vmatprep.subr.mxu0 0.0
      %2681 = vmatpush1.msra.mxu0 0.0
      %2682 = vmatprep.subr.mxu0 0.0
      %2683 = vmatpush1.msra.mxu0 0.0
      %2684 = vmatprep.subr.mxu0 0.0
      %2685 = vmatpush1.msra.mxu0 0.0
      %2686 = vmatprep.subr.mxu0 0.0
      %2687 = vmatpush1.msra.mxu0 0.0
      %2688 = vmatprep.subr.mxu0 0.0
      %2689 = vmatpush1.msra.mxu0 0.0
      %2690 = vmatprep.subr.mxu0 0.0
      %2691 = vmatpush1.msra.mxu0 0.0
      %2692 = vmatprep.subr.mxu0 0.0
      %2693 = vmatpush1.msra.mxu0 0.0
      %2694 = vmatprep.subr.mxu0 0.0
      %2695 = vmatpush1.msra.mxu0 0.0
      %2696 = vmatprep.subr.mxu0 0.0
      %2697 = vmatpush1.msra.mxu0 0.0
      %2698 = vmatprep.subr.mxu0 0.0
      %2699 = vmatpush1.msra.mxu0 0.0
      %2700 = vmatprep.subr.mxu0 0.0
      %2701 = vmatpush1.msra.mxu0 0.0
      %2702 = vmatprep.subr.mxu0 0.0
      %2703 = vmatpush1.msra.mxu0 0.0
      %2704 = vmatprep.subr.mxu0 0.0
      %2705 = vmatpush1.msra.mxu0 0.0
      %2706 = vmatprep.subr.mxu0 0.0
      %2707 = vmatpush1.msra.mxu0 0.0
      %2708 = vmatprep.subr.mxu0 0.0
      %2709 = vmatpush1.msra.mxu0 0.0
      %2710 = vmatprep.subr.mxu0 0.0
      %2711 = vmatpush1.msra.mxu0 0.0
      %2712 = vmatprep.subr.mxu0 0.0
      %2713 = vmatpush1.msra.mxu0 0.0
      %2714 = vmatprep.subr.mxu0 0.0
      %2715 = vmatpush1.msra.mxu0 0.0
      %2716 = vmatprep.subr.mxu0 0.0
      %2717 = vmatpush1.msra.mxu0 0.0
      %2718 = vmatprep.subr.mxu0 0.0
      %2719 = vmatpush1.msra.mxu0 0.0
      %2720 = vmatprep.subr.mxu0 0.0
      %2721 = vmatpush1.msra.mxu0 0.0
      %2722 = vmatprep.subr.mxu0 0.0
      %2723 = vmatpush1.msra.mxu0 0.0
      %2724 = vmatprep.subr.mxu0 0.0
      %2725 = vmatpush1.msra.mxu0 0.0
      %2726 = vmatprep.subr.mxu0 0.0
      %2727 = vmatpush1.msra.mxu0 0.0
      %2728 = vmatprep.subr.mxu0 0.0
      %2729 = vmatpush1.msra.mxu0 0.0
      %2730 = vmatprep.subr.mxu0 0.0
      %2731 = vmatpush1.msra.mxu0 0.0
      %2732 = vmatprep.subr.mxu0 0.0
      %2733 = vmatpush1.msra.mxu0 0.0
      %2734 = vmatprep.subr.mxu0 0.0
      %2735 = vmatpush1.msra.mxu0 0.0
      %2736 = vmatprep.subr.mxu0 0.0
      %2737 = vmatpush1.msra.mxu0 0.0
      %2738 = vmatprep.subr.mxu0 0.0
      %2739 = vmatpush1.msra.mxu0 0.0
      %2740 = vmatprep.mubr.f32.mxu0 0.0
      %2741 = vmatmul.mubr.f32.gmra.mrb[0].mxu0 %v2609
      %v2742 = vpop.f32.mrb[0].mxu0
      %v2743 = vadd.f32 0.0, %v2742
      %v2744 = vpop.f32.mrb[0].mxu0
      %2745 = vmatprep.mubr.f32.mxu0 0.0
      %2746 = vmatmul.mubr.f32.gmra.mrb[0].mxu0 %v2611
      %v2747 = vpop.f32.mrb[0].mxu0
      %v2748 = vadd.f32 0.0, %v2747
      %v2749 = vpop.f32.mrb[0].mxu0
      %2750 = vmatprep.mubr.f32.mxu0 0.0
      %2751 = vmatmul.mubr.f32.gmra.mrb[0].mxu0 %v2613
      %v2752 = vpop.f32.mrb[0].mxu0
      %v2753 = vadd.f32 0.0, %v2752
      %v2754 = vpop.f32.mrb[0].mxu0
      %2755 = vmatprep.mubr.f32.mxu0 0.0
      %2756 = vmatmul.mubr.f32.gmra.mrb[0].mxu0 %v2615
      %v2757 = vpop.f32.mrb[0].mxu0
      %v2758 = vadd.f32 0.0, %v2757
      %v2759 = vpop.f32.mrb[0].mxu0
      %2760 = vmatprep.mubr.f32.mxu0 0.0
      %2761 = vmatmul.mubr.f32.gmra.mrb[0].mxu0 %v2617
      %v2762 = vpop.f32.mrb[0].mxu0
      %v2763 = vadd.f32 0.0, %v2762
      %v2764 = vpop.f32.mrb[0].mxu0
      %2765 = vmatprep.mubr.f32.mxu0 0.0
      %2766 = vmatmul.mubr.f32.gmra.mrb[0].mxu0 %v2619
      %v2767 = vpop.f32.mrb[0].mxu0
      %v2768 = vadd.f32 0.0, %v2767
      %v2769 = vpop.f32.mrb[0].mxu0
      %2770 = vmatprep.mubr.f32.mxu0 0.0
      %2771 = vmatmul.mubr.f32.gmra.mrb[0].mxu0 %v2621
      %v2772 = vpop.f32.mrb[0].mxu0
      %v2773 = vadd.f32 0.0, %v2772
      %v2774 = vpop.f32.mrb[0].mxu0
      %2775 = vmatprep.mubr.f32.mxu0 0.0
      %2776 = vmatmul.mubr.f32.gmra.mrb[0].mxu0 %v2623
      %v2777 = vpop.f32.mrb[0].mxu0
      %v2778 = vadd.f32 0.0, %v2777
      %v2779 = vpop.f32.mrb[0].mxu0
      %2780 = vmatprep.mubr.f32.mxu0 0.0
      %2781 = vmatmul.mubr.f32.gmra.mrb[0].mxu0 %v2625
      %v2782 = vpop.f32.mrb[0].mxu0
      %v2783 = vadd.f32 0.0, %v2782
      %v2784 = vpop.f32.mrb[0].mxu0
      %2785 = vmatprep.mubr.f32.mxu0 0.0
      %2786 = vmatmul.mubr.f32.gmra.mrb[0].mxu0 %v2627
      %v2787 = vpop.f32.mrb[0].mxu0
      %v2788 = vadd.f32 0.0, %v2787
      %v2789 = vpop.f32.mrb[0].mxu0
      %2790 = vmatprep.mubr.f32.mxu0 0.0
      %2791 = vmatmul.mubr.f32.gmra.mrb[0].mxu0 %v2629
      %v2792 = vpop.f32.mrb[0].mxu0
      %v2793 = vadd.f32 0.0, %v2792
      %v2794 = vpop.f32.mrb[0].mxu0
      %2795 = vmatprep.mubr.f32.mxu0 0.0
      %2796 = vmatmul.mubr.f32.gmra.mrb[0].mxu0 %v2631
      %v2797 = vpop.f32.mrb[0].mxu0
      %v2798 = vadd.f32 0.0, %v2797
      %v2799 = vpop.f32.mrb[0].mxu0
      %2800 = vmatprep.mubr.f32.mxu0 0.0
      %2801 = vmatmul.mubr.f32.gmra.mrb[0].mxu0 %v2633
      %v2802 = vpop.f32.mrb[0].mxu0
      %v2803 = vadd.f32 0.0, %v2802
      %v2804 = vpop.f32.mrb[0].mxu0
      %2805 = vmatprep.mubr.f32.mxu0 0.0
      %2806 = vmatmul.mubr.f32.gmra.mrb[0].mxu0 %v2635
      %v2807 = vpop.f32.mrb[0].mxu0
      %v2808 = vadd.f32 0.0, %v2807
      %v2809 = vpop.f32.mrb[0].mxu0
      %2810 = vmatprep.mubr.f32.mxu0 0.0
      %2811 = vmatmul.mubr.f32.gmra.mrb[0].mxu0 %v2637
      %v2812 = vpop.f32.mrb[0].mxu0
      %v2813 = vadd.f32 0.0, %v2812
      %v2814 = vpop.f32.mrb[0].mxu0
      %2815 = vmatprep.mubr.f32.mxu0 0.0
      %2816 = vmatmul.mubr.f32.gmra.mrb[0].mxu0 %v2639
      %v2817 = vpop.f32.mrb[0].mxu0
      %v2818 = vadd.f32 0.0, %v2817
      %v2819 = vpop.f32.mrb[0].mxu0
      %2820 = vmatprep.mubr.f32.mxu0 0.0
      %2821 = vmatmul.mubr.f32.gmra.mrb[0].mxu0 %v2641
      %v2822 = vpop.f32.mrb[0].mxu0
      %v2823 = vadd.f32 0.0, %v2822
      %v2824 = vpop.f32.mrb[0].mxu0
      %2825 = vmatprep.mubr.f32.mxu0 0.0
      %2826 = vmatmul.mubr.f32.gmra.mrb[0].mxu0 %v2643
      %v2827 = vpop.f32.mrb[0].mxu0
      %v2828 = vadd.f32 0.0, %v2827
      %v2829 = vpop.f32.mrb[0].mxu0
      %2830 = vmatprep.mubr.f32.mxu0 0.0
      %2831 = vmatmul.mubr.f32.gmra.mrb[0].mxu0 %v2645
      %v2832 = vpop.f32.mrb[0].mxu0
      %v2833 = vadd.f32 0.0, %v2832
      %v2834 = vpop.f32.mrb[0].mxu0
      %2835 = vmatprep.mubr.f32.mxu0 0.0
      %2836 = vmatmul.mubr.f32.gmra.mrb[0].mxu0 %v2647
      %v2837 = vpop.f32.mrb[0].mxu0
      %v2838 = vadd.f32 0.0, %v2837
      %v2839 = vpop.f32.mrb[0].mxu0
      %2840 = vmatprep.mubr.f32.mxu0 0.0
      %2841 = vmatmul.mubr.f32.gmra.mrb[0].mxu0 %v2649
      %v2842 = vpop.f32.mrb[0].mxu0
      %v2843 = vadd.f32 0.0, %v2842
      %v2844 = vpop.f32.mrb[0].mxu0
      %2845 = vmatprep.mubr.f32.mxu0 0.0
      %2846 = vmatmul.mubr.f32.gmra.mrb[0].mxu0 %v2651
      %v2847 = vpop.f32.mrb[0].mxu0
      %v2848 = vadd.f32 0.0, %v2847
      %v2849 = vpop.f32.mrb[0].mxu0
      %2850 = vmatprep.mubr.f32.mxu0 0.0
      %2851 = vmatmul.mubr.f32.gmra.mrb[0].mxu0 %v2653
      %v2852 = vpop.f32.mrb[0].mxu0
      %v2853 = vadd.f32 0.0, %v2852
      %v2854 = vpop.f32.mrb[0].mxu0
      %2855 = vmatprep.mubr.f32.mxu0 0.0
      %2856 = vmatmul.mubr.f32.gmra.mrb[0].mxu0 %v2655
      %v2857 = vpop.f32.mrb[0].mxu0
      %v2858 = vadd.f32 0.0, %v2857
      %v2859 = vpop.f32.mrb[0].mxu0
      %2860 = vmatprep.mubr.f32.mxu0 0.0
      %2861 = vmatmul.mubr.f32.gmra.mrb[0].mxu0 %v2657
      %v2862 = vpop.f32.mrb[0].mxu0
      %v2863 = vadd.f32 0.0, %v2862
      %v2864 = vpop.f32.mrb[0].mxu0
      %2865 = vmatprep.mubr.f32.mxu0 0.0
      %2866 = vmatmul.mubr.f32.gmra.mrb[0].mxu0 %v2659
      %v2867 = vpop.f32.mrb[0].mxu0
      %v2868 = vadd.f32 0.0, %v2867
      %v2869 = vpop.f32.mrb[0].mxu0
      %2870 = vmatprep.mubr.f32.mxu0 0.0
      %2871 = vmatmul.mubr.f32.gmra.mrb[0].mxu0 %v2661
      %v2872 = vpop.f32.mrb[0].mxu0
      %v2873 = vadd.f32 0.0, %v2872
      %v2874 = vpop.f32.mrb[0].mxu0
      %2875 = vmatprep.mubr.f32.mxu0 0.0
      %2876 = vmatmul.mubr.f32.gmra.mrb[0].mxu0 %v2663
      %v2877 = vpop.f32.mrb[0].mxu0
      %v2878 = vadd.f32 0.0, %v2877
      %v2879 = vpop.f32.mrb[0].mxu0
      %2880 = vmatprep.mubr.f32.mxu0 0.0
      %2881 = vmatmul.mubr.f32.gmra.mrb[0].mxu0 %v2665
      %v2882 = vpop.f32.mrb[0].mxu0
      %v2883 = vadd.f32 0.0, %v2882
      %v2884 = vpop.f32.mrb[0].mxu0
      %2885 = vmatprep.mubr.f32.mxu0 0.0
      %2886 = vmatmul.mubr.f32.gmra.mrb[0].mxu0 %v2667
      %v2887 = vpop.f32.mrb[0].mxu0
      %v2888 = vadd.f32 0.0, %v2887
      %v2889 = vpop.f32.mrb[0].mxu0
      %2890 = vmatprep.mubr.f32.mxu0 0.0
      %2891 = vmatmul.mubr.f32.gmra.mrb[0].mxu0 %v2669
      %v2892 = vpop.f32.mrb[0].mxu0
      %v2893 = vadd.f32 0.0, %v2892
      %v2894 = vpop.f32.mrb[0].mxu0
      %2895 = vmatprep.mubr.f32.mxu0 0.0
      %2896 = vmatmul.mubr.f32.gmra.mrb[0].mxu0 %v2671
      %v2897 = vpop.f32.mrb[0].mxu0
      %v2898 = vadd.f32 0.0, %v2897
      %v2899 = vpop.f32.mrb[0].mxu0
      %2900 = vdwg.mxu0
      %v2901 = vadd.f32 %v2510, %v2743
      %v2902 = vadd.f32 %v2511, %v2748
      %v2903 = vadd.f32 %v2512, %v2753
      %v2904 = vadd.f32 %v2513, %v2758
      %v2905 = vadd.f32 %v2514, %v2763
      %v2906 = vadd.f32 %v2515, %v2768
      %v2907 = vadd.f32 %v2516, %v2773
      %v2908 = vadd.f32 %v2517, %v2778
      %v2909 = vadd.f32 %v2518, %v2783
      %v2910 = vadd.f32 %v2519, %v2788
      %v2911 = vadd.f32 %v2520, %v2793
      %v2912 = vadd.f32 %v2521, %v2798
      %v2913 = vadd.f32 %v2522, %v2803
      %v2914 = vadd.f32 %v2523, %v2808
      %v2915 = vadd.f32 %v2524, %v2813
      %v2916 = vadd.f32 %v2525, %v2818
      %v2917 = vadd.f32 %v2526, %v2823
      %v2918 = vadd.f32 %v2527, %v2828
      %v2919 = vadd.f32 %v2528, %v2833
      %v2920 = vadd.f32 %v2529, %v2838
      %v2921 = vadd.f32 %v2530, %v2843
      %v2922 = vadd.f32 %v2531, %v2848
      %v2923 = vadd.f32 %v2532, %v2853
      %v2924 = vadd.f32 %v2533, %v2858
      %v2925 = vadd.f32 %v2534, %v2863
      %v2926 = vadd.f32 %v2535, %v2868
      %v2927 = vadd.f32 %v2536, %v2873
      %v2928 = vadd.f32 %v2537, %v2878
      %v2929 = vadd.f32 %v2538, %v2883
      %v2930 = vadd.f32 %v2539, %v2888
      %v2931 = vadd.f32 %v2540, %v2893
      %v2932 = vadd.f32 %v2541, %v2898
      %2933 = vst [vmem:[#allocation2] sm:$0xff] %v2901
      %2934 = vst [vmem:[#allocation2 + $0x8] sm:$0xff] %v2902
      %2935 = vst [vmem:[#allocation2 + $0x10] sm:$0xff] %v2903
      %2936 = vst [vmem:[#allocation2 + $0x18] sm:$0xff] %v2904
      %2937 = vst [vmem:[#allocation2 + $0x20] sm:$0xff] %v2905
      %2938 = vst [vmem:[#allocation2 + $0x28] sm:$0xff] %v2906
      %2939 = vst [vmem:[#allocation2 + $0x30] sm:$0xff] %v2907
      %2940 = vst [vmem:[#allocation2 + $0x38] sm:$0xff] %v2908
      %2941 = vst [vmem:[#allocation2 + $0x40] sm:$0xff] %v2909
      %2942 = vst [vmem:[#allocation2 + $0x48] sm:$0xff] %v2910
      %2943 = vst [vmem:[#allocation2 + $0x50] sm:$0xff] %v2911
      %2944 = vst [vmem:[#allocation2 + $0x58] sm:$0xff] %v2912
      %2945 = vst [vmem:[#allocation2 + $0x60] sm:$0xff] %v2913
      %2946 = vst [vmem:[#allocation2 + $0x68] sm:$0xff] %v2914
      %2947 = vst [vmem:[#allocation2 + $0x70] sm:$0xff] %v2915
      %2948 = vst [vmem:[#allocation2 + $0x78] sm:$0xff] %v2916
      %2949 = vst [vmem:[#allocation2 + $0x80] sm:$0xff] %v2917
      %2950 = vst [vmem:[#allocation2 + $0x88] sm:$0xff] %v2918
      %2951 = vst [vmem:[#allocation2 + $0x90] sm:$0xff] %v2919
      %2952 = vst [vmem:[#allocation2 + $0x98] sm:$0xff] %v2920
      %2953 = vst [vmem:[#allocation2 + $0xa0] sm:$0xff] %v2921
      %2954 = vst [vmem:[#allocation2 + $0xa8] sm:$0xff] %v2922
      %2955 = vst [vmem:[#allocation2 + $0xb0] sm:$0xff] %v2923
      %2956 = vst [vmem:[#allocation2 + $0xb8] sm:$0xff] %v2924
      %2957 = vst [vmem:[#allocation2 + $0xc0] sm:$0xff] %v2925
      %2958 = vst [vmem:[#allocation2 + $0xc8] sm:$0xff] %v2926
      %2959 = vst [vmem:[#allocation2 + $0xd0] sm:$0xff] %v2927
      %2960 = vst [vmem:[#allocation2 + $0xd8] sm:$0xff] %v2928
      %2961 = vst [vmem:[#allocation2 + $0xe0] sm:$0xff] %v2929
      %2962 = vst [vmem:[#allocation2 + $0xe8] sm:$0xff] %v2930
      %2963 = vst [vmem:[#allocation2 + $0xf0] sm:$0xff] %v2931
      %2964 = vst [vmem:[#allocation2 + $0xf8] sm:$0xff] %v2932
      %s2965 = sadd.s32 %s194, 48
      %s2966 = scalar_lea.vmem %s183, %s2965
      %v2967 = vld [vmem:[%s2966] sm:$0xff]
      %v2968 = vld [vmem:[%s2966 + $0x8] sm:$0xff]
      %v2969 = vld [vmem:[%s2966 + $0x10] sm:$0xff]
      %v2970 = vld [vmem:[%s2966 + $0x18] sm:$0xff]
      %v2971 = vld [vmem:[%s2966 + $0x20] sm:$0xff]
      %v2972 = vld [vmem:[%s2966 + $0x28] sm:$0xff]
      %v2973 = vld [vmem:[%s2966 + $0x30] sm:$0xff]
      %v2974 = vld [vmem:[%s2966 + $0x38] sm:$0xff]
      %v2975 = vld [vmem:[%s2966 + $0x40] sm:$0xff]
      %v2976 = vld [vmem:[%s2966 + $0x48] sm:$0xff]
      %v2977 = vld [vmem:[%s2966 + $0x50] sm:$0xff]
      %v2978 = vld [vmem:[%s2966 + $0x58] sm:$0xff]
      %v2979 = vld [vmem:[%s2966 + $0x60] sm:$0xff]
      %v2980 = vld [vmem:[%s2966 + $0x68] sm:$0xff]
      %v2981 = vld [vmem:[%s2966 + $0x70] sm:$0xff]
      %v2982 = vld [vmem:[%s2966 + $0x78] sm:$0xff]
      %v2983 = vld [vmem:[%s2966 + $0x80] sm:$0xff]
      %v2984 = vld [vmem:[%s2966 + $0x88] sm:$0xff]
      %v2985 = vld [vmem:[%s2966 + $0x90] sm:$0xff]
      %v2986 = vld [vmem:[%s2966 + $0x98] sm:$0xff]
      %v2987 = vld [vmem:[%s2966 + $0xa0] sm:$0xff]
      %v2988 = vld [vmem:[%s2966 + $0xa8] sm:$0xff]
      %v2989 = vld [vmem:[%s2966 + $0xb0] sm:$0xff]
      %v2990 = vld [vmem:[%s2966 + $0xb8] sm:$0xff]
      %v2991 = vld [vmem:[%s2966 + $0xc0] sm:$0xff]
      %v2992 = vld [vmem:[%s2966 + $0xc8] sm:$0xff]
      %v2993 = vld [vmem:[%s2966 + $0xd0] sm:$0xff]
      %v2994 = vld [vmem:[%s2966 + $0xd8] sm:$0xff]
      %v2995 = vld [vmem:[%s2966 + $0xe0] sm:$0xff]
      %v2996 = vld [vmem:[%s2966 + $0xe8] sm:$0xff]
      %v2997 = vld [vmem:[%s2966 + $0xf0] sm:$0xff]
      %v2998 = vld [vmem:[%s2966 + $0xf8] sm:$0xff]
      %v2999 = vld [vmem:[%s2966 + $0x100] sm:$0x3]
      %v3000 = vld [vmem:[#allocation2] sm:$0xff]
      %v3001 = vld [vmem:[#allocation2 + $0x8] sm:$0xff]
      %v3002 = vld [vmem:[#allocation2 + $0x10] sm:$0xff]
      %v3003 = vld [vmem:[#allocation2 + $0x18] sm:$0xff]
      %v3004 = vld [vmem:[#allocation2 + $0x20] sm:$0xff]
      %v3005 = vld [vmem:[#allocation2 + $0x28] sm:$0xff]
      %v3006 = vld [vmem:[#allocation2 + $0x30] sm:$0xff]
      %v3007 = vld [vmem:[#allocation2 + $0x38] sm:$0xff]
      %v3008 = vld [vmem:[#allocation2 + $0x40] sm:$0xff]
      %v3009 = vld [vmem:[#allocation2 + $0x48] sm:$0xff]
      %v3010 = vld [vmem:[#allocation2 + $0x50] sm:$0xff]
      %v3011 = vld [vmem:[#allocation2 + $0x58] sm:$0xff]
      %v3012 = vld [vmem:[#allocation2 + $0x60] sm:$0xff]
      %v3013 = vld [vmem:[#allocation2 + $0x68] sm:$0xff]
      %v3014 = vld [vmem:[#allocation2 + $0x70] sm:$0xff]
      %v3015 = vld [vmem:[#allocation2 + $0x78] sm:$0xff]
      %v3016 = vld [vmem:[#allocation2 + $0x80] sm:$0xff]
      %v3017 = vld [vmem:[#allocation2 + $0x88] sm:$0xff]
      %v3018 = vld [vmem:[#allocation2 + $0x90] sm:$0xff]
      %v3019 = vld [vmem:[#allocation2 + $0x98] sm:$0xff]
      %v3020 = vld [vmem:[#allocation2 + $0xa0] sm:$0xff]
      %v3021 = vld [vmem:[#allocation2 + $0xa8] sm:$0xff]
      %v3022 = vld [vmem:[#allocation2 + $0xb0] sm:$0xff]
      %v3023 = vld [vmem:[#allocation2 + $0xb8] sm:$0xff]
      %v3024 = vld [vmem:[#allocation2 + $0xc0] sm:$0xff]
      %v3025 = vld [vmem:[#allocation2 + $0xc8] sm:$0xff]
      %v3026 = vld [vmem:[#allocation2 + $0xd0] sm:$0xff]
      %v3027 = vld [vmem:[#allocation2 + $0xd8] sm:$0xff]
      %v3028 = vld [vmem:[#allocation2 + $0xe0] sm:$0xff]
      %v3029 = vld [vmem:[#allocation2 + $0xe8] sm:$0xff]
      %v3030 = vld [vmem:[#allocation2 + $0xf0] sm:$0xff]
      %v3031 = vld [vmem:[#allocation2 + $0xf8] sm:$0xff]
      %s3032 = scalar_lea.vmem %s1, 24
      %v3033 = vld [vmem:[%s3032] sm:$0xf]
      %v3035 = vsel %vm294, %v2967, 0
      %v3038 = vsel %vm294, %v2968, 0
      %v3041 = vsel %vm294, %v2969, 0
      %v3044 = vsel %vm294, %v2970, 0
      %v3047 = vsel %vm294, %v2971, 0
      %v3050 = vsel %vm294, %v2972, 0
      %v3053 = vsel %vm294, %v2973, 0
      %v3056 = vsel %vm294, %v2974, 0
      %v3059 = vsel %vm294, %v2975, 0
      %v3062 = vsel %vm294, %v2976, 0
      %v3065 = vsel %vm294, %v2977, 0
      %v3068 = vsel %vm294, %v2978, 0
      %v3071 = vsel %vm294, %v2979, 0
      %v3074 = vsel %vm294, %v2980, 0
      %v3077 = vsel %vm294, %v2981, 0
      %v3080 = vsel %vm294, %v2982, 0
      %v3083 = vsel %vm294, %v2983, 0
      %v3086 = vsel %vm294, %v2984, 0
      %v3089 = vsel %vm294, %v2985, 0
      %v3092 = vsel %vm294, %v2986, 0
      %v3095 = vsel %vm294, %v2987, 0
      %v3098 = vsel %vm294, %v2988, 0
      %v3101 = vsel %vm294, %v2989, 0
      %v3104 = vsel %vm294, %v2990, 0
      %v3107 = vsel %vm294, %v2991, 0
      %v3110 = vsel %vm294, %v2992, 0
      %v3113 = vsel %vm294, %v2993, 0
      %v3116 = vsel %vm294, %v2994, 0
      %v3119 = vsel %vm294, %v2995, 0
      %v3122 = vsel %vm294, %v2996, 0
      %v3125 = vsel %vm294, %v2997, 0
      %v3128 = vsel %vm294, %v2998, 0
      %v3131 = vsel %vm391, %v3033, 0
      %3133 = vmatprep.subr.mxu0 0.0
      %3134 = vmatpush1.msra.mxu0 %v3131
      %3135 = vmatprep.subr.mxu0 0.0
      %3136 = vmatpush1.msra.mxu0 0.0
      %3137 = vmatprep.subr.mxu0 0.0
      %3138 = vmatpush1.msra.mxu0 0.0
      %3139 = vmatprep.subr.mxu0 0.0
      %3140 = vmatpush1.msra.mxu0 0.0
      %3141 = vmatprep.subr.mxu0 0.0
      %3142 = vmatpush1.msra.mxu0 0.0
      %3143 = vmatprep.subr.mxu0 0.0
      %3144 = vmatpush1.msra.mxu0 0.0
      %3145 = vmatprep.subr.mxu0 0.0
      %3146 = vmatpush1.msra.mxu0 0.0
      %3147 = vmatprep.subr.mxu0 0.0
      %3148 = vmatpush1.msra.mxu0 0.0
      %3149 = vmatprep.subr.mxu0 0.0
      %3150 = vmatpush1.msra.mxu0 0.0
      %3151 = vmatprep.subr.mxu0 0.0
      %3152 = vmatpush1.msra.mxu0 0.0
      %3153 = vmatprep.subr.mxu0 0.0
      %3154 = vmatpush1.msra.mxu0 0.0
      %3155 = vmatprep.subr.mxu0 0.0
      %3156 = vmatpush1.msra.mxu0 0.0
      %3157 = vmatprep.subr.mxu0 0.0
      %3158 = vmatpush1.msra.mxu0 0.0
      %3159 = vmatprep.subr.mxu0 0.0
      %3160 = vmatpush1.msra.mxu0 0.0
      %3161 = vmatprep.subr.mxu0 0.0
      %3162 = vmatpush1.msra.mxu0 0.0
      %3163 = vmatprep.subr.mxu0 0.0
      %3164 = vmatpush1.msra.mxu0 0.0
      %3165 = vmatprep.subr.mxu0 0.0
      %3166 = vmatpush1.msra.mxu0 0.0
      %3167 = vmatprep.subr.mxu0 0.0
      %3168 = vmatpush1.msra.mxu0 0.0
      %3169 = vmatprep.subr.mxu0 0.0
      %3170 = vmatpush1.msra.mxu0 0.0
      %3171 = vmatprep.subr.mxu0 0.0
      %3172 = vmatpush1.msra.mxu0 0.0
      %3173 = vmatprep.subr.mxu0 0.0
      %3174 = vmatpush1.msra.mxu0 0.0
      %3175 = vmatprep.subr.mxu0 0.0
      %3176 = vmatpush1.msra.mxu0 0.0
      %3177 = vmatprep.subr.mxu0 0.0
      %3178 = vmatpush1.msra.mxu0 0.0
      %3179 = vmatprep.subr.mxu0 0.0
      %3180 = vmatpush1.msra.mxu0 0.0
      %3181 = vmatprep.subr.mxu0 0.0
      %3182 = vmatpush1.msra.mxu0 0.0
      %3183 = vmatprep.subr.mxu0 0.0
      %3184 = vmatpush1.msra.mxu0 0.0
      %3185 = vmatprep.subr.mxu0 0.0
      %3186 = vmatpush1.msra.mxu0 0.0
      %3187 = vmatprep.subr.mxu0 0.0
      %3188 = vmatpush1.msra.mxu0 0.0
      %3189 = vmatprep.subr.mxu0 0.0
      %3190 = vmatpush1.msra.mxu0 0.0
      %3191 = vmatprep.subr.mxu0 0.0
      %3192 = vmatpush1.msra.mxu0 0.0
      %3193 = vmatprep.subr.mxu0 0.0
      %3194 = vmatpush1.msra.mxu0 0.0
      %3195 = vmatprep.subr.mxu0 0.0
      %3196 = vmatpush1.msra.mxu0 0.0
      %3197 = vmatprep.mubr.f32.mxu0 0.0
      %3198 = vmatmul.mubr.f32.gmra.mrb[0].mxu0 %v3035
      %v3199 = vpop.f32.mrb[0].mxu0
      %v3200 = vadd.f32 0.0, %v3199
      %v3201 = vpop.f32.mrb[0].mxu0
      %3202 = vmatprep.mubr.f32.mxu0 0.0
      %3203 = vmatmul.mubr.f32.gmra.mrb[0].mxu0 %v3038
      %v3204 = vpop.f32.mrb[0].mxu0
      %v3205 = vadd.f32 0.0, %v3204
      %v3206 = vpop.f32.mrb[0].mxu0
      %3207 = vmatprep.mubr.f32.mxu0 0.0
      %3208 = vmatmul.mubr.f32.gmra.mrb[0].mxu0 %v3041
      %v3209 = vpop.f32.mrb[0].mxu0
      %v3210 = vadd.f32 0.0, %v3209
      %v3211 = vpop.f32.mrb[0].mxu0
      %3212 = vmatprep.mubr.f32.mxu0 0.0
      %3213 = vmatmul.mubr.f32.gmra.mrb[0].mxu0 %v3044
      %v3214 = vpop.f32.mrb[0].mxu0
      %v3215 = vadd.f32 0.0, %v3214
      %v3216 = vpop.f32.mrb[0].mxu0
      %3217 = vmatprep.mubr.f32.mxu0 0.0
      %3218 = vmatmul.mubr.f32.gmra.mrb[0].mxu0 %v3047
      %v3219 = vpop.f32.mrb[0].mxu0
      %v3220 = vadd.f32 0.0, %v3219
      %v3221 = vpop.f32.mrb[0].mxu0
      %3222 = vmatprep.mubr.f32.mxu0 0.0
      %3223 = vmatmul.mubr.f32.gmra.mrb[0].mxu0 %v3050
      %v3224 = vpop.f32.mrb[0].mxu0
      %v3225 = vadd.f32 0.0, %v3224
      %v3226 = vpop.f32.mrb[0].mxu0
      %3227 = vmatprep.mubr.f32.mxu0 0.0
      %3228 = vmatmul.mubr.f32.gmra.mrb[0].mxu0 %v3053
      %v3229 = vpop.f32.mrb[0].mxu0
      %v3230 = vadd.f32 0.0, %v3229
      %v3231 = vpop.f32.mrb[0].mxu0
      %3232 = vmatprep.mubr.f32.mxu0 0.0
      %3233 = vmatmul.mubr.f32.gmra.mrb[0].mxu0 %v3056
      %v3234 = vpop.f32.mrb[0].mxu0
      %v3235 = vadd.f32 0.0, %v3234
      %v3236 = vpop.f32.mrb[0].mxu0
      %3237 = vmatprep.mubr.f32.mxu0 0.0
      %3238 = vmatmul.mubr.f32.gmra.mrb[0].mxu0 %v3059
      %v3239 = vpop.f32.mrb[0].mxu0
      %v3240 = vadd.f32 0.0, %v3239
      %v3241 = vpop.f32.mrb[0].mxu0
      %3242 = vmatprep.mubr.f32.mxu0 0.0
      %3243 = vmatmul.mubr.f32.gmra.mrb[0].mxu0 %v3062
      %v3244 = vpop.f32.mrb[0].mxu0
      %v3245 = vadd.f32 0.0, %v3244
      %v3246 = vpop.f32.mrb[0].mxu0
      %3247 = vmatprep.mubr.f32.mxu0 0.0
      %3248 = vmatmul.mubr.f32.gmra.mrb[0].mxu0 %v3065
      %v3249 = vpop.f32.mrb[0].mxu0
      %v3250 = vadd.f32 0.0, %v3249
      %v3251 = vpop.f32.mrb[0].mxu0
      %3252 = vmatprep.mubr.f32.mxu0 0.0
      %3253 = vmatmul.mubr.f32.gmra.mrb[0].mxu0 %v3068
      %v3254 = vpop.f32.mrb[0].mxu0
      %v3255 = vadd.f32 0.0, %v3254
      %v3256 = vpop.f32.mrb[0].mxu0
      %3257 = vmatprep.mubr.f32.mxu0 0.0
      %3258 = vmatmul.mubr.f32.gmra.mrb[0].mxu0 %v3071
      %v3259 = vpop.f32.mrb[0].mxu0
      %v3260 = vadd.f32 0.0, %v3259
      %v3261 = vpop.f32.mrb[0].mxu0
      %3262 = vmatprep.mubr.f32.mxu0 0.0
      %3263 = vmatmul.mubr.f32.gmra.mrb[0].mxu0 %v3074
      %v3264 = vpop.f32.mrb[0].mxu0
      %v3265 = vadd.f32 0.0, %v3264
      %v3266 = vpop.f32.mrb[0].mxu0
      %3267 = vmatprep.mubr.f32.mxu0 0.0
      %3268 = vmatmul.mubr.f32.gmra.mrb[0].mxu0 %v3077
      %v3269 = vpop.f32.mrb[0].mxu0
      %v3270 = vadd.f32 0.0, %v3269
      %v3271 = vpop.f32.mrb[0].mxu0
      %3272 = vmatprep.mubr.f32.mxu0 0.0
      %3273 = vmatmul.mubr.f32.gmra.mrb[0].mxu0 %v3080
      %v3274 = vpop.f32.mrb[0].mxu0
      %v3275 = vadd.f32 0.0, %v3274
      %v3276 = vpop.f32.mrb[0].mxu0
      %3277 = vmatprep.mubr.f32.mxu0 0.0
      %3278 = vmatmul.mubr.f32.gmra.mrb[0].mxu0 %v3083
      %v3279 = vpop.f32.mrb[0].mxu0
      %v3280 = vadd.f32 0.0, %v3279
      %v3281 = vpop.f32.mrb[0].mxu0
      %3282 = vmatprep.mubr.f32.mxu0 0.0
      %3283 = vmatmul.mubr.f32.gmra.mrb[0].mxu0 %v3086
      %v3284 = vpop.f32.mrb[0].mxu0
      %v3285 = vadd.f32 0.0, %v3284
      %v3286 = vpop.f32.mrb[0].mxu0
      %3287 = vmatprep.mubr.f32.mxu0 0.0
      %3288 = vmatmul.mubr.f32.gmra.mrb[0].mxu0 %v3089
      %v3289 = vpop.f32.mrb[0].mxu0
      %v3290 = vadd.f32 0.0, %v3289
      %v3291 = vpop.f32.mrb[0].mxu0
      %3292 = vmatprep.mubr.f32.mxu0 0.0
      %3293 = vmatmul.mubr.f32.gmra.mrb[0].mxu0 %v3092
      %v3294 = vpop.f32.mrb[0].mxu0
      %v3295 = vadd.f32 0.0, %v3294
      %v3296 = vpop.f32.mrb[0].mxu0
      %3297 = vmatprep.mubr.f32.mxu0 0.0
      %3298 = vmatmul.mubr.f32.gmra.mrb[0].mxu0 %v3095
      %v3299 = vpop.f32.mrb[0].mxu0
      %v3300 = vadd.f32 0.0, %v3299
      %v3301 = vpop.f32.mrb[0].mxu0
      %3302 = vmatprep.mubr.f32.mxu0 0.0
      %3303 = vmatmul.mubr.f32.gmra.mrb[0].mxu0 %v3098
      %v3304 = vpop.f32.mrb[0].mxu0
      %v3305 = vadd.f32 0.0, %v3304
      %v3306 = vpop.f32.mrb[0].mxu0
      %3307 = vmatprep.mubr.f32.mxu0 0.0
      %3308 = vmatmul.mubr.f32.gmra.mrb[0].mxu0 %v3101
      %v3309 = vpop.f32.mrb[0].mxu0
      %v3310 = vadd.f32 0.0, %v3309
      %v3311 = vpop.f32.mrb[0].mxu0
      %3312 = vmatprep.mubr.f32.mxu0 0.0
      %3313 = vmatmul.mubr.f32.gmra.mrb[0].mxu0 %v3104
      %v3314 = vpop.f32.mrb[0].mxu0
      %v3315 = vadd.f32 0.0, %v3314
      %v3316 = vpop.f32.mrb[0].mxu0
      %3317 = vmatprep.mubr.f32.mxu0 0.0
      %3318 = vmatmul.mubr.f32.gmra.mrb[0].mxu0 %v3107
      %v3319 = vpop.f32.mrb[0].mxu0
      %v3320 = vadd.f32 0.0, %v3319
      %v3321 = vpop.f32.mrb[0].mxu0
      %3322 = vmatprep.mubr.f32.mxu0 0.0
      %3323 = vmatmul.mubr.f32.gmra.mrb[0].mxu0 %v3110
      %v3324 = vpop.f32.mrb[0].mxu0
      %v3325 = vadd.f32 0.0, %v3324
      %v3326 = vpop.f32.mrb[0].mxu0
      %3327 = vmatprep.mubr.f32.mxu0 0.0
      %3328 = vmatmul.mubr.f32.gmra.mrb[0].mxu0 %v3113
      %v3329 = vpop.f32.mrb[0].mxu0
      %v3330 = vadd.f32 0.0, %v3329
      %v3331 = vpop.f32.mrb[0].mxu0
      %3332 = vmatprep.mubr.f32.mxu0 0.0
      %3333 = vmatmul.mubr.f32.gmra.mrb[0].mxu0 %v3116
      %v3334 = vpop.f32.mrb[0].mxu0
      %v3335 = vadd.f32 0.0, %v3334
      %v3336 = vpop.f32.mrb[0].mxu0
      %3337 = vmatprep.mubr.f32.mxu0 0.0
      %3338 = vmatmul.mubr.f32.gmra.mrb[0].mxu0 %v3119
      %v3339 = vpop.f32.mrb[0].mxu0
      %v3340 = vadd.f32 0.0, %v3339
      %v3341 = vpop.f32.mrb[0].mxu0
      %3342 = vmatprep.mubr.f32.mxu0 0.0
      %3343 = vmatmul.mubr.f32.gmra.mrb[0].mxu0 %v3122
      %v3344 = vpop.f32.mrb[0].mxu0
      %v3345 = vadd.f32 0.0, %v3344
      %v3346 = vpop.f32.mrb[0].mxu0
      %3347 = vmatprep.mubr.f32.mxu0 0.0
      %3348 = vmatmul.mubr.f32.gmra.mrb[0].mxu0 %v3125
      %v3349 = vpop.f32.mrb[0].mxu0
      %v3350 = vadd.f32 0.0, %v3349
      %v3351 = vpop.f32.mrb[0].mxu0
      %3352 = vmatprep.mubr.f32.mxu0 0.0
      %3353 = vmatmul.mubr.f32.gmra.mrb[0].mxu0 %v3128
      %v3354 = vpop.f32.mrb[0].mxu0
      %v3355 = vadd.f32 0.0, %v3354
      %v3356 = vpop.f32.mrb[0].mxu0
      %3357 = vdwg.mxu0
      %v3358 = vadd.f32 %v3000, %v3200
      %v3359 = vadd.f32 %v3001, %v3205
      %v3360 = vadd.f32 %v3002, %v3210
      %v3361 = vadd.f32 %v3003, %v3215
      %v3362 = vadd.f32 %v3004, %v3220
      %v3363 = vadd.f32 %v3005, %v3225
      %v3364 = vadd.f32 %v3006, %v3230
      %v3365 = vadd.f32 %v3007, %v3235
      %v3366 = vadd.f32 %v3008, %v3240
      %v3367 = vadd.f32 %v3009, %v3245
      %v3368 = vadd.f32 %v3010, %v3250
      %v3369 = vadd.f32 %v3011, %v3255
      %v3370 = vadd.f32 %v3012, %v3260
      %v3371 = vadd.f32 %v3013, %v3265
      %v3372 = vadd.f32 %v3014, %v3270
      %v3373 = vadd.f32 %v3015, %v3275
      %v3374 = vadd.f32 %v3016, %v3280
      %v3375 = vadd.f32 %v3017, %v3285
      %v3376 = vadd.f32 %v3018, %v3290
      %v3377 = vadd.f32 %v3019, %v3295
      %v3378 = vadd.f32 %v3020, %v3300
      %v3379 = vadd.f32 %v3021, %v3305
      %v3380 = vadd.f32 %v3022, %v3310
      %v3381 = vadd.f32 %v3023, %v3315
      %v3382 = vadd.f32 %v3024, %v3320
      %v3383 = vadd.f32 %v3025, %v3325
      %v3384 = vadd.f32 %v3026, %v3330
      %v3385 = vadd.f32 %v3027, %v3335
      %v3386 = vadd.f32 %v3028, %v3340
      %v3387 = vadd.f32 %v3029, %v3345
      %v3388 = vadd.f32 %v3030, %v3350
      %v3389 = vadd.f32 %v3031, %v3355
      %3390 = vst [vmem:[#allocation2] sm:$0xff] %v3358
      %3391 = vst [vmem:[#allocation2 + $0x8] sm:$0xff] %v3359
      %3392 = vst [vmem:[#allocation2 + $0x10] sm:$0xff] %v3360
      %3393 = vst [vmem:[#allocation2 + $0x18] sm:$0xff] %v3361
      %3394 = vst [vmem:[#allocation2 + $0x20] sm:$0xff] %v3362
      %3395 = vst [vmem:[#allocation2 + $0x28] sm:$0xff] %v3363
      %3396 = vst [vmem:[#allocation2 + $0x30] sm:$0xff] %v3364
      %3397 = vst [vmem:[#allocation2 + $0x38] sm:$0xff] %v3365
      %3398 = vst [vmem:[#allocation2 + $0x40] sm:$0xff] %v3366
      %3399 = vst [vmem:[#allocation2 + $0x48] sm:$0xff] %v3367
      %3400 = vst [vmem:[#allocation2 + $0x50] sm:$0xff] %v3368
      %3401 = vst [vmem:[#allocation2 + $0x58] sm:$0xff] %v3369
      %3402 = vst [vmem:[#allocation2 + $0x60] sm:$0xff] %v3370
      %3403 = vst [vmem:[#allocation2 + $0x68] sm:$0xff] %v3371
      %3404 = vst [vmem:[#allocation2 + $0x70] sm:$0xff] %v3372
      %3405 = vst [vmem:[#allocation2 + $0x78] sm:$0xff] %v3373
      %3406 = vst [vmem:[#allocation2 + $0x80] sm:$0xff] %v3374
      %3407 = vst [vmem:[#allocation2 + $0x88] sm:$0xff] %v3375
      %3408 = vst [vmem:[#allocation2 + $0x90] sm:$0xff] %v3376
      %3409 = vst [vmem:[#allocation2 + $0x98] sm:$0xff] %v3377
      %3410 = vst [vmem:[#allocation2 + $0xa0] sm:$0xff] %v3378
      %3411 = vst [vmem:[#allocation2 + $0xa8] sm:$0xff] %v3379
      %3412 = vst [vmem:[#allocation2 + $0xb0] sm:$0xff] %v3380
      %3413 = vst [vmem:[#allocation2 + $0xb8] sm:$0xff] %v3381
      %3414 = vst [vmem:[#allocation2 + $0xc0] sm:$0xff] %v3382
      %3415 = vst [vmem:[#allocation2 + $0xc8] sm:$0xff] %v3383
      %3416 = vst [vmem:[#allocation2 + $0xd0] sm:$0xff] %v3384
      %3417 = vst [vmem:[#allocation2 + $0xd8] sm:$0xff] %v3385
      %3418 = vst [vmem:[#allocation2 + $0xe0] sm:$0xff] %v3386
      %3419 = vst [vmem:[#allocation2 + $0xe8] sm:$0xff] %v3387
      %3420 = vst [vmem:[#allocation2 + $0xf0] sm:$0xff] %v3388
      %3421 = vst [vmem:[#allocation2 + $0xf8] sm:$0xff] %v3389
      %v3422 = vld [vmem:[#allocation2] sm:$0xff]
      %v3423 = vld [vmem:[#allocation2 + $0x8] sm:$0xff]
      %v3424 = vld [vmem:[#allocation2 + $0x10] sm:$0xff]
      %v3425 = vld [vmem:[#allocation2 + $0x18] sm:$0xff]
      %v3426 = vld [vmem:[#allocation2 + $0x20] sm:$0xff]
      %v3427 = vld [vmem:[#allocation2 + $0x28] sm:$0xff]
      %v3428 = vld [vmem:[#allocation2 + $0x30] sm:$0xff]
      %v3429 = vld [vmem:[#allocation2 + $0x38] sm:$0xff]
      %v3430 = vld [vmem:[#allocation2 + $0x40] sm:$0xff]
      %v3431 = vld [vmem:[#allocation2 + $0x48] sm:$0xff]
      %v3432 = vld [vmem:[#allocation2 + $0x50] sm:$0xff]
      %v3433 = vld [vmem:[#allocation2 + $0x58] sm:$0xff]
      %v3434 = vld [vmem:[#allocation2 + $0x60] sm:$0xff]
      %v3435 = vld [vmem:[#allocation2 + $0x68] sm:$0xff]
      %v3436 = vld [vmem:[#allocation2 + $0x70] sm:$0xff]
      %v3437 = vld [vmem:[#allocation2 + $0x78] sm:$0xff]
      %v3438 = vld [vmem:[#allocation2 + $0x80] sm:$0xff]
      %v3439 = vld [vmem:[#allocation2 + $0x88] sm:$0xff]
      %v3440 = vld [vmem:[#allocation2 + $0x90] sm:$0xff]
      %v3441 = vld [vmem:[#allocation2 + $0x98] sm:$0xff]
      %v3442 = vld [vmem:[#allocation2 + $0xa0] sm:$0xff]
      %v3443 = vld [vmem:[#allocation2 + $0xa8] sm:$0xff]
      %v3444 = vld [vmem:[#allocation2 + $0xb0] sm:$0xff]
      %v3445 = vld [vmem:[#allocation2 + $0xb8] sm:$0xff]
      %v3446 = vld [vmem:[#allocation2 + $0xc0] sm:$0xff]
      %v3447 = vld [vmem:[#allocation2 + $0xc8] sm:$0xff]
      %v3448 = vld [vmem:[#allocation2 + $0xd0] sm:$0xff]
      %v3449 = vld [vmem:[#allocation2 + $0xd8] sm:$0xff]
      %v3450 = vld [vmem:[#allocation2 + $0xe0] sm:$0xff]
      %v3451 = vld [vmem:[#allocation2 + $0xe8] sm:$0xff]
      %v3452 = vld [vmem:[#allocation2 + $0xf0] sm:$0xff]
      %v3453 = vld [vmem:[#allocation2 + $0xf8] sm:$0xff]
      %s3454 = scalar_lea.vmem %s1, 28
      %v3455 = vld [vmem:[%s3454] sm:$0xf]
      %v3457 = vrot.slane %v2967, 1
      %v3458 = vrot.slane %v2968, 1
      %v3459 = vsel %vm719, %v3457, %v3458
      %v3460 = vrot.slane %v2969, 1
      %v3461 = vsel %vm719, %v3458, %v3460
      %v3462 = vrot.slane %v2970, 1
      %v3463 = vsel %vm719, %v3460, %v3462
      %v3464 = vrot.slane %v2971, 1
      %v3465 = vsel %vm719, %v3462, %v3464
      %v3466 = vrot.slane %v2972, 1
      %v3467 = vsel %vm719, %v3464, %v3466
      %v3468 = vrot.slane %v2973, 1
      %v3469 = vsel %vm719, %v3466, %v3468
      %v3470 = vrot.slane %v2974, 1
      %v3471 = vsel %vm719, %v3468, %v3470
      %v3472 = vrot.slane %v2975, 1
      %v3473 = vsel %vm719, %v3470, %v3472
      %v3474 = vrot.slane %v2976, 1
      %v3475 = vsel %vm719, %v3472, %v3474
      %v3476 = vrot.slane %v2977, 1
      %v3477 = vsel %vm719, %v3474, %v3476
      %v3478 = vrot.slane %v2978, 1
      %v3479 = vsel %vm719, %v3476, %v3478
      %v3480 = vrot.slane %v2979, 1
      %v3481 = vsel %vm719, %v3478, %v3480
      %v3482 = vrot.slane %v2980, 1
      %v3483 = vsel %vm719, %v3480, %v3482
      %v3484 = vrot.slane %v2981, 1
      %v3485 = vsel %vm719, %v3482, %v3484
      %v3486 = vrot.slane %v2982, 1
      %v3487 = vsel %vm719, %v3484, %v3486
      %v3488 = vrot.slane %v2983, 1
      %v3489 = vsel %vm719, %v3486, %v3488
      %v3490 = vrot.slane %v2984, 1
      %v3491 = vsel %vm719, %v3488, %v3490
      %v3492 = vrot.slane %v2985, 1
      %v3493 = vsel %vm719, %v3490, %v3492
      %v3494 = vrot.slane %v2986, 1
      %v3495 = vsel %vm719, %v3492, %v3494
      %v3496 = vrot.slane %v2987, 1
      %v3497 = vsel %vm719, %v3494, %v3496
      %v3498 = vrot.slane %v2988, 1
      %v3499 = vsel %vm719, %v3496, %v3498
      %v3500 = vrot.slane %v2989, 1
      %v3501 = vsel %vm719, %v3498, %v3500
      %v3502 = vrot.slane %v2990, 1
      %v3503 = vsel %vm719, %v3500, %v3502
      %v3504 = vrot.slane %v2991, 1
      %v3505 = vsel %vm719, %v3502, %v3504
      %v3506 = vrot.slane %v2992, 1
      %v3507 = vsel %vm719, %v3504, %v3506
      %v3508 = vrot.slane %v2993, 1
      %v3509 = vsel %vm719, %v3506, %v3508
      %v3510 = vrot.slane %v2994, 1
      %v3511 = vsel %vm719, %v3508, %v3510
      %v3512 = vrot.slane %v2995, 1
      %v3513 = vsel %vm719, %v3510, %v3512
      %v3514 = vrot.slane %v2996, 1
      %v3515 = vsel %vm719, %v3512, %v3514
      %v3516 = vrot.slane %v2997, 1
      %v3517 = vsel %vm719, %v3514, %v3516
      %v3518 = vrot.slane %v2998, 1
      %v3519 = vsel %vm719, %v3516, %v3518
      %v3520 = vrot.slane %v2999, 1
      %v3521 = vsel %vm719, %v3518, %v3520
      %v3522 = vsel %vm294, %v3459, 0
      %v3524 = vsel %vm294, %v3461, 0
      %v3526 = vsel %vm294, %v3463, 0
      %v3528 = vsel %vm294, %v3465, 0
      %v3530 = vsel %vm294, %v3467, 0
      %v3532 = vsel %vm294, %v3469, 0
      %v3534 = vsel %vm294, %v3471, 0
      %v3536 = vsel %vm294, %v3473, 0
      %v3538 = vsel %vm294, %v3475, 0
      %v3540 = vsel %vm294, %v3477, 0
      %v3542 = vsel %vm294, %v3479, 0
      %v3544 = vsel %vm294, %v3481, 0
      %v3546 = vsel %vm294, %v3483, 0
      %v3548 = vsel %vm294, %v3485, 0
      %v3550 = vsel %vm294, %v3487, 0
      %v3552 = vsel %vm294, %v3489, 0
      %v3554 = vsel %vm294, %v3491, 0
      %v3556 = vsel %vm294, %v3493, 0
      %v3558 = vsel %vm294, %v3495, 0
      %v3560 = vsel %vm294, %v3497, 0
      %v3562 = vsel %vm294, %v3499, 0
      %v3564 = vsel %vm294, %v3501, 0
      %v3566 = vsel %vm294, %v3503, 0
      %v3568 = vsel %vm294, %v3505, 0
      %v3570 = vsel %vm294, %v3507, 0
      %v3572 = vsel %vm294, %v3509, 0
      %v3574 = vsel %vm294, %v3511, 0
      %v3576 = vsel %vm294, %v3513, 0
      %v3578 = vsel %vm294, %v3515, 0
      %v3580 = vsel %vm294, %v3517, 0
      %v3582 = vsel %vm294, %v3519, 0
      %v3584 = vsel %vm294, %v3521, 0
      %v3587 = vsel %vm391, %v3455, 0
      %3589 = vmatprep.subr.mxu0 0.0
      %3590 = vmatpush1.msra.mxu0 %v3587
      %3591 = vmatprep.subr.mxu0 0.0
      %3592 = vmatpush1.msra.mxu0 0.0
      %3593 = vmatprep.subr.mxu0 0.0
      %3594 = vmatpush1.msra.mxu0 0.0
      %3595 = vmatprep.subr.mxu0 0.0
      %3596 = vmatpush1.msra.mxu0 0.0
      %3597 = vmatprep.subr.mxu0 0.0
      %3598 = vmatpush1.msra.mxu0 0.0
      %3599 = vmatprep.subr.mxu0 0.0
      %3600 = vmatpush1.msra.mxu0 0.0
      %3601 = vmatprep.subr.mxu0 0.0
      %3602 = vmatpush1.msra.mxu0 0.0
      %3603 = vmatprep.subr.mxu0 0.0
      %3604 = vmatpush1.msra.mxu0 0.0
      %3605 = vmatprep.subr.mxu0 0.0
      %3606 = vmatpush1.msra.mxu0 0.0
      %3607 = vmatprep.subr.mxu0 0.0
      %3608 = vmatpush1.msra.mxu0 0.0
      %3609 = vmatprep.subr.mxu0 0.0
      %3610 = vmatpush1.msra.mxu0 0.0
      %3611 = vmatprep.subr.mxu0 0.0
      %3612 = vmatpush1.msra.mxu0 0.0
      %3613 = vmatprep.subr.mxu0 0.0
      %3614 = vmatpush1.msra.mxu0 0.0
      %3615 = vmatprep.subr.mxu0 0.0
      %3616 = vmatpush1.msra.mxu0 0.0
      %3617 = vmatprep.subr.mxu0 0.0
      %3618 = vmatpush1.msra.mxu0 0.0
      %3619 = vmatprep.subr.mxu0 0.0
      %3620 = vmatpush1.msra.mxu0 0.0
      %3621 = vmatprep.subr.mxu0 0.0
      %3622 = vmatpush1.msra.mxu0 0.0
      %3623 = vmatprep.subr.mxu0 0.0
      %3624 = vmatpush1.msra.mxu0 0.0
      %3625 = vmatprep.subr.mxu0 0.0
      %3626 = vmatpush1.msra.mxu0 0.0
      %3627 = vmatprep.subr.mxu0 0.0
      %3628 = vmatpush1.msra.mxu0 0.0
      %3629 = vmatprep.subr.mxu0 0.0
      %3630 = vmatpush1.msra.mxu0 0.0
      %3631 = vmatprep.subr.mxu0 0.0
      %3632 = vmatpush1.msra.mxu0 0.0
      %3633 = vmatprep.subr.mxu0 0.0
      %3634 = vmatpush1.msra.mxu0 0.0
      %3635 = vmatprep.subr.mxu0 0.0
      %3636 = vmatpush1.msra.mxu0 0.0
      %3637 = vmatprep.subr.mxu0 0.0
      %3638 = vmatpush1.msra.mxu0 0.0
      %3639 = vmatprep.subr.mxu0 0.0
      %3640 = vmatpush1.msra.mxu0 0.0
      %3641 = vmatprep.subr.mxu0 0.0
      %3642 = vmatpush1.msra.mxu0 0.0
      %3643 = vmatprep.subr.mxu0 0.0
      %3644 = vmatpush1.msra.mxu0 0.0
      %3645 = vmatprep.subr.mxu0 0.0
      %3646 = vmatpush1.msra.mxu0 0.0
      %3647 = vmatprep.subr.mxu0 0.0
      %3648 = vmatpush1.msra.mxu0 0.0
      %3649 = vmatprep.subr.mxu0 0.0
      %3650 = vmatpush1.msra.mxu0 0.0
      %3651 = vmatprep.subr.mxu0 0.0
      %3652 = vmatpush1.msra.mxu0 0.0
      %3653 = vmatprep.mubr.f32.mxu0 0.0
      %3654 = vmatmul.mubr.f32.gmra.mrb[0].mxu0 %v3522
      %v3655 = vpop.f32.mrb[0].mxu0
      %v3656 = vadd.f32 0.0, %v3655
      %v3657 = vpop.f32.mrb[0].mxu0
      %3658 = vmatprep.mubr.f32.mxu0 0.0
      %3659 = vmatmul.mubr.f32.gmra.mrb[0].mxu0 %v3524
      %v3660 = vpop.f32.mrb[0].mxu0
      %v3661 = vadd.f32 0.0, %v3660
      %v3662 = vpop.f32.mrb[0].mxu0
      %3663 = vmatprep.mubr.f32.mxu0 0.0
      %3664 = vmatmul.mubr.f32.gmra.mrb[0].mxu0 %v3526
      %v3665 = vpop.f32.mrb[0].mxu0
      %v3666 = vadd.f32 0.0, %v3665
      %v3667 = vpop.f32.mrb[0].mxu0
      %3668 = vmatprep.mubr.f32.mxu0 0.0
      %3669 = vmatmul.mubr.f32.gmra.mrb[0].mxu0 %v3528
      %v3670 = vpop.f32.mrb[0].mxu0
      %v3671 = vadd.f32 0.0, %v3670
      %v3672 = vpop.f32.mrb[0].mxu0
      %3673 = vmatprep.mubr.f32.mxu0 0.0
      %3674 = vmatmul.mubr.f32.gmra.mrb[0].mxu0 %v3530
      %v3675 = vpop.f32.mrb[0].mxu0
      %v3676 = vadd.f32 0.0, %v3675
      %v3677 = vpop.f32.mrb[0].mxu0
      %3678 = vmatprep.mubr.f32.mxu0 0.0
      %3679 = vmatmul.mubr.f32.gmra.mrb[0].mxu0 %v3532
      %v3680 = vpop.f32.mrb[0].mxu0
      %v3681 = vadd.f32 0.0, %v3680
      %v3682 = vpop.f32.mrb[0].mxu0
      %3683 = vmatprep.mubr.f32.mxu0 0.0
      %3684 = vmatmul.mubr.f32.gmra.mrb[0].mxu0 %v3534
      %v3685 = vpop.f32.mrb[0].mxu0
      %v3686 = vadd.f32 0.0, %v3685
      %v3687 = vpop.f32.mrb[0].mxu0
      %3688 = vmatprep.mubr.f32.mxu0 0.0
      %3689 = vmatmul.mubr.f32.gmra.mrb[0].mxu0 %v3536
      %v3690 = vpop.f32.mrb[0].mxu0
      %v3691 = vadd.f32 0.0, %v3690
      %v3692 = vpop.f32.mrb[0].mxu0
      %3693 = vmatprep.mubr.f32.mxu0 0.0
      %3694 = vmatmul.mubr.f32.gmra.mrb[0].mxu0 %v3538
      %v3695 = vpop.f32.mrb[0].mxu0
      %v3696 = vadd.f32 0.0, %v3695
      %v3697 = vpop.f32.mrb[0].mxu0
      %3698 = vmatprep.mubr.f32.mxu0 0.0
      %3699 = vmatmul.mubr.f32.gmra.mrb[0].mxu0 %v3540
      %v3700 = vpop.f32.mrb[0].mxu0
      %v3701 = vadd.f32 0.0, %v3700
      %v3702 = vpop.f32.mrb[0].mxu0
      %3703 = vmatprep.mubr.f32.mxu0 0.0
      %3704 = vmatmul.mubr.f32.gmra.mrb[0].mxu0 %v3542
      %v3705 = vpop.f32.mrb[0].mxu0
      %v3706 = vadd.f32 0.0, %v3705
      %v3707 = vpop.f32.mrb[0].mxu0
      %3708 = vmatprep.mubr.f32.mxu0 0.0
      %3709 = vmatmul.mubr.f32.gmra.mrb[0].mxu0 %v3544
      %v3710 = vpop.f32.mrb[0].mxu0
      %v3711 = vadd.f32 0.0, %v3710
      %v3712 = vpop.f32.mrb[0].mxu0
      %3713 = vmatprep.mubr.f32.mxu0 0.0
      %3714 = vmatmul.mubr.f32.gmra.mrb[0].mxu0 %v3546
      %v3715 = vpop.f32.mrb[0].mxu0
      %v3716 = vadd.f32 0.0, %v3715
      %v3717 = vpop.f32.mrb[0].mxu0
      %3718 = vmatprep.mubr.f32.mxu0 0.0
      %3719 = vmatmul.mubr.f32.gmra.mrb[0].mxu0 %v3548
      %v3720 = vpop.f32.mrb[0].mxu0
      %v3721 = vadd.f32 0.0, %v3720
      %v3722 = vpop.f32.mrb[0].mxu0
      %3723 = vmatprep.mubr.f32.mxu0 0.0
      %3724 = vmatmul.mubr.f32.gmra.mrb[0].mxu0 %v3550
      %v3725 = vpop.f32.mrb[0].mxu0
      %v3726 = vadd.f32 0.0, %v3725
      %v3727 = vpop.f32.mrb[0].mxu0
      %3728 = vmatprep.mubr.f32.mxu0 0.0
      %3729 = vmatmul.mubr.f32.gmra.mrb[0].mxu0 %v3552
      %v3730 = vpop.f32.mrb[0].mxu0
      %v3731 = vadd.f32 0.0, %v3730
      %v3732 = vpop.f32.mrb[0].mxu0
      %3733 = vmatprep.mubr.f32.mxu0 0.0
      %3734 = vmatmul.mubr.f32.gmra.mrb[0].mxu0 %v3554
      %v3735 = vpop.f32.mrb[0].mxu0
      %v3736 = vadd.f32 0.0, %v3735
      %v3737 = vpop.f32.mrb[0].mxu0
      %3738 = vmatprep.mubr.f32.mxu0 0.0
      %3739 = vmatmul.mubr.f32.gmra.mrb[0].mxu0 %v3556
      %v3740 = vpop.f32.mrb[0].mxu0
      %v3741 = vadd.f32 0.0, %v3740
      %v3742 = vpop.f32.mrb[0].mxu0
      %3743 = vmatprep.mubr.f32.mxu0 0.0
      %3744 = vmatmul.mubr.f32.gmra.mrb[0].mxu0 %v3558
      %v3745 = vpop.f32.mrb[0].mxu0
      %v3746 = vadd.f32 0.0, %v3745
      %v3747 = vpop.f32.mrb[0].mxu0
      %3748 = vmatprep.mubr.f32.mxu0 0.0
      %3749 = vmatmul.mubr.f32.gmra.mrb[0].mxu0 %v3560
      %v3750 = vpop.f32.mrb[0].mxu0
      %v3751 = vadd.f32 0.0, %v3750
      %v3752 = vpop.f32.mrb[0].mxu0
      %3753 = vmatprep.mubr.f32.mxu0 0.0
      %3754 = vmatmul.mubr.f32.gmra.mrb[0].mxu0 %v3562
      %v3755 = vpop.f32.mrb[0].mxu0
      %v3756 = vadd.f32 0.0, %v3755
      %v3757 = vpop.f32.mrb[0].mxu0
      %3758 = vmatprep.mubr.f32.mxu0 0.0
      %3759 = vmatmul.mubr.f32.gmra.mrb[0].mxu0 %v3564
      %v3760 = vpop.f32.mrb[0].mxu0
      %v3761 = vadd.f32 0.0, %v3760
      %v3762 = vpop.f32.mrb[0].mxu0
      %3763 = vmatprep.mubr.f32.mxu0 0.0
      %3764 = vmatmul.mubr.f32.gmra.mrb[0].mxu0 %v3566
      %v3765 = vpop.f32.mrb[0].mxu0
      %v3766 = vadd.f32 0.0, %v3765
      %v3767 = vpop.f32.mrb[0].mxu0
      %3768 = vmatprep.mubr.f32.mxu0 0.0
      %3769 = vmatmul.mubr.f32.gmra.mrb[0].mxu0 %v3568
      %v3770 = vpop.f32.mrb[0].mxu0
      %v3771 = vadd.f32 0.0, %v3770
      %v3772 = vpop.f32.mrb[0].mxu0
      %3773 = vmatprep.mubr.f32.mxu0 0.0
      %3774 = vmatmul.mubr.f32.gmra.mrb[0].mxu0 %v3570
      %v3775 = vpop.f32.mrb[0].mxu0
      %v3776 = vadd.f32 0.0, %v3775
      %v3777 = vpop.f32.mrb[0].mxu0
      %3778 = vmatprep.mubr.f32.mxu0 0.0
      %3779 = vmatmul.mubr.f32.gmra.mrb[0].mxu0 %v3572
      %v3780 = vpop.f32.mrb[0].mxu0
      %v3781 = vadd.f32 0.0, %v3780
      %v3782 = vpop.f32.mrb[0].mxu0
      %3783 = vmatprep.mubr.f32.mxu0 0.0
      %3784 = vmatmul.mubr.f32.gmra.mrb[0].mxu0 %v3574
      %v3785 = vpop.f32.mrb[0].mxu0
      %v3786 = vadd.f32 0.0, %v3785
      %v3787 = vpop.f32.mrb[0].mxu0
      %3788 = vmatprep.mubr.f32.mxu0 0.0
      %3789 = vmatmul.mubr.f32.gmra.mrb[0].mxu0 %v3576
      %v3790 = vpop.f32.mrb[0].mxu0
      %v3791 = vadd.f32 0.0, %v3790
      %v3792 = vpop.f32.mrb[0].mxu0
      %3793 = vmatprep.mubr.f32.mxu0 0.0
      %3794 = vmatmul.mubr.f32.gmra.mrb[0].mxu0 %v3578
      %v3795 = vpop.f32.mrb[0].mxu0
      %v3796 = vadd.f32 0.0, %v3795
      %v3797 = vpop.f32.mrb[0].mxu0
      %3798 = vmatprep.mubr.f32.mxu0 0.0
      %3799 = vmatmul.mubr.f32.gmra.mrb[0].mxu0 %v3580
      %v3800 = vpop.f32.mrb[0].mxu0
      %v3801 = vadd.f32 0.0, %v3800
      %v3802 = vpop.f32.mrb[0].mxu0
      %3803 = vmatprep.mubr.f32.mxu0 0.0
      %3804 = vmatmul.mubr.f32.gmra.mrb[0].mxu0 %v3582
      %v3805 = vpop.f32.mrb[0].mxu0
      %v3806 = vadd.f32 0.0, %v3805
      %v3807 = vpop.f32.mrb[0].mxu0
      %3808 = vmatprep.mubr.f32.mxu0 0.0
      %3809 = vmatmul.mubr.f32.gmra.mrb[0].mxu0 %v3584
      %v3810 = vpop.f32.mrb[0].mxu0
      %v3811 = vadd.f32 0.0, %v3810
      %v3812 = vpop.f32.mrb[0].mxu0
      %3813 = vdwg.mxu0
      %v3814 = vadd.f32 %v3422, %v3656
      %v3815 = vadd.f32 %v3423, %v3661
      %v3816 = vadd.f32 %v3424, %v3666
      %v3817 = vadd.f32 %v3425, %v3671
      %v3818 = vadd.f32 %v3426, %v3676
      %v3819 = vadd.f32 %v3427, %v3681
      %v3820 = vadd.f32 %v3428, %v3686
      %v3821 = vadd.f32 %v3429, %v3691
      %v3822 = vadd.f32 %v3430, %v3696
      %v3823 = vadd.f32 %v3431, %v3701
      %v3824 = vadd.f32 %v3432, %v3706
      %v3825 = vadd.f32 %v3433, %v3711
      %v3826 = vadd.f32 %v3434, %v3716
      %v3827 = vadd.f32 %v3435, %v3721
      %v3828 = vadd.f32 %v3436, %v3726
      %v3829 = vadd.f32 %v3437, %v3731
      %v3830 = vadd.f32 %v3438, %v3736
      %v3831 = vadd.f32 %v3439, %v3741
      %v3832 = vadd.f32 %v3440, %v3746
      %v3833 = vadd.f32 %v3441, %v3751
      %v3834 = vadd.f32 %v3442, %v3756
      %v3835 = vadd.f32 %v3443, %v3761
      %v3836 = vadd.f32 %v3444, %v3766
      %v3837 = vadd.f32 %v3445, %v3771
      %v3838 = vadd.f32 %v3446, %v3776
      %v3839 = vadd.f32 %v3447, %v3781
      %v3840 = vadd.f32 %v3448, %v3786
      %v3841 = vadd.f32 %v3449, %v3791
      %v3842 = vadd.f32 %v3450, %v3796
      %v3843 = vadd.f32 %v3451, %v3801
      %v3844 = vadd.f32 %v3452, %v3806
      %v3845 = vadd.f32 %v3453, %v3811
      %3846 = vst [vmem:[#allocation2] sm:$0xff] %v3814
      %3847 = vst [vmem:[#allocation2 + $0x8] sm:$0xff] %v3815
      %3848 = vst [vmem:[#allocation2 + $0x10] sm:$0xff] %v3816
      %3849 = vst [vmem:[#allocation2 + $0x18] sm:$0xff] %v3817
      %3850 = vst [vmem:[#allocation2 + $0x20] sm:$0xff] %v3818
      %3851 = vst [vmem:[#allocation2 + $0x28] sm:$0xff] %v3819
      %3852 = vst [vmem:[#allocation2 + $0x30] sm:$0xff] %v3820
      %3853 = vst [vmem:[#allocation2 + $0x38] sm:$0xff] %v3821
      %3854 = vst [vmem:[#allocation2 + $0x40] sm:$0xff] %v3822
      %3855 = vst [vmem:[#allocation2 + $0x48] sm:$0xff] %v3823
      %3856 = vst [vmem:[#allocation2 + $0x50] sm:$0xff] %v3824
      %3857 = vst [vmem:[#allocation2 + $0x58] sm:$0xff] %v3825
      %3858 = vst [vmem:[#allocation2 + $0x60] sm:$0xff] %v3826
      %3859 = vst [vmem:[#allocation2 + $0x68] sm:$0xff] %v3827
      %3860 = vst [vmem:[#allocation2 + $0x70] sm:$0xff] %v3828
      %3861 = vst [vmem:[#allocation2 + $0x78] sm:$0xff] %v3829
      %3862 = vst [vmem:[#allocation2 + $0x80] sm:$0xff] %v3830
      %3863 = vst [vmem:[#allocation2 + $0x88] sm:$0xff] %v3831
      %3864 = vst [vmem:[#allocation2 + $0x90] sm:$0xff] %v3832
      %3865 = vst [vmem:[#allocation2 + $0x98] sm:$0xff] %v3833
      %3866 = vst [vmem:[#allocation2 + $0xa0] sm:$0xff] %v3834
      %3867 = vst [vmem:[#allocation2 + $0xa8] sm:$0xff] %v3835
      %3868 = vst [vmem:[#allocation2 + $0xb0] sm:$0xff] %v3836
      %3869 = vst [vmem:[#allocation2 + $0xb8] sm:$0xff] %v3837
      %3870 = vst [vmem:[#allocation2 + $0xc0] sm:$0xff] %v3838
      %3871 = vst [vmem:[#allocation2 + $0xc8] sm:$0xff] %v3839
      %3872 = vst [vmem:[#allocation2 + $0xd0] sm:$0xff] %v3840
      %3873 = vst [vmem:[#allocation2 + $0xd8] sm:$0xff] %v3841
      %3874 = vst [vmem:[#allocation2 + $0xe0] sm:$0xff] %v3842
      %3875 = vst [vmem:[#allocation2 + $0xe8] sm:$0xff] %v3843
      %3876 = vst [vmem:[#allocation2 + $0xf0] sm:$0xff] %v3844
      %3877 = vst [vmem:[#allocation2 + $0xf8] sm:$0xff] %v3845
      %v3878 = vld [vmem:[#allocation2] sm:$0xff]
      %v3879 = vld [vmem:[#allocation2 + $0x8] sm:$0xff]
      %v3880 = vld [vmem:[#allocation2 + $0x10] sm:$0xff]
      %v3881 = vld [vmem:[#allocation2 + $0x18] sm:$0xff]
      %v3882 = vld [vmem:[#allocation2 + $0x20] sm:$0xff]
      %v3883 = vld [vmem:[#allocation2 + $0x28] sm:$0xff]
      %v3884 = vld [vmem:[#allocation2 + $0x30] sm:$0xff]
      %v3885 = vld [vmem:[#allocation2 + $0x38] sm:$0xff]
      %v3886 = vld [vmem:[#allocation2 + $0x40] sm:$0xff]
      %v3887 = vld [vmem:[#allocation2 + $0x48] sm:$0xff]
      %v3888 = vld [vmem:[#allocation2 + $0x50] sm:$0xff]
      %v3889 = vld [vmem:[#allocation2 + $0x58] sm:$0xff]
      %v3890 = vld [vmem:[#allocation2 + $0x60] sm:$0xff]
      %v3891 = vld [vmem:[#allocation2 + $0x68] sm:$0xff]
      %v3892 = vld [vmem:[#allocation2 + $0x70] sm:$0xff]
      %v3893 = vld [vmem:[#allocation2 + $0x78] sm:$0xff]
      %v3894 = vld [vmem:[#allocation2 + $0x80] sm:$0xff]
      %v3895 = vld [vmem:[#allocation2 + $0x88] sm:$0xff]
      %v3896 = vld [vmem:[#allocation2 + $0x90] sm:$0xff]
      %v3897 = vld [vmem:[#allocation2 + $0x98] sm:$0xff]
      %v3898 = vld [vmem:[#allocation2 + $0xa0] sm:$0xff]
      %v3899 = vld [vmem:[#allocation2 + $0xa8] sm:$0xff]
      %v3900 = vld [vmem:[#allocation2 + $0xb0] sm:$0xff]
      %v3901 = vld [vmem:[#allocation2 + $0xb8] sm:$0xff]
      %v3902 = vld [vmem:[#allocation2 + $0xc0] sm:$0xff]
      %v3903 = vld [vmem:[#allocation2 + $0xc8] sm:$0xff]
      %v3904 = vld [vmem:[#allocation2 + $0xd0] sm:$0xff]
      %v3905 = vld [vmem:[#allocation2 + $0xd8] sm:$0xff]
      %v3906 = vld [vmem:[#allocation2 + $0xe0] sm:$0xff]
      %v3907 = vld [vmem:[#allocation2 + $0xe8] sm:$0xff]
      %v3908 = vld [vmem:[#allocation2 + $0xf0] sm:$0xff]
      %v3909 = vld [vmem:[#allocation2 + $0xf8] sm:$0xff]
      %s3910 = scalar_lea.vmem %s1, 32
      %v3911 = vld [vmem:[%s3910] sm:$0xf]
      %v3912 = vrot.slane %v2967, 2
      %v3913 = vrot.slane %v2968, 2
      %v3914 = vsel %vm1175, %v3912, %v3913
      %v3915 = vrot.slane %v2969, 2
      %v3916 = vsel %vm1175, %v3913, %v3915
      %v3917 = vrot.slane %v2970, 2
      %v3918 = vsel %vm1175, %v3915, %v3917
      %v3919 = vrot.slane %v2971, 2
      %v3920 = vsel %vm1175, %v3917, %v3919
      %v3921 = vrot.slane %v2972, 2
      %v3922 = vsel %vm1175, %v3919, %v3921
      %v3923 = vrot.slane %v2973, 2
      %v3924 = vsel %vm1175, %v3921, %v3923
      %v3925 = vrot.slane %v2974, 2
      %v3926 = vsel %vm1175, %v3923, %v3925
      %v3927 = vrot.slane %v2975, 2
      %v3928 = vsel %vm1175, %v3925, %v3927
      %v3929 = vrot.slane %v2976, 2
      %v3930 = vsel %vm1175, %v3927, %v3929
      %v3931 = vrot.slane %v2977, 2
      %v3932 = vsel %vm1175, %v3929, %v3931
      %v3933 = vrot.slane %v2978, 2
      %v3934 = vsel %vm1175, %v3931, %v3933
      %v3935 = vrot.slane %v2979, 2
      %v3936 = vsel %vm1175, %v3933, %v3935
      %v3937 = vrot.slane %v2980, 2
      %v3938 = vsel %vm1175, %v3935, %v3937
      %v3939 = vrot.slane %v2981, 2
      %v3940 = vsel %vm1175, %v3937, %v3939
      %v3941 = vrot.slane %v2982, 2
      %v3942 = vsel %vm1175, %v3939, %v3941
      %v3943 = vrot.slane %v2983, 2
      %v3944 = vsel %vm1175, %v3941, %v3943
      %v3945 = vrot.slane %v2984, 2
      %v3946 = vsel %vm1175, %v3943, %v3945
      %v3947 = vrot.slane %v2985, 2
      %v3948 = vsel %vm1175, %v3945, %v3947
      %v3949 = vrot.slane %v2986, 2
      %v3950 = vsel %vm1175, %v3947, %v3949
      %v3951 = vrot.slane %v2987, 2
      %v3952 = vsel %vm1175, %v3949, %v3951
      %v3953 = vrot.slane %v2988, 2
      %v3954 = vsel %vm1175, %v3951, %v3953
      %v3955 = vrot.slane %v2989, 2
      %v3956 = vsel %vm1175, %v3953, %v3955
      %v3957 = vrot.slane %v2990, 2
      %v3958 = vsel %vm1175, %v3955, %v3957
      %v3959 = vrot.slane %v2991, 2
      %v3960 = vsel %vm1175, %v3957, %v3959
      %v3961 = vrot.slane %v2992, 2
      %v3962 = vsel %vm1175, %v3959, %v3961
      %v3963 = vrot.slane %v2993, 2
      %v3964 = vsel %vm1175, %v3961, %v3963
      %v3965 = vrot.slane %v2994, 2
      %v3966 = vsel %vm1175, %v3963, %v3965
      %v3967 = vrot.slane %v2995, 2
      %v3968 = vsel %vm1175, %v3965, %v3967
      %v3969 = vrot.slane %v2996, 2
      %v3970 = vsel %vm1175, %v3967, %v3969
      %v3971 = vrot.slane %v2997, 2
      %v3972 = vsel %vm1175, %v3969, %v3971
      %v3973 = vrot.slane %v2998, 2
      %v3974 = vsel %vm1175, %v3971, %v3973
      %v3975 = vrot.slane %v2999, 2
      %v3976 = vsel %vm1175, %v3973, %v3975
      %v3977 = vsel %vm294, %v3914, 0
      %v3979 = vsel %vm294, %v3916, 0
      %v3981 = vsel %vm294, %v3918, 0
      %v3983 = vsel %vm294, %v3920, 0
      %v3985 = vsel %vm294, %v3922, 0
      %v3987 = vsel %vm294, %v3924, 0
      %v3989 = vsel %vm294, %v3926, 0
      %v3991 = vsel %vm294, %v3928, 0
      %v3993 = vsel %vm294, %v3930, 0
      %v3995 = vsel %vm294, %v3932, 0
      %v3997 = vsel %vm294, %v3934, 0
      %v3999 = vsel %vm294, %v3936, 0
      %v4001 = vsel %vm294, %v3938, 0
      %v4003 = vsel %vm294, %v3940, 0
      %v4005 = vsel %vm294, %v3942, 0
      %v4007 = vsel %vm294, %v3944, 0
      %v4009 = vsel %vm294, %v3946, 0
      %v4011 = vsel %vm294, %v3948, 0
      %v4013 = vsel %vm294, %v3950, 0
      %v4015 = vsel %vm294, %v3952, 0
      %v4017 = vsel %vm294, %v3954, 0
      %v4019 = vsel %vm294, %v3956, 0
      %v4021 = vsel %vm294, %v3958, 0
      %v4023 = vsel %vm294, %v3960, 0
      %v4025 = vsel %vm294, %v3962, 0
      %v4027 = vsel %vm294, %v3964, 0
      %v4029 = vsel %vm294, %v3966, 0
      %v4031 = vsel %vm294, %v3968, 0
      %v4033 = vsel %vm294, %v3970, 0
      %v4035 = vsel %vm294, %v3972, 0
      %v4037 = vsel %vm294, %v3974, 0
      %v4039 = vsel %vm294, %v3976, 0
      %v4042 = vsel %vm391, %v3911, 0
      %4044 = vmatprep.subr.mxu0 0.0
      %4045 = vmatpush1.msra.mxu0 %v4042
      %4046 = vmatprep.subr.mxu0 0.0
      %4047 = vmatpush1.msra.mxu0 0.0
      %4048 = vmatprep.subr.mxu0 0.0
      %4049 = vmatpush1.msra.mxu0 0.0
      %4050 = vmatprep.subr.mxu0 0.0
      %4051 = vmatpush1.msra.mxu0 0.0
      %4052 = vmatprep.subr.mxu0 0.0
      %4053 = vmatpush1.msra.mxu0 0.0
      %4054 = vmatprep.subr.mxu0 0.0
      %4055 = vmatpush1.msra.mxu0 0.0
      %4056 = vmatprep.subr.mxu0 0.0
      %4057 = vmatpush1.msra.mxu0 0.0
      %4058 = vmatprep.subr.mxu0 0.0
      %4059 = vmatpush1.msra.mxu0 0.0
      %4060 = vmatprep.subr.mxu0 0.0
      %4061 = vmatpush1.msra.mxu0 0.0
      %4062 = vmatprep.subr.mxu0 0.0
      %4063 = vmatpush1.msra.mxu0 0.0
      %4064 = vmatprep.subr.mxu0 0.0
      %4065 = vmatpush1.msra.mxu0 0.0
      %4066 = vmatprep.subr.mxu0 0.0
      %4067 = vmatpush1.msra.mxu0 0.0
      %4068 = vmatprep.subr.mxu0 0.0
      %4069 = vmatpush1.msra.mxu0 0.0
      %4070 = vmatprep.subr.mxu0 0.0
      %4071 = vmatpush1.msra.mxu0 0.0
      %4072 = vmatprep.subr.mxu0 0.0
      %4073 = vmatpush1.msra.mxu0 0.0
      %4074 = vmatprep.subr.mxu0 0.0
      %4075 = vmatpush1.msra.mxu0 0.0
      %4076 = vmatprep.subr.mxu0 0.0
      %4077 = vmatpush1.msra.mxu0 0.0
      %4078 = vmatprep.subr.mxu0 0.0
      %4079 = vmatpush1.msra.mxu0 0.0
      %4080 = vmatprep.subr.mxu0 0.0
      %4081 = vmatpush1.msra.mxu0 0.0
      %4082 = vmatprep.subr.mxu0 0.0
      %4083 = vmatpush1.msra.mxu0 0.0
      %4084 = vmatprep.subr.mxu0 0.0
      %4085 = vmatpush1.msra.mxu0 0.0
      %4086 = vmatprep.subr.mxu0 0.0
      %4087 = vmatpush1.msra.mxu0 0.0
      %4088 = vmatprep.subr.mxu0 0.0
      %4089 = vmatpush1.msra.mxu0 0.0
      %4090 = vmatprep.subr.mxu0 0.0
      %4091 = vmatpush1.msra.mxu0 0.0
      %4092 = vmatprep.subr.mxu0 0.0
      %4093 = vmatpush1.msra.mxu0 0.0
      %4094 = vmatprep.subr.mxu0 0.0
      %4095 = vmatpush1.msra.mxu0 0.0
      %4096 = vmatprep.subr.mxu0 0.0
      %4097 = vmatpush1.msra.mxu0 0.0
      %4098 = vmatprep.subr.mxu0 0.0
      %4099 = vmatpush1.msra.mxu0 0.0
      %4100 = vmatprep.subr.mxu0 0.0
      %4101 = vmatpush1.msra.mxu0 0.0
      %4102 = vmatprep.subr.mxu0 0.0
      %4103 = vmatpush1.msra.mxu0 0.0
      %4104 = vmatprep.subr.mxu0 0.0
      %4105 = vmatpush1.msra.mxu0 0.0
      %4106 = vmatprep.subr.mxu0 0.0
      %4107 = vmatpush1.msra.mxu0 0.0
      %4108 = vmatprep.mubr.f32.mxu0 0.0
      %4109 = vmatmul.mubr.f32.gmra.mrb[0].mxu0 %v3977
      %v4110 = vpop.f32.mrb[0].mxu0
      %v4111 = vadd.f32 0.0, %v4110
      %v4112 = vpop.f32.mrb[0].mxu0
      %4113 = vmatprep.mubr.f32.mxu0 0.0
      %4114 = vmatmul.mubr.f32.gmra.mrb[0].mxu0 %v3979
      %v4115 = vpop.f32.mrb[0].mxu0
      %v4116 = vadd.f32 0.0, %v4115
      %v4117 = vpop.f32.mrb[0].mxu0
      %4118 = vmatprep.mubr.f32.mxu0 0.0
      %4119 = vmatmul.mubr.f32.gmra.mrb[0].mxu0 %v3981
      %v4120 = vpop.f32.mrb[0].mxu0
      %v4121 = vadd.f32 0.0, %v4120
      %v4122 = vpop.f32.mrb[0].mxu0
      %4123 = vmatprep.mubr.f32.mxu0 0.0
      %4124 = vmatmul.mubr.f32.gmra.mrb[0].mxu0 %v3983
      %v4125 = vpop.f32.mrb[0].mxu0
      %v4126 = vadd.f32 0.0, %v4125
      %v4127 = vpop.f32.mrb[0].mxu0
      %4128 = vmatprep.mubr.f32.mxu0 0.0
      %4129 = vmatmul.mubr.f32.gmra.mrb[0].mxu0 %v3985
      %v4130 = vpop.f32.mrb[0].mxu0
      %v4131 = vadd.f32 0.0, %v4130
      %v4132 = vpop.f32.mrb[0].mxu0
      %4133 = vmatprep.mubr.f32.mxu0 0.0
      %4134 = vmatmul.mubr.f32.gmra.mrb[0].mxu0 %v3987
      %v4135 = vpop.f32.mrb[0].mxu0
      %v4136 = vadd.f32 0.0, %v4135
      %v4137 = vpop.f32.mrb[0].mxu0
      %4138 = vmatprep.mubr.f32.mxu0 0.0
      %4139 = vmatmul.mubr.f32.gmra.mrb[0].mxu0 %v3989
      %v4140 = vpop.f32.mrb[0].mxu0
      %v4141 = vadd.f32 0.0, %v4140
      %v4142 = vpop.f32.mrb[0].mxu0
      %4143 = vmatprep.mubr.f32.mxu0 0.0
      %4144 = vmatmul.mubr.f32.gmra.mrb[0].mxu0 %v3991
      %v4145 = vpop.f32.mrb[0].mxu0
      %v4146 = vadd.f32 0.0, %v4145
      %v4147 = vpop.f32.mrb[0].mxu0
      %4148 = vmatprep.mubr.f32.mxu0 0.0
      %4149 = vmatmul.mubr.f32.gmra.mrb[0].mxu0 %v3993
      %v4150 = vpop.f32.mrb[0].mxu0
      %v4151 = vadd.f32 0.0, %v4150
      %v4152 = vpop.f32.mrb[0].mxu0
      %4153 = vmatprep.mubr.f32.mxu0 0.0
      %4154 = vmatmul.mubr.f32.gmra.mrb[0].mxu0 %v3995
      %v4155 = vpop.f32.mrb[0].mxu0
      %v4156 = vadd.f32 0.0, %v4155
      %v4157 = vpop.f32.mrb[0].mxu0
      %4158 = vmatprep.mubr.f32.mxu0 0.0
      %4159 = vmatmul.mubr.f32.gmra.mrb[0].mxu0 %v3997
      %v4160 = vpop.f32.mrb[0].mxu0
      %v4161 = vadd.f32 0.0, %v4160
      %v4162 = vpop.f32.mrb[0].mxu0
      %4163 = vmatprep.mubr.f32.mxu0 0.0
      %4164 = vmatmul.mubr.f32.gmra.mrb[0].mxu0 %v3999
      %v4165 = vpop.f32.mrb[0].mxu0
      %v4166 = vadd.f32 0.0, %v4165
      %v4167 = vpop.f32.mrb[0].mxu0
      %4168 = vmatprep.mubr.f32.mxu0 0.0
      %4169 = vmatmul.mubr.f32.gmra.mrb[0].mxu0 %v4001
      %v4170 = vpop.f32.mrb[0].mxu0
      %v4171 = vadd.f32 0.0, %v4170
      %v4172 = vpop.f32.mrb[0].mxu0
      %4173 = vmatprep.mubr.f32.mxu0 0.0
      %4174 = vmatmul.mubr.f32.gmra.mrb[0].mxu0 %v4003
      %v4175 = vpop.f32.mrb[0].mxu0
      %v4176 = vadd.f32 0.0, %v4175
      %v4177 = vpop.f32.mrb[0].mxu0
      %4178 = vmatprep.mubr.f32.mxu0 0.0
      %4179 = vmatmul.mubr.f32.gmra.mrb[0].mxu0 %v4005
      %v4180 = vpop.f32.mrb[0].mxu0
      %v4181 = vadd.f32 0.0, %v4180
      %v4182 = vpop.f32.mrb[0].mxu0
      %4183 = vmatprep.mubr.f32.mxu0 0.0
      %4184 = vmatmul.mubr.f32.gmra.mrb[0].mxu0 %v4007
      %v4185 = vpop.f32.mrb[0].mxu0
      %v4186 = vadd.f32 0.0, %v4185
      %v4187 = vpop.f32.mrb[0].mxu0
      %4188 = vmatprep.mubr.f32.mxu0 0.0
      %4189 = vmatmul.mubr.f32.gmra.mrb[0].mxu0 %v4009
      %v4190 = vpop.f32.mrb[0].mxu0
      %v4191 = vadd.f32 0.0, %v4190
      %v4192 = vpop.f32.mrb[0].mxu0
      %4193 = vmatprep.mubr.f32.mxu0 0.0
      %4194 = vmatmul.mubr.f32.gmra.mrb[0].mxu0 %v4011
      %v4195 = vpop.f32.mrb[0].mxu0
      %v4196 = vadd.f32 0.0, %v4195
      %v4197 = vpop.f32.mrb[0].mxu0
      %4198 = vmatprep.mubr.f32.mxu0 0.0
      %4199 = vmatmul.mubr.f32.gmra.mrb[0].mxu0 %v4013
      %v4200 = vpop.f32.mrb[0].mxu0
      %v4201 = vadd.f32 0.0, %v4200
      %v4202 = vpop.f32.mrb[0].mxu0
      %4203 = vmatprep.mubr.f32.mxu0 0.0
      %4204 = vmatmul.mubr.f32.gmra.mrb[0].mxu0 %v4015
      %v4205 = vpop.f32.mrb[0].mxu0
      %v4206 = vadd.f32 0.0, %v4205
      %v4207 = vpop.f32.mrb[0].mxu0
      %4208 = vmatprep.mubr.f32.mxu0 0.0
      %4209 = vmatmul.mubr.f32.gmra.mrb[0].mxu0 %v4017
      %v4210 = vpop.f32.mrb[0].mxu0
      %v4211 = vadd.f32 0.0, %v4210
      %v4212 = vpop.f32.mrb[0].mxu0
      %4213 = vmatprep.mubr.f32.mxu0 0.0
      %4214 = vmatmul.mubr.f32.gmra.mrb[0].mxu0 %v4019
      %v4215 = vpop.f32.mrb[0].mxu0
      %v4216 = vadd.f32 0.0, %v4215
      %v4217 = vpop.f32.mrb[0].mxu0
      %4218 = vmatprep.mubr.f32.mxu0 0.0
      %4219 = vmatmul.mubr.f32.gmra.mrb[0].mxu0 %v4021
      %v4220 = vpop.f32.mrb[0].mxu0
      %v4221 = vadd.f32 0.0, %v4220
      %v4222 = vpop.f32.mrb[0].mxu0
      %4223 = vmatprep.mubr.f32.mxu0 0.0
      %4224 = vmatmul.mubr.f32.gmra.mrb[0].mxu0 %v4023
      %v4225 = vpop.f32.mrb[0].mxu0
      %v4226 = vadd.f32 0.0, %v4225
      %v4227 = vpop.f32.mrb[0].mxu0
      %4228 = vmatprep.mubr.f32.mxu0 0.0
      %4229 = vmatmul.mubr.f32.gmra.mrb[0].mxu0 %v4025
      %v4230 = vpop.f32.mrb[0].mxu0
      %v4231 = vadd.f32 0.0, %v4230
      %v4232 = vpop.f32.mrb[0].mxu0
      %4233 = vmatprep.mubr.f32.mxu0 0.0
      %4234 = vmatmul.mubr.f32.gmra.mrb[0].mxu0 %v4027
      %v4235 = vpop.f32.mrb[0].mxu0
      %v4236 = vadd.f32 0.0, %v4235
      %v4237 = vpop.f32.mrb[0].mxu0
      %4238 = vmatprep.mubr.f32.mxu0 0.0
      %4239 = vmatmul.mubr.f32.gmra.mrb[0].mxu0 %v4029
      %v4240 = vpop.f32.mrb[0].mxu0
      %v4241 = vadd.f32 0.0, %v4240
      %v4242 = vpop.f32.mrb[0].mxu0
      %4243 = vmatprep.mubr.f32.mxu0 0.0
      %4244 = vmatmul.mubr.f32.gmra.mrb[0].mxu0 %v4031
      %v4245 = vpop.f32.mrb[0].mxu0
      %v4246 = vadd.f32 0.0, %v4245
      %v4247 = vpop.f32.mrb[0].mxu0
      %4248 = vmatprep.mubr.f32.mxu0 0.0
      %4249 = vmatmul.mubr.f32.gmra.mrb[0].mxu0 %v4033
      %v4250 = vpop.f32.mrb[0].mxu0
      %v4251 = vadd.f32 0.0, %v4250
      %v4252 = vpop.f32.mrb[0].mxu0
      %4253 = vmatprep.mubr.f32.mxu0 0.0
      %4254 = vmatmul.mubr.f32.gmra.mrb[0].mxu0 %v4035
      %v4255 = vpop.f32.mrb[0].mxu0
      %v4256 = vadd.f32 0.0, %v4255
      %v4257 = vpop.f32.mrb[0].mxu0
      %4258 = vmatprep.mubr.f32.mxu0 0.0
      %4259 = vmatmul.mubr.f32.gmra.mrb[0].mxu0 %v4037
      %v4260 = vpop.f32.mrb[0].mxu0
      %v4261 = vadd.f32 0.0, %v4260
      %v4262 = vpop.f32.mrb[0].mxu0
      %4263 = vmatprep.mubr.f32.mxu0 0.0
      %4264 = vmatmul.mubr.f32.gmra.mrb[0].mxu0 %v4039
      %v4265 = vpop.f32.mrb[0].mxu0
      %v4266 = vadd.f32 0.0, %v4265
      %v4267 = vpop.f32.mrb[0].mxu0
      %4268 = vdwg.mxu0
      %v4269 = vadd.f32 %v3878, %v4111
      %v4270 = vadd.f32 %v3879, %v4116
      %v4271 = vadd.f32 %v3880, %v4121
      %v4272 = vadd.f32 %v3881, %v4126
      %v4273 = vadd.f32 %v3882, %v4131
      %v4274 = vadd.f32 %v3883, %v4136
      %v4275 = vadd.f32 %v3884, %v4141
      %v4276 = vadd.f32 %v3885, %v4146
      %v4277 = vadd.f32 %v3886, %v4151
      %v4278 = vadd.f32 %v3887, %v4156
      %v4279 = vadd.f32 %v3888, %v4161
      %v4280 = vadd.f32 %v3889, %v4166
      %v4281 = vadd.f32 %v3890, %v4171
      %v4282 = vadd.f32 %v3891, %v4176
      %v4283 = vadd.f32 %v3892, %v4181
      %v4284 = vadd.f32 %v3893, %v4186
      %v4285 = vadd.f32 %v3894, %v4191
      %v4286 = vadd.f32 %v3895, %v4196
      %v4287 = vadd.f32 %v3896, %v4201
      %v4288 = vadd.f32 %v3897, %v4206
      %v4289 = vadd.f32 %v3898, %v4211
      %v4290 = vadd.f32 %v3899, %v4216
      %v4291 = vadd.f32 %v3900, %v4221
      %v4292 = vadd.f32 %v3901, %v4226
      %v4293 = vadd.f32 %v3902, %v4231
      %v4294 = vadd.f32 %v3903, %v4236
      %v4295 = vadd.f32 %v3904, %v4241
      %v4296 = vadd.f32 %v3905, %v4246
      %v4297 = vadd.f32 %v3906, %v4251
      %v4298 = vadd.f32 %v3907, %v4256
      %v4299 = vadd.f32 %v3908, %v4261
      %v4300 = vadd.f32 %v3909, %v4266
      %4301 = vst [vmem:[#allocation2] sm:$0xff] %v4269
      %4302 = vst [vmem:[#allocation2 + $0x8] sm:$0xff] %v4270
      %4303 = vst [vmem:[#allocation2 + $0x10] sm:$0xff] %v4271
      %4304 = vst [vmem:[#allocation2 + $0x18] sm:$0xff] %v4272
      %4305 = vst [vmem:[#allocation2 + $0x20] sm:$0xff] %v4273
      %4306 = vst [vmem:[#allocation2 + $0x28] sm:$0xff] %v4274
      %4307 = vst [vmem:[#allocation2 + $0x30] sm:$0xff] %v4275
      %4308 = vst [vmem:[#allocation2 + $0x38] sm:$0xff] %v4276
      %4309 = vst [vmem:[#allocation2 + $0x40] sm:$0xff] %v4277
      %4310 = vst [vmem:[#allocation2 + $0x48] sm:$0xff] %v4278
      %4311 = vst [vmem:[#allocation2 + $0x50] sm:$0xff] %v4279
      %4312 = vst [vmem:[#allocation2 + $0x58] sm:$0xff] %v4280
      %4313 = vst [vmem:[#allocation2 + $0x60] sm:$0xff] %v4281
      %4314 = vst [vmem:[#allocation2 + $0x68] sm:$0xff] %v4282
      %4315 = vst [vmem:[#allocation2 + $0x70] sm:$0xff] %v4283
      %4316 = vst [vmem:[#allocation2 + $0x78] sm:$0xff] %v4284
      %4317 = vst [vmem:[#allocation2 + $0x80] sm:$0xff] %v4285
      %4318 = vst [vmem:[#allocation2 + $0x88] sm:$0xff] %v4286
      %4319 = vst [vmem:[#allocation2 + $0x90] sm:$0xff] %v4287
      %4320 = vst [vmem:[#allocation2 + $0x98] sm:$0xff] %v4288
      %4321 = vst [vmem:[#allocation2 + $0xa0] sm:$0xff] %v4289
      %4322 = vst [vmem:[#allocation2 + $0xa8] sm:$0xff] %v4290
      %4323 = vst [vmem:[#allocation2 + $0xb0] sm:$0xff] %v4291
      %4324 = vst [vmem:[#allocation2 + $0xb8] sm:$0xff] %v4292
      %4325 = vst [vmem:[#allocation2 + $0xc0] sm:$0xff] %v4293
      %4326 = vst [vmem:[#allocation2 + $0xc8] sm:$0xff] %v4294
      %4327 = vst [vmem:[#allocation2 + $0xd0] sm:$0xff] %v4295
      %4328 = vst [vmem:[#allocation2 + $0xd8] sm:$0xff] %v4296
      %4329 = vst [vmem:[#allocation2 + $0xe0] sm:$0xff] %v4297
      %4330 = vst [vmem:[#allocation2 + $0xe8] sm:$0xff] %v4298
      %4331 = vst [vmem:[#allocation2 + $0xf0] sm:$0xff] %v4299
      %4332 = vst [vmem:[#allocation2 + $0xf8] sm:$0xff] %v4300
      %v4333 = vld [vmem:[#allocation2] sm:$0xff]
      %v4334 = vld [vmem:[#allocation2 + $0x8] sm:$0xff]
      %v4335 = vld [vmem:[#allocation2 + $0x10] sm:$0xff]
      %v4336 = vld [vmem:[#allocation2 + $0x18] sm:$0xff]
      %v4337 = vld [vmem:[#allocation2 + $0x20] sm:$0xff]
      %v4338 = vld [vmem:[#allocation2 + $0x28] sm:$0xff]
      %v4339 = vld [vmem:[#allocation2 + $0x30] sm:$0xff]
      %v4340 = vld [vmem:[#allocation2 + $0x38] sm:$0xff]
      %v4341 = vld [vmem:[#allocation2 + $0x40] sm:$0xff]
      %v4342 = vld [vmem:[#allocation2 + $0x48] sm:$0xff]
      %v4343 = vld [vmem:[#allocation2 + $0x50] sm:$0xff]
      %v4344 = vld [vmem:[#allocation2 + $0x58] sm:$0xff]
      %v4345 = vld [vmem:[#allocation2 + $0x60] sm:$0xff]
      %v4346 = vld [vmem:[#allocation2 + $0x68] sm:$0xff]
      %v4347 = vld [vmem:[#allocation2 + $0x70] sm:$0xff]
      %v4348 = vld [vmem:[#allocation2 + $0x78] sm:$0xff]
      %v4349 = vld [vmem:[#allocation2 + $0x80] sm:$0xff]
      %v4350 = vld [vmem:[#allocation2 + $0x88] sm:$0xff]
      %v4351 = vld [vmem:[#allocation2 + $0x90] sm:$0xff]
      %v4352 = vld [vmem:[#allocation2 + $0x98] sm:$0xff]
      %v4353 = vld [vmem:[#allocation2 + $0xa0] sm:$0xff]
      %v4354 = vld [vmem:[#allocation2 + $0xa8] sm:$0xff]
      %v4355 = vld [vmem:[#allocation2 + $0xb0] sm:$0xff]
      %v4356 = vld [vmem:[#allocation2 + $0xb8] sm:$0xff]
      %v4357 = vld [vmem:[#allocation2 + $0xc0] sm:$0xff]
      %v4358 = vld [vmem:[#allocation2 + $0xc8] sm:$0xff]
      %v4359 = vld [vmem:[#allocation2 + $0xd0] sm:$0xff]
      %v4360 = vld [vmem:[#allocation2 + $0xd8] sm:$0xff]
      %v4361 = vld [vmem:[#allocation2 + $0xe0] sm:$0xff]
      %v4362 = vld [vmem:[#allocation2 + $0xe8] sm:$0xff]
      %v4363 = vld [vmem:[#allocation2 + $0xf0] sm:$0xff]
      %v4364 = vld [vmem:[#allocation2 + $0xf8] sm:$0xff]
      %v4365 = vld [vmem:[%s2] sm:$0x1]
      %v4367 = vlaneseq
      %v4368 = vshrl.u32 %v4367, 7
      %v4369 = vsub.s32 0, %v4368
      %v4370 = vrot.slane %v4365, %v4369
      %v4372 = vadd.f32 %v4333, %v4370
      %v4373 = vadd.f32 %v4334, %v4370
      %v4374 = vadd.f32 %v4335, %v4370
      %v4375 = vadd.f32 %v4336, %v4370
      %v4376 = vadd.f32 %v4337, %v4370
      %v4377 = vadd.f32 %v4338, %v4370
      %v4378 = vadd.f32 %v4339, %v4370
      %v4379 = vadd.f32 %v4340, %v4370
      %v4380 = vadd.f32 %v4341, %v4370
      %v4381 = vadd.f32 %v4342, %v4370
      %v4382 = vadd.f32 %v4343, %v4370
      %v4383 = vadd.f32 %v4344, %v4370
      %v4384 = vadd.f32 %v4345, %v4370
      %v4385 = vadd.f32 %v4346, %v4370
      %v4386 = vadd.f32 %v4347, %v4370
      %v4387 = vadd.f32 %v4348, %v4370
      %v4388 = vadd.f32 %v4349, %v4370
      %v4389 = vadd.f32 %v4350, %v4370
      %v4390 = vadd.f32 %v4351, %v4370
      %v4391 = vadd.f32 %v4352, %v4370
      %v4392 = vadd.f32 %v4353, %v4370
      %v4393 = vadd.f32 %v4354, %v4370
      %v4394 = vadd.f32 %v4355, %v4370
      %v4395 = vadd.f32 %v4356, %v4370
      %v4396 = vadd.f32 %v4357, %v4370
      %v4397 = vadd.f32 %v4358, %v4370
      %v4398 = vadd.f32 %v4359, %v4370
      %v4399 = vadd.f32 %v4360, %v4370
      %v4400 = vadd.f32 %v4361, %v4370
      %v4401 = vadd.f32 %v4362, %v4370
      %v4402 = vadd.f32 %v4363, %v4370
      %v4403 = vadd.f32 %v4364, %v4370
      %v4404 = vmul.f32 %v4372, 65536.0
      %v4405 = vmul.f32 %v4373, 65536.0
      %v4406 = vmul.f32 %v4374, 65536.0
      %v4407 = vmul.f32 %v4375, 65536.0
      %v4408 = vmul.f32 %v4376, 65536.0
      %v4409 = vmul.f32 %v4377, 65536.0
      %v4410 = vmul.f32 %v4378, 65536.0
      %v4411 = vmul.f32 %v4379, 65536.0
      %v4412 = vmul.f32 %v4380, 65536.0
      %v4413 = vmul.f32 %v4381, 65536.0
      %v4414 = vmul.f32 %v4382, 65536.0
      %v4415 = vmul.f32 %v4383, 65536.0
      %v4416 = vmul.f32 %v4384, 65536.0
      %v4417 = vmul.f32 %v4385, 65536.0
      %v4418 = vmul.f32 %v4386, 65536.0
      %v4419 = vmul.f32 %v4387, 65536.0
      %v4420 = vmul.f32 %v4388, 65536.0
      %v4421 = vmul.f32 %v4389, 65536.0
      %v4422 = vmul.f32 %v4390, 65536.0
      %v4423 = vmul.f32 %v4391, 65536.0
      %v4424 = vmul.f32 %v4392, 65536.0
      %v4425 = vmul.f32 %v4393, 65536.0
      %v4426 = vmul.f32 %v4394, 65536.0
      %v4427 = vmul.f32 %v4395, 65536.0
      %v4428 = vmul.f32 %v4396, 65536.0
      %v4429 = vmul.f32 %v4397, 65536.0
      %v4430 = vmul.f32 %v4398, 65536.0
      %v4431 = vmul.f32 %v4399, 65536.0
      %v4432 = vmul.f32 %v4400, 65536.0
      %v4433 = vmul.f32 %v4401, 65536.0
      %v4434 = vmul.f32 %v4402, 65536.0
      %v4435 = vmul.f32 %v4403, 65536.0
      %v4436 = vround.ne.pseudo %v4404
      %v4437 = vround.ne.pseudo %v4405
      %v4438 = vround.ne.pseudo %v4406
      %v4439 = vround.ne.pseudo %v4407
      %v4440 = vround.ne.pseudo %v4408
      %v4441 = vround.ne.pseudo %v4409
      %v4442 = vround.ne.pseudo %v4410
      %v4443 = vround.ne.pseudo %v4411
      %v4444 = vround.ne.pseudo %v4412
      %v4445 = vround.ne.pseudo %v4413
      %v4446 = vround.ne.pseudo %v4414
      %v4447 = vround.ne.pseudo %v4415
      %v4448 = vround.ne.pseudo %v4416
      %v4449 = vround.ne.pseudo %v4417
      %v4450 = vround.ne.pseudo %v4418
      %v4451 = vround.ne.pseudo %v4419
      %v4452 = vround.ne.pseudo %v4420
      %v4453 = vround.ne.pseudo %v4421
      %v4454 = vround.ne.pseudo %v4422
      %v4455 = vround.ne.pseudo %v4423
      %v4456 = vround.ne.pseudo %v4424
      %v4457 = vround.ne.pseudo %v4425
      %v4458 = vround.ne.pseudo %v4426
      %v4459 = vround.ne.pseudo %v4427
      %v4460 = vround.ne.pseudo %v4428
      %v4461 = vround.ne.pseudo %v4429
      %v4462 = vround.ne.pseudo %v4430
      %v4463 = vround.ne.pseudo %v4431
      %v4464 = vround.ne.pseudo %v4432
      %v4465 = vround.ne.pseudo %v4433
      %v4466 = vround.ne.pseudo %v4434
      %v4467 = vround.ne.pseudo %v4435
      %v4468 = vmul.f32 %v4436, 1.5258789e-05
      %v4469 = vmul.f32 %v4437, 1.5258789e-05
      %v4470 = vmul.f32 %v4438, 1.5258789e-05
      %v4471 = vmul.f32 %v4439, 1.5258789e-05
      %v4472 = vmul.f32 %v4440, 1.5258789e-05
      %v4473 = vmul.f32 %v4441, 1.5258789e-05
      %v4474 = vmul.f32 %v4442, 1.5258789e-05
      %v4475 = vmul.f32 %v4443, 1.5258789e-05
      %v4476 = vmul.f32 %v4444, 1.5258789e-05
      %v4477 = vmul.f32 %v4445, 1.5258789e-05
      %v4478 = vmul.f32 %v4446, 1.5258789e-05
      %v4479 = vmul.f32 %v4447, 1.5258789e-05
      %v4480 = vmul.f32 %v4448, 1.5258789e-05
      %v4481 = vmul.f32 %v4449, 1.5258789e-05
      %v4482 = vmul.f32 %v4450, 1.5258789e-05
      %v4483 = vmul.f32 %v4451, 1.5258789e-05
      %v4484 = vmul.f32 %v4452, 1.5258789e-05
      %v4485 = vmul.f32 %v4453, 1.5258789e-05
      %v4486 = vmul.f32 %v4454, 1.5258789e-05
      %v4487 = vmul.f32 %v4455, 1.5258789e-05
      %v4488 = vmul.f32 %v4456, 1.5258789e-05
      %v4489 = vmul.f32 %v4457, 1.5258789e-05
      %v4490 = vmul.f32 %v4458, 1.5258789e-05
      %v4491 = vmul.f32 %v4459, 1.5258789e-05
      %v4492 = vmul.f32 %v4460, 1.5258789e-05
      %v4493 = vmul.f32 %v4461, 1.5258789e-05
      %v4494 = vmul.f32 %v4462, 1.5258789e-05
      %v4495 = vmul.f32 %v4463, 1.5258789e-05
      %v4496 = vmul.f32 %v4464, 1.5258789e-05
      %v4497 = vmul.f32 %v4465, 1.5258789e-05
      %v4498 = vmul.f32 %v4466, 1.5258789e-05
      %v4499 = vmul.f32 %v4467, 1.5258789e-05
      %4500 = vst [vmem:[%s192] sm:$0xff] %v4468
      %4501 = vst [vmem:[%s192 + $0x8] sm:$0xff] %v4469
      %4502 = vst [vmem:[%s192 + $0x10] sm:$0xff] %v4470
      %4503 = vst [vmem:[%s192 + $0x18] sm:$0xff] %v4471
      %4504 = vst [vmem:[%s192 + $0x20] sm:$0xff] %v4472
      %4505 = vst [vmem:[%s192 + $0x28] sm:$0xff] %v4473
      %4506 = vst [vmem:[%s192 + $0x30] sm:$0xff] %v4474
      %4507 = vst [vmem:[%s192 + $0x38] sm:$0xff] %v4475
      %4508 = vst [vmem:[%s192 + $0x40] sm:$0xff] %v4476
      %4509 = vst [vmem:[%s192 + $0x48] sm:$0xff] %v4477
      %4510 = vst [vmem:[%s192 + $0x50] sm:$0xff] %v4478
      %4511 = vst [vmem:[%s192 + $0x58] sm:$0xff] %v4479
      %4512 = vst [vmem:[%s192 + $0x60] sm:$0xff] %v4480
      %4513 = vst [vmem:[%s192 + $0x68] sm:$0xff] %v4481
      %4514 = vst [vmem:[%s192 + $0x70] sm:$0xff] %v4482
      %4515 = vst [vmem:[%s192 + $0x78] sm:$0xff] %v4483
      %4516 = vst [vmem:[%s192 + $0x80] sm:$0xff] %v4484
      %4517 = vst [vmem:[%s192 + $0x88] sm:$0xff] %v4485
      %4518 = vst [vmem:[%s192 + $0x90] sm:$0xff] %v4486
      %4519 = vst [vmem:[%s192 + $0x98] sm:$0xff] %v4487
      %4520 = vst [vmem:[%s192 + $0xa0] sm:$0xff] %v4488
      %4521 = vst [vmem:[%s192 + $0xa8] sm:$0xff] %v4489
      %4522 = vst [vmem:[%s192 + $0xb0] sm:$0xff] %v4490
      %4523 = vst [vmem:[%s192 + $0xb8] sm:$0xff] %v4491
      %4524 = vst [vmem:[%s192 + $0xc0] sm:$0xff] %v4492
      %4525 = vst [vmem:[%s192 + $0xc8] sm:$0xff] %v4493
      %4526 = vst [vmem:[%s192 + $0xd0] sm:$0xff] %v4494
      %4527 = vst [vmem:[%s192 + $0xd8] sm:$0xff] %v4495
      %4528 = vst [vmem:[%s192 + $0xe0] sm:$0xff] %v4496
      %4529 = vst [vmem:[%s192 + $0xe8] sm:$0xff] %v4497
      %4530 = vst [vmem:[%s192 + $0xf0] sm:$0xff] %v4498
      %4531 = vst [vmem:[%s192 + $0xf8] sm:$0xff] %v4499
      %s4532 = smul.u32 32, %s19
      %p4533 = scmp.lt.s32.totalorder %s18, 1
      %s4534 = scalar_select %p4533, %s18, 1
      %p4535 = scmp.lt.s32.totalorder %s4532, 63
      %s4536 = scalar_select %p4535, %s4532, 63
      %s4537 = smul.addr %s4534, 64
      %s4538 = sadd.s32 %s4536, %s4537
      %s4539 = smul.addr %s4538, 8
      %s4540 = scalar_lea.vmem %s3, %s4539
      // Predicated region
      $region33: #{fixed_point_conv2d.1} parent=31 // pred_check
        %p4541 = pneg %p114
      $region34: #{fixed_point_conv2d.1} parent=31 // pred_check_branch
        %4543 = sbr.rel (%p4541) target = $region36
      $region35: #{fixed_point_conv2d.1} parent=31 // pred_region
        %s4544 = smul.u32 32, %s19
      $region36: #{fixed_point_conv2d.1} parent=31 // pred_fallthru
        _
    $region32: #{fixed_point_conv2d.1} parent=5 // pred_fallthru
      _
    %p4545 = scmp.le.s32.totalorder 2, %s9
    // Predicated region
    $region37: #{fixed_point_conv2d.1} parent=5 // pred_check
      %p4546 = pneg %p4545
    $region38: #{fixed_point_conv2d.1} parent=5 // pred_check_branch
      %4548 = sbr.rel (%p4546) target = $region40
    $region39: #{fixed_point_conv2d.1} parent=5 // pred_region
      %s4549 = ssub.s32 %s9, 2
      // Predicated region
      $region41: #{fixed_point_conv2d.1} parent=39 // pred_check
        %p4550 = pneg %p120
      $region42: #{fixed_point_conv2d.1} parent=39 // pred_check_branch
        %4552 = sbr.rel (%p4550) target = $region44
      $region43: #{fixed_point_conv2d.1} parent=39 // pred_region
        %s4553 = smul.u32 32, %s21
        %p4554 = scmp.lt.s32.totalorder %s20, 1
        %s4555 = scalar_select %p4554, %s20, 1
        %p4556 = scmp.lt.s32.totalorder %s4553, 63
        %s4557 = scalar_select %p4556, %s4553, 63
        %s4558 = smul.addr %s4555, 64
        %s4559 = sadd.s32 %s4557, %s4558
        %s4560 = smul.addr %s4559, 8
        %s4561 = scalar_lea.vmem %s3, %s4560
      $region44: #{fixed_point_conv2d.1} parent=39 // pred_fallthru
        _
    $region40: #{fixed_point_conv2d.1} parent=5 // pred_fallthru
      _
  $region6: #{fixed_point_conv2d.1} parent=0 // loop_footer
    %s13 = sadd.s32 1, %s9
  $region7: #{fixed_point_conv2d.1} parent=0 // loop_footer_branch
    %8 = sbr.rel target = $region3
  $region8: #{fixed_point_conv2d.1} parent=0 // loop_exit
    _

</llo_original>
